<compile_context>
chip_gen: v5e
topology: v5e:2x2
jax: 0.10.0
libtpu: 0.0.40
codegen_flags: <defaults>
</compile_context>

<pallas_src>
import jax
import jax.numpy as jnp
from jax import lax
from jax.experimental import pallas as pl
from jax.experimental.pallas import tpu as pltpu


# ---------------------------------------------------------------------------
# Fused forward kernel
# ---------------------------------------------------------------------------
def fused_forward_kernel(eos_ref,        # SMEM (S,) int32 : eos positions
                         x_ref,          # (T, 2*Din)      : [x[t] | x[T-1-t]]
                         wih_ref,        # (2*Din, 8U)     : combined fwd+bwd input proj
                         whh_ref,        # (2U, 8U)        : block-diag recurrent weights
                         b_ref,          # (1, 8U)         : combined biases
                         wtop_ref,       # (H, O)          : out-weight rows hitting sent[i]
                         wbot_ref,       # (H, O)          : out-weight rows hitting sent[i+1]
                         bout_ref,       # (1, O)
                         out_ref,        # (S-1, O)        : log-probs
                         gx_ref,         # scratch (T, 8U) : hoisted per-step gate inputs
                         hist_ref,       # scratch (T, 2U) : row t = [h_f(t) | h_b(T-1-t)]
                         sent_ref):      # scratch (S, 2U) : sentence embeddings
    T = x_ref.shape[0]
    H = whh_ref.shape[0]          # 2U == hidden_size
    U = H // 2                    # per-direction LSTM units
    S = sent_ref.shape[0]

    # ---- 1) hoisted input projection for both directions & all steps:
    #         one lane-dense (T, 2Din) @ (2Din, 8U) matmul.  Row t already
    #         holds exactly the per-step gate inputs of both directions.
    gx_ref[...] = (jnp.dot(x_ref[...], wih_ref[...],
                           preferred_element_type=jnp.float32) + b_ref[...])

    whh = whh_ref[...]
    h0 = jnp.zeros((1, H), jnp.float32)    # [h_f | h_b]
    c0 = jnp.zeros((1, H), jnp.float32)    # [c_f | c_b]

    # ---- 2) fused fwd/bwd recurrence, fully unrolled (T static and small).
    #         Serial chain per step: 1 row load + 1 tiny matmul + EUP + VPU.
    def step(t, carry):
        h, c = carry
        gates = (gx_ref[pl.ds(t, 1), :]
                 + jnp.dot(h, whh, preferred_element_type=jnp.float32))
        sig = jax.nn.sigmoid(gates)        # full-width EUP op
        tah = jnp.tanh(gates)              # full-width EUP op
        i = sig[:, 0 * H:1 * H]            # [i_f | i_b]
        f = sig[:, 1 * H:2 * H]            # [f_f | f_b]
        g = tah[:, 2 * H:3 * H]            # [g_f | g_b]
        o = sig[:, 3 * H:4 * H]            # [o_f | o_b]
        c_new = f * c + i * g
        h_new = o * jnp.tanh(c_new)
        hist_ref[pl.ds(t, 1), :] = h_new   # single full-row store per step
        return (h_new, c_new)

    lax.fori_loop(0, T, step, (h0, c0), unroll=True)

    # ---- 3) sentence embeddings ('last'): word_level_output[eos-1].
    #         hist row t holds h_f(t) in lanes [:U] and h_b(T-1-t) in lanes [U:].
    lane_h = lax.broadcasted_iota(jnp.int32, (1, H), 1)
    for s in range(S):
        idx = eos_ref[s] - 1
        row_f = hist_ref[pl.ds(idx, 1), :]
        row_b = hist_ref[pl.ds(T - 1 - idx, 1), :]
        sent_ref[pl.ds(s, 1), :] = jnp.where(lane_h < U, row_f, row_b)

    # ---- 4) head: Linear(concat(sent[i], sent[i+1])) + log-softmax, with the
    #         concat replaced by split weights (no lane-axis relayout).
    sa = sent_ref[pl.ds(0, S - 1), :]
    sb = sent_ref[pl.ds(1, S - 1), :]
    logits = (jnp.dot(sa, wtop_ref[...], preferred_element_type=jnp.float32)
              + jnp.dot(sb, wbot_ref[...], preferred_element_type=jnp.float32)
              + bout_ref[...])
    m = jnp.max(logits, axis=-1, keepdims=True)
    z = logits - m
    out_ref[...] = z - jnp.log(jnp.sum(jnp.exp(z), axis=-1, keepdims=True))


# ---------------------------------------------------------------------------
# Host-side parameter packing (done once, outside the kernel)
# ---------------------------------------------------------------------------
def _interleave_gates(a_f, a_b, unit):
    """Reorder torch gate blocks (i,f,g,o) of both directions into the
    interleaved column layout [i_f,i_b, f_f,f_b, g_f,g_b, o_f,o_b]."""
    blocks = []
    for k in range(4):
        blocks.append(a_f[..., k * unit:(k + 1) * unit])
        blocks.append(a_b[..., k * unit:(k + 1) * unit])
    return jnp.concatenate(blocks, axis=-1)


def pack_bilstm_params(wih_f, whh_f, b_f, wih_b, whh_b, b_b):
    U = whh_f.shape[0]
    # Combined input projection consuming x_comb[t] = [x[t] | x[T-1-t]]:
    # fwd gate columns read the top Din rows with W_ih^f, bwd gate columns
    # read the bottom Din rows with W_ih^b.
    wih_top = _interleave_gates(wih_f, jnp.zeros_like(wih_b), U)    # (Din, 8U)
    wih_bot = _interleave_gates(jnp.zeros_like(wih_f), wih_b, U)    # (Din, 8U)
    wih = jnp.concatenate([wih_top, wih_bot], axis=0)               # (2*Din, 8U)
    b = _interleave_gates(b_f, b_b, U)                              # (1, 8U)
    # Block-diagonal recurrent weight acting on [h_f | h_b].
    whh_top = _interleave_gates(whh_f, jnp.zeros_like(whh_b), U)    # rows for h_f
    whh_bot = _interleave_gates(jnp.zeros_like(whh_f), whh_b, U)    # rows for h_b
    whh = jnp.concatenate([whh_top, whh_bot], axis=0)               # (2U, 8U)
    return wih, whh, b


# ---------------------------------------------------------------------------
# Full forward pass: ONE pallas_call
# ---------------------------------------------------------------------------
def base_sequence_labeling_forward(params, x, eos_position_list):
    # TODO(synk): cross_attention (SoftAttention), NTN_flag (NeuralTensorNetwork),
    # sentence_zero_inithidden, connective positions and the non-'last' sentence
    # embedding types are disabled by the module defaults and not implemented.
    wih, whh, b = pack_bilstm_params(*params['word_lstm'])
    H = whh.shape[0]                               # hidden_size (= 2 * lstm_unit)
    w_out, b_out = params['w_out'], params['b_out']
    w_top, w_bot = w_out[:H, :], w_out[H:, :]

    eos = jnp.asarray(eos_position_list, dtype=jnp.int32)
    T = x.shape[0]
    S = int(eos.shape[0])
    O = w_out.shape[1]
    G = wih.shape[1]
    assert S >= 2

    # x_comb[t] = [x[t] | x[T-1-t]]  (tiny host-side prep; keeps the serial
    # in-kernel recurrence down to a single row load per step).
    x_comb = jnp.concatenate([x, x[::-1]], axis=-1)

    vmem = lambda: pl.BlockSpec(memory_space=pltpu.MemorySpace.VMEM)
    return pl.pallas_call(
        fused_forward_kernel,
        out_shape=jax.ShapeDtypeStruct((S - 1, O), jnp.float32),
        in_specs=[pl.BlockSpec(memory_space=pltpu.MemorySpace.SMEM)]
                 + [vmem() for _ in range(7)],
        out_specs=vmem(),
        scratch_shapes=[
            pltpu.VMEM((T, G), jnp.float32),   # hoisted per-step gate inputs
            pltpu.VMEM((T, H), jnp.float32),   # per-step hidden history
            pltpu.VMEM((S, H), jnp.float32),   # sentence embeddings
        ],
    )(eos, x_comb, wih, whh, b, w_top, w_bot, b_out)


# ---------------------------------------------------------------------------
# Parameter init + pure-JAX reference (for correctness checking)
# ---------------------------------------------------------------------------
def init_params(key, input_size, hidden_size, output_size):
    U = hidden_size // 2  # bidirectional -> lstm_unit = hidden // 2
    ks = jax.random.split(key, 8)
    nrm = lambda k, shape: (0.1 * jax.random.normal(k, shape)).astype(jnp.float32)
    word_lstm = (nrm(ks[0], (input_size, 4 * U)),   # W_ih fwd (gate order i,f,g,o)
                 nrm(ks[1], (U, 4 * U)),            # W_hh fwd
                 nrm(ks[2], (1, 4 * U)),            # b_ih + b_hh fwd
                 nrm(ks[3], (input_size, 4 * U)),   # W_ih bwd
                 nrm(ks[4], (U, 4 * U)),            # W_hh bwd
                 nrm(ks[5], (1, 4 * U)))            # b_ih + b_hh bwd
    return dict(word_lstm=word_lstm,
                w_out=nrm(ks[6], (2 * hidden_size, output_size)),
                b_out=nrm(ks[7], (1, output_size)))


def _lstm_direction_ref(x_seq, wih, whh, b):
    U = whh.shape[0]

    def cell(carry, x_t):
        h, c = carry
        gates = x_t @ wih + h @ whh + b[0]
        i = jax.nn.sigmoid(gates[0 * U:1 * U])
        f = jax.nn.sigmoid(gates[1 * U:2 * U])
        g = jnp.tanh(gates[2 * U:3 * U])
        o = jax.nn.sigmoid(gates[3 * U:4 * U])
        c = f * c + i * g
        h = o * jnp.tanh(c)
        return (h, c), h

    init = (jnp.zeros((U,), jnp.float32), jnp.zeros((U,), jnp.float32))
    _, hs = lax.scan(cell, init, x_seq)
    return hs


def reference_forward(params, x, eos_position_list):
    wih_f, whh_f, b_f, wih_b, whh_b, b_b = params['word_lstm']
    hs_f = _lstm_direction_ref(x, wih_f, whh_f, b_f)
    hs_b = _lstm_direction_ref(x[::-1], wih_b, whh_b, b_b)[::-1]
    word_out = jnp.concatenate([hs_f, hs_b], axis=-1)            # (T, hidden)
    idx = jnp.asarray([e - 1 for e in eos_position_list], dtype=jnp.int32)
    sent = word_out[idx]                                         # (S, hidden)
    pairs = jnp.concatenate([sent[:-1], sent[1:]], axis=-1)      # (S-1, 2*hidden)
    logits = pairs @ params['w_out'] + params['b_out']
    return jax.nn.log_softmax(logits, axis=-1)


if __name__ == "__main__":
    jax.config.update("jax_default_matmul_precision", "highest")

    key = jax.random.PRNGKey(0)
    input_size, hidden_size, output_size = 32, 32, 4
    T = 16
    eos_positions = [4, 8, 12, 16]        # 4 sentences -> 3 adjacent pairs
    S = len(eos_positions)

    kx, kp = jax.random.split(key)
    x = jax.random.normal(kx, (T, input_size), dtype=jnp.float32)
    params = init_params(kp, input_size, hidden_size, output_size)

    out = base_sequence_labeling_forward(params, x, eos_positions)
    out = jax.block_until_ready(out)

    ref = reference_forward(params, x, eos_positions)
    assert out.shape == (S - 1, output_size)
    assert bool(jnp.all(jnp.isfinite(out)))
    assert bool(jnp.allclose(out, ref, atol=1e-3, rtol=1e-3))
    print("KERNEL_OK")
</pallas_src>

<mosaic_0001>
module attributes {stable_mosaic.version = 11 : i64} {
  func.func @fused_forward_kernel(%arg0: memref<4xi32, #tpu.memory_space<smem>>, %arg1: memref<16x64xf32, #tpu.memory_space<vmem>>, %arg2: memref<64x128xf32, #tpu.memory_space<vmem>>, %arg3: memref<32x128xf32, #tpu.memory_space<vmem>>, %arg4: memref<1x128xf32, #tpu.memory_space<vmem>>, %arg5: memref<32x4xf32, #tpu.memory_space<vmem>>, %arg6: memref<32x4xf32, #tpu.memory_space<vmem>>, %arg7: memref<1x4xf32, #tpu.memory_space<vmem>>, %arg8: memref<3x4xf32, #tpu.memory_space<vmem>>, %arg9: memref<16x128xf32, #tpu.memory_space<vmem>>, %arg10: memref<16x32xf32, #tpu.memory_space<vmem>>, %arg11: memref<4x32xf32, #tpu.memory_space<vmem>>) attributes {dimension_semantics = [], scalar_prefetch = 0 : i64, scratch_operands = 3 : i64, tpu.core_type = #tpu.core_type<tc>} {
    %c0 = arith.constant 0 : index
    %c0_0 = arith.constant 0 : index
    %0 = vector.load %arg1[%c0, %c0_0] : memref<16x64xf32, #tpu.memory_space<vmem>>, vector<16x64xf32>
    %c0_1 = arith.constant 0 : index
    %c0_2 = arith.constant 0 : index
    %1 = vector.load %arg2[%c0_1, %c0_2] : memref<64x128xf32, #tpu.memory_space<vmem>>, vector<64x128xf32>
    %cst = arith.constant dense<0.000000e+00> : vector<16x128xf32>
    %2 = tpu.matmul %0, %1, %cst {dimension_numbers = #tpu.dot_dimension_numbers<[1], [0], [0], [1], [0, 0, 1, 1], [], []>, precision = #tpu.contract_precision<fp32>} : vector<16x64xf32>, vector<64x128xf32>, vector<16x128xf32> -> vector<16x128xf32>
    %c0_3 = arith.constant 0 : index
    %c0_4 = arith.constant 0 : index
    %3 = vector.load %arg4[%c0_3, %c0_4] : memref<1x128xf32, #tpu.memory_space<vmem>>, vector<1x128xf32>
    %4 = vector.broadcast %3 : vector<1x128xf32> to vector<16x128xf32>
    %5 = arith.addf %2, %4 : vector<16x128xf32>
    %c0_5 = arith.constant 0 : index
    %c0_6 = arith.constant 0 : index
    %6 = vector.load %arg9[%c0_5, %c0_6] : memref<16x128xf32, #tpu.memory_space<vmem>>, vector<16x128xf32>
    tpu.vector_store %arg9[%c0_5, %c0_6], %5 {strides = array<i32>} : memref<16x128xf32, #tpu.memory_space<vmem>>, vector<16x128xf32>,
    %c0_7 = arith.constant 0 : index
    %c0_8 = arith.constant 0 : index
    %7 = vector.load %arg3[%c0_7, %c0_8] : memref<32x128xf32, #tpu.memory_space<vmem>>, vector<32x128xf32>
    %cst_9 = arith.constant 0.000000e+00 : f32
    %8 = vector.broadcast %cst_9 : f32 to vector<1x32xf32>
    %cst_10 = arith.constant 0.000000e+00 : f32
    %9 = vector.broadcast %cst_10 : f32 to vector<1x32xf32>
    %c0_i32 = arith.constant 0 : i32
    %10 = arith.index_cast %c0_i32 : i32 to index
    %c0_11 = arith.constant 0 : index
    %11 = vector.load %arg9[%10, %c0_11] : memref<16x128xf32, #tpu.memory_space<vmem>>, vector<1x128xf32>
    %cst_12 = arith.constant dense<0.000000e+00> : vector<1x128xf32>
    %12 = tpu.matmul %8, %7, %cst_12 {dimension_numbers = #tpu.dot_dimension_numbers<[1], [0], [0], [1], [0, 0, 1, 1], [], []>, precision = #tpu.contract_precision<fp32>} : vector<1x32xf32>, vector<32x128xf32>, vector<1x128xf32> -> vector<1x128xf32>
    %13 = arith.addf %11, %12 : vector<1x128xf32>
    %14 = arith.negf %13 : vector<1x128xf32>
    %15 = math.exp %14 : vector<1x128xf32>
    %cst_13 = arith.constant 1.000000e+00 : f32
    %16 = vector.broadcast %cst_13 : f32 to vector<1x128xf32>
    %17 = arith.addf %16, %15 : vector<1x128xf32>
    %18 = arith.divf %16, %17 : vector<1x128xf32>
    %19 = math.tanh %13 : vector<1x128xf32>
    %20 = vector.extract_strided_slice %18 {offsets = [0, 0], sizes = [1, 32], strides = [1, 1]} : vector<1x128xf32> to vector<1x32xf32>
    %21 = vector.extract_strided_slice %18 {offsets = [0, 32], sizes = [1, 32], strides = [1, 1]} : vector<1x128xf32> to vector<1x32xf32>
    %22 = vector.extract_strided_slice %19 {offsets = [0, 64], sizes = [1, 32], strides = [1, 1]} : vector<1x128xf32> to vector<1x32xf32>
    %23 = vector.extract_strided_slice %18 {offsets = [0, 96], sizes = [1, 32], strides = [1, 1]} : vector<1x128xf32> to vector<1x32xf32>
    %24 = arith.mulf %21, %9 : vector<1x32xf32>
    %25 = arith.mulf %20, %22 : vector<1x32xf32>
    %26 = arith.addf %24, %25 : vector<1x32xf32>
    %27 = math.tanh %26 : vector<1x32xf32>
    %28 = arith.mulf %23, %27 : vector<1x32xf32>
    %29 = arith.index_cast %c0_i32 : i32 to index
    %c0_14 = arith.constant 0 : index
    %30 = vector.load %arg10[%29, %c0_14] : memref<16x32xf32, #tpu.memory_space<vmem>>, vector<1x32xf32>
    tpu.vector_store %arg10[%29, %c0_14], %28 {strides = array<i32>} : memref<16x32xf32, #tpu.memory_space<vmem>>, vector<1x32xf32>,
    %c1_i32 = arith.constant 1 : i32
    %31 = arith.index_cast %c1_i32 : i32 to index
    %c0_15 = arith.constant 0 : index
    %32 = vector.load %arg9[%31, %c0_15] : memref<16x128xf32, #tpu.memory_space<vmem>>, vector<1x128xf32>
    %cst_16 = arith.constant dense<0.000000e+00> : vector<1x128xf32>
    %33 = tpu.matmul %28, %7, %cst_16 {dimension_numbers = #tpu.dot_dimension_numbers<[1], [0], [0], [1], [0, 0, 1, 1], [], []>, precision = #tpu.contract_precision<fp32>} : vector<1x32xf32>, vector<32x128xf32>, vector<1x128xf32> -> vector<1x128xf32>
    %34 = arith.addf %32, %33 : vector<1x128xf32>
    %35 = arith.negf %34 : vector<1x128xf32>
    %36 = math.exp %35 : vector<1x128xf32>
    %cst_17 = arith.constant 1.000000e+00 : f32
    %37 = vector.broadcast %cst_17 : f32 to vector<1x128xf32>
    %38 = arith.addf %37, %36 : vector<1x128xf32>
    %39 = arith.divf %37, %38 : vector<1x128xf32>
    %40 = math.tanh %34 : vector<1x128xf32>
    %41 = vector.extract_strided_slice %39 {offsets = [0, 0], sizes = [1, 32], strides = [1, 1]} : vector<1x128xf32> to vector<1x32xf32>
    %42 = vector.extract_strided_slice %39 {offsets = [0, 32], sizes = [1, 32], strides = [1, 1]} : vector<1x128xf32> to vector<1x32xf32>
    %43 = vector.extract_strided_slice %40 {offsets = [0, 64], sizes = [1, 32], strides = [1, 1]} : vector<1x128xf32> to vector<1x32xf32>
    %44 = vector.extract_strided_slice %39 {offsets = [0, 96], sizes = [1, 32], strides = [1, 1]} : vector<1x128xf32> to vector<1x32xf32>
    %45 = arith.mulf %42, %26 : vector<1x32xf32>
    %46 = arith.mulf %41, %43 : vector<1x32xf32>
    %47 = arith.addf %45, %46 : vector<1x32xf32>
    %48 = math.tanh %47 : vector<1x32xf32>
    %49 = arith.mulf %44, %48 : vector<1x32xf32>
    %50 = arith.index_cast %c1_i32 : i32 to index
    %c0_18 = arith.constant 0 : index
    %51 = vector.load %arg10[%50, %c0_18] : memref<16x32xf32, #tpu.memory_space<vmem>>, vector<1x32xf32>
    tpu.vector_store %arg10[%50, %c0_18], %49 {strides = array<i32>} : memref<16x32xf32, #tpu.memory_space<vmem>>, vector<1x32xf32>,
    %c2_i32 = arith.constant 2 : i32
    %52 = arith.index_cast %c2_i32 : i32 to index
    %c0_19 = arith.constant 0 : index
    %53 = vector.load %arg9[%52, %c0_19] : memref<16x128xf32, #tpu.memory_space<vmem>>, vector<1x128xf32>
    %cst_20 = arith.constant dense<0.000000e+00> : vector<1x128xf32>
    %54 = tpu.matmul %49, %7, %cst_20 {dimension_numbers = #tpu.dot_dimension_numbers<[1], [0], [0], [1], [0, 0, 1, 1], [], []>, precision = #tpu.contract_precision<fp32>} : vector<1x32xf32>, vector<32x128xf32>, vector<1x128xf32> -> vector<1x128xf32>
    %55 = arith.addf %53, %54 : vector<1x128xf32>
    %56 = arith.negf %55 : vector<1x128xf32>
    %57 = math.exp %56 : vector<1x128xf32>
    %cst_21 = arith.constant 1.000000e+00 : f32
    %58 = vector.broadcast %cst_21 : f32 to vector<1x128xf32>
    %59 = arith.addf %58, %57 : vector<1x128xf32>
    %60 = arith.divf %58, %59 : vector<1x128xf32>
    %61 = math.tanh %55 : vector<1x128xf32>
    %62 = vector.extract_strided_slice %60 {offsets = [0, 0], sizes = [1, 32], strides = [1, 1]} : vector<1x128xf32> to vector<1x32xf32>
    %63 = vector.extract_strided_slice %60 {offsets = [0, 32], sizes = [1, 32], strides = [1, 1]} : vector<1x128xf32> to vector<1x32xf32>
    %64 = vector.extract_strided_slice %61 {offsets = [0, 64], sizes = [1, 32], strides = [1, 1]} : vector<1x128xf32> to vector<1x32xf32>
    %65 = vector.extract_strided_slice %60 {offsets = [0, 96], sizes = [1, 32], strides = [1, 1]} : vector<1x128xf32> to vector<1x32xf32>
    %66 = arith.mulf %63, %47 : vector<1x32xf32>
    %67 = arith.mulf %62, %64 : vector<1x32xf32>
    %68 = arith.addf %66, %67 : vector<1x32xf32>
    %69 = math.tanh %68 : vector<1x32xf32>
    %70 = arith.mulf %65, %69 : vector<1x32xf32>
    %71 = arith.index_cast %c2_i32 : i32 to index
    %c0_22 = arith.constant 0 : index
    %72 = vector.load %arg10[%71, %c0_22] : memref<16x32xf32, #tpu.memory_space<vmem>>, vector<1x32xf32>
    tpu.vector_store %arg10[%71, %c0_22], %70 {strides = array<i32>} : memref<16x32xf32, #tpu.memory_space<vmem>>, vector<1x32xf32>,
    %c3_i32 = arith.constant 3 : i32
    %73 = arith.index_cast %c3_i32 : i32 to index
    %c0_23 = arith.constant 0 : index
    %74 = vector.load %arg9[%73, %c0_23] : memref<16x128xf32, #tpu.memory_space<vmem>>, vector<1x128xf32>
    %cst_24 = arith.constant dense<0.000000e+00> : vector<1x128xf32>
    %75 = tpu.matmul %70, %7, %cst_24 {dimension_numbers = #tpu.dot_dimension_numbers<[1], [0], [0], [1], [0, 0, 1, 1], [], []>, precision = #tpu.contract_precision<fp32>} : vector<1x32xf32>, vector<32x128xf32>, vector<1x128xf32> -> vector<1x128xf32>
    %76 = arith.addf %74, %75 : vector<1x128xf32>
    %77 = arith.negf %76 : vector<1x128xf32>
    %78 = math.exp %77 : vector<1x128xf32>
    %cst_25 = arith.constant 1.000000e+00 : f32
    %79 = vector.broadcast %cst_25 : f32 to vector<1x128xf32>
    %80 = arith.addf %79, %78 : vector<1x128xf32>
    %81 = arith.divf %79, %80 : vector<1x128xf32>
    %82 = math.tanh %76 : vector<1x128xf32>
    %83 = vector.extract_strided_slice %81 {offsets = [0, 0], sizes = [1, 32], strides = [1, 1]} : vector<1x128xf32> to vector<1x32xf32>
    %84 = vector.extract_strided_slice %81 {offsets = [0, 32], sizes = [1, 32], strides = [1, 1]} : vector<1x128xf32> to vector<1x32xf32>
    %85 = vector.extract_strided_slice %82 {offsets = [0, 64], sizes = [1, 32], strides = [1, 1]} : vector<1x128xf32> to vector<1x32xf32>
    %86 = vector.extract_strided_slice %81 {offsets = [0, 96], sizes = [1, 32], strides = [1, 1]} : vector<1x128xf32> to vector<1x32xf32>
    %87 = arith.mulf %84, %68 : vector<1x32xf32>
    %88 = arith.mulf %83, %85 : vector<1x32xf32>
    %89 = arith.addf %87, %88 : vector<1x32xf32>
    %90 = math.tanh %89 : vector<1x32xf32>
    %91 = arith.mulf %86, %90 : vector<1x32xf32>
    %92 = arith.index_cast %c3_i32 : i32 to index
    %c0_26 = arith.constant 0 : index
    %93 = vector.load %arg10[%92, %c0_26] : memref<16x32xf32, #tpu.memory_space<vmem>>, vector<1x32xf32>
    tpu.vector_store %arg10[%92, %c0_26], %91 {strides = array<i32>} : memref<16x32xf32, #tpu.memory_space<vmem>>, vector<1x32xf32>,
    %c4_i32 = arith.constant 4 : i32
    %94 = arith.index_cast %c4_i32 : i32 to index
    %c0_27 = arith.constant 0 : index
    %95 = vector.load %arg9[%94, %c0_27] : memref<16x128xf32, #tpu.memory_space<vmem>>, vector<1x128xf32>
    %cst_28 = arith.constant dense<0.000000e+00> : vector<1x128xf32>
    %96 = tpu.matmul %91, %7, %cst_28 {dimension_numbers = #tpu.dot_dimension_numbers<[1], [0], [0], [1], [0, 0, 1, 1], [], []>, precision = #tpu.contract_precision<fp32>} : vector<1x32xf32>, vector<32x128xf32>, vector<1x128xf32> -> vector<1x128xf32>
    %97 = arith.addf %95, %96 : vector<1x128xf32>
    %98 = arith.negf %97 : vector<1x128xf32>
    %99 = math.exp %98 : vector<1x128xf32>
    %cst_29 = arith.constant 1.000000e+00 : f32
    %100 = vector.broadcast %cst_29 : f32 to vector<1x128xf32>
    %101 = arith.addf %100, %99 : vector<1x128xf32>
    %102 = arith.divf %100, %101 : vector<1x128xf32>
    %103 = math.tanh %97 : vector<1x128xf32>
    %104 = vector.extract_strided_slice %102 {offsets = [0, 0], sizes = [1, 32], strides = [1, 1]} : vector<1x128xf32> to vector<1x32xf32>
    %105 = vector.extract_strided_slice %102 {offsets = [0, 32], sizes = [1, 32], strides = [1, 1]} : vector<1x128xf32> to vector<1x32xf32>
    %106 = vector.extract_strided_slice %103 {offsets = [0, 64], sizes = [1, 32], strides = [1, 1]} : vector<1x128xf32> to vector<1x32xf32>
    %107 = vector.extract_strided_slice %102 {offsets = [0, 96], sizes = [1, 32], strides = [1, 1]} : vector<1x128xf32> to vector<1x32xf32>
    %108 = arith.mulf %105, %89 : vector<1x32xf32>
    %109 = arith.mulf %104, %106 : vector<1x32xf32>
    %110 = arith.addf %108, %109 : vector<1x32xf32>
    %111 = math.tanh %110 : vector<1x32xf32>
    %112 = arith.mulf %107, %111 : vector<1x32xf32>
    %113 = arith.index_cast %c4_i32 : i32 to index
    %c0_30 = arith.constant 0 : index
    %114 = vector.load %arg10[%113, %c0_30] : memref<16x32xf32, #tpu.memory_space<vmem>>, vector<1x32xf32>
    tpu.vector_store %arg10[%113, %c0_30], %112 {strides = array<i32>} : memref<16x32xf32, #tpu.memory_space<vmem>>, vector<1x32xf32>,
    %c5_i32 = arith.constant 5 : i32
    %115 = arith.index_cast %c5_i32 : i32 to index
    %c0_31 = arith.constant 0 : index
    %116 = vector.load %arg9[%115, %c0_31] : memref<16x128xf32, #tpu.memory_space<vmem>>, vector<1x128xf32>
    %cst_32 = arith.constant dense<0.000000e+00> : vector<1x128xf32>
    %117 = tpu.matmul %112, %7, %cst_32 {dimension_numbers = #tpu.dot_dimension_numbers<[1], [0], [0], [1], [0, 0, 1, 1], [], []>, precision = #tpu.contract_precision<fp32>} : vector<1x32xf32>, vector<32x128xf32>, vector<1x128xf32> -> vector<1x128xf32>
    %118 = arith.addf %116, %117 : vector<1x128xf32>
    %119 = arith.negf %118 : vector<1x128xf32>
    %120 = math.exp %119 : vector<1x128xf32>
    %cst_33 = arith.constant 1.000000e+00 : f32
    %121 = vector.broadcast %cst_33 : f32 to vector<1x128xf32>
    %122 = arith.addf %121, %120 : vector<1x128xf32>
    %123 = arith.divf %121, %122 : vector<1x128xf32>
    %124 = math.tanh %118 : vector<1x128xf32>
    %125 = vector.extract_strided_slice %123 {offsets = [0, 0], sizes = [1, 32], strides = [1, 1]} : vector<1x128xf32> to vector<1x32xf32>
    %126 = vector.extract_strided_slice %123 {offsets = [0, 32], sizes = [1, 32], strides = [1, 1]} : vector<1x128xf32> to vector<1x32xf32>
    %127 = vector.extract_strided_slice %124 {offsets = [0, 64], sizes = [1, 32], strides = [1, 1]} : vector<1x128xf32> to vector<1x32xf32>
    %128 = vector.extract_strided_slice %123 {offsets = [0, 96], sizes = [1, 32], strides = [1, 1]} : vector<1x128xf32> to vector<1x32xf32>
    %129 = arith.mulf %126, %110 : vector<1x32xf32>
    %130 = arith.mulf %125, %127 : vector<1x32xf32>
    %131 = arith.addf %129, %130 : vector<1x32xf32>
    %132 = math.tanh %131 : vector<1x32xf32>
    %133 = arith.mulf %128, %132 : vector<1x32xf32>
    %134 = arith.index_cast %c5_i32 : i32 to index
    %c0_34 = arith.constant 0 : index
    %135 = vector.load %arg10[%134, %c0_34] : memref<16x32xf32, #tpu.memory_space<vmem>>, vector<1x32xf32>
    tpu.vector_store %arg10[%134, %c0_34], %133 {strides = array<i32>} : memref<16x32xf32, #tpu.memory_space<vmem>>, vector<1x32xf32>,
    %c6_i32 = arith.constant 6 : i32
    %136 = arith.index_cast %c6_i32 : i32 to index
    %c0_35 = arith.constant 0 : index
    %137 = vector.load %arg9[%136, %c0_35] : memref<16x128xf32, #tpu.memory_space<vmem>>, vector<1x128xf32>
    %cst_36 = arith.constant dense<0.000000e+00> : vector<1x128xf32>
    %138 = tpu.matmul %133, %7, %cst_36 {dimension_numbers = #tpu.dot_dimension_numbers<[1], [0], [0], [1], [0, 0, 1, 1], [], []>, precision = #tpu.contract_precision<fp32>} : vector<1x32xf32>, vector<32x128xf32>, vector<1x128xf32> -> vector<1x128xf32>
    %139 = arith.addf %137, %138 : vector<1x128xf32>
    %140 = arith.negf %139 : vector<1x128xf32>
    %141 = math.exp %140 : vector<1x128xf32>
    %cst_37 = arith.constant 1.000000e+00 : f32
    %142 = vector.broadcast %cst_37 : f32 to vector<1x128xf32>
    %143 = arith.addf %142, %141 : vector<1x128xf32>
    %144 = arith.divf %142, %143 : vector<1x128xf32>
    %145 = math.tanh %139 : vector<1x128xf32>
    %146 = vector.extract_strided_slice %144 {offsets = [0, 0], sizes = [1, 32], strides = [1, 1]} : vector<1x128xf32> to vector<1x32xf32>
    %147 = vector.extract_strided_slice %144 {offsets = [0, 32], sizes = [1, 32], strides = [1, 1]} : vector<1x128xf32> to vector<1x32xf32>
    %148 = vector.extract_strided_slice %145 {offsets = [0, 64], sizes = [1, 32], strides = [1, 1]} : vector<1x128xf32> to vector<1x32xf32>
    %149 = vector.extract_strided_slice %144 {offsets = [0, 96], sizes = [1, 32], strides = [1, 1]} : vector<1x128xf32> to vector<1x32xf32>
    %150 = arith.mulf %147, %131 : vector<1x32xf32>
    %151 = arith.mulf %146, %148 : vector<1x32xf32>
    %152 = arith.addf %150, %151 : vector<1x32xf32>
    %153 = math.tanh %152 : vector<1x32xf32>
    %154 = arith.mulf %149, %153 : vector<1x32xf32>
    %155 = arith.index_cast %c6_i32 : i32 to index
    %c0_38 = arith.constant 0 : index
    %156 = vector.load %arg10[%155, %c0_38] : memref<16x32xf32, #tpu.memory_space<vmem>>, vector<1x32xf32>
    tpu.vector_store %arg10[%155, %c0_38], %154 {strides = array<i32>} : memref<16x32xf32, #tpu.memory_space<vmem>>, vector<1x32xf32>,
    %c7_i32 = arith.constant 7 : i32
    %157 = arith.index_cast %c7_i32 : i32 to index
    %c0_39 = arith.constant 0 : index
    %158 = vector.load %arg9[%157, %c0_39] : memref<16x128xf32, #tpu.memory_space<vmem>>, vector<1x128xf32>
    %cst_40 = arith.constant dense<0.000000e+00> : vector<1x128xf32>
    %159 = tpu.matmul %154, %7, %cst_40 {dimension_numbers = #tpu.dot_dimension_numbers<[1], [0], [0], [1], [0, 0, 1, 1], [], []>, precision = #tpu.contract_precision<fp32>} : vector<1x32xf32>, vector<32x128xf32>, vector<1x128xf32> -> vector<1x128xf32>
    %160 = arith.addf %158, %159 : vector<1x128xf32>
    %161 = arith.negf %160 : vector<1x128xf32>
    %162 = math.exp %161 : vector<1x128xf32>
    %cst_41 = arith.constant 1.000000e+00 : f32
    %163 = vector.broadcast %cst_41 : f32 to vector<1x128xf32>
    %164 = arith.addf %163, %162 : vector<1x128xf32>
    %165 = arith.divf %163, %164 : vector<1x128xf32>
    %166 = math.tanh %160 : vector<1x128xf32>
    %167 = vector.extract_strided_slice %165 {offsets = [0, 0], sizes = [1, 32], strides = [1, 1]} : vector<1x128xf32> to vector<1x32xf32>
    %168 = vector.extract_strided_slice %165 {offsets = [0, 32], sizes = [1, 32], strides = [1, 1]} : vector<1x128xf32> to vector<1x32xf32>
    %169 = vector.extract_strided_slice %166 {offsets = [0, 64], sizes = [1, 32], strides = [1, 1]} : vector<1x128xf32> to vector<1x32xf32>
    %170 = vector.extract_strided_slice %165 {offsets = [0, 96], sizes = [1, 32], strides = [1, 1]} : vector<1x128xf32> to vector<1x32xf32>
    %171 = arith.mulf %168, %152 : vector<1x32xf32>
    %172 = arith.mulf %167, %169 : vector<1x32xf32>
    %173 = arith.addf %171, %172 : vector<1x32xf32>
    %174 = math.tanh %173 : vector<1x32xf32>
    %175 = arith.mulf %170, %174 : vector<1x32xf32>
    %176 = arith.index_cast %c7_i32 : i32 to index
    %c0_42 = arith.constant 0 : index
    %177 = vector.load %arg10[%176, %c0_42] : memref<16x32xf32, #tpu.memory_space<vmem>>, vector<1x32xf32>
    tpu.vector_store %arg10[%176, %c0_42], %175 {strides = array<i32>} : memref<16x32xf32, #tpu.memory_space<vmem>>, vector<1x32xf32>,
    %c8_i32 = arith.constant 8 : i32
    %178 = arith.index_cast %c8_i32 : i32 to index
    %c0_43 = arith.constant 0 : index
    %179 = vector.load %arg9[%178, %c0_43] : memref<16x128xf32, #tpu.memory_space<vmem>>, vector<1x128xf32>
    %cst_44 = arith.constant dense<0.000000e+00> : vector<1x128xf32>
    %180 = tpu.matmul %175, %7, %cst_44 {dimension_numbers = #tpu.dot_dimension_numbers<[1], [0], [0], [1], [0, 0, 1, 1], [], []>, precision = #tpu.contract_precision<fp32>} : vector<1x32xf32>, vector<32x128xf32>, vector<1x128xf32> -> vector<1x128xf32>
    %181 = arith.addf %179, %180 : vector<1x128xf32>
    %182 = arith.negf %181 : vector<1x128xf32>
    %183 = math.exp %182 : vector<1x128xf32>
    %cst_45 = arith.constant 1.000000e+00 : f32
    %184 = vector.broadcast %cst_45 : f32 to vector<1x128xf32>
    %185 = arith.addf %184, %183 : vector<1x128xf32>
    %186 = arith.divf %184, %185 : vector<1x128xf32>
    %187 = math.tanh %181 : vector<1x128xf32>
    %188 = vector.extract_strided_slice %186 {offsets = [0, 0], sizes = [1, 32], strides = [1, 1]} : vector<1x128xf32> to vector<1x32xf32>
    %189 = vector.extract_strided_slice %186 {offsets = [0, 32], sizes = [1, 32], strides = [1, 1]} : vector<1x128xf32> to vector<1x32xf32>
    %190 = vector.extract_strided_slice %187 {offsets = [0, 64], sizes = [1, 32], strides = [1, 1]} : vector<1x128xf32> to vector<1x32xf32>
    %191 = vector.extract_strided_slice %186 {offsets = [0, 96], sizes = [1, 32], strides = [1, 1]} : vector<1x128xf32> to vector<1x32xf32>
    %192 = arith.mulf %189, %173 : vector<1x32xf32>
    %193 = arith.mulf %188, %190 : vector<1x32xf32>
    %194 = arith.addf %192, %193 : vector<1x32xf32>
    %195 = math.tanh %194 : vector<1x32xf32>
    %196 = arith.mulf %191, %195 : vector<1x32xf32>
    %197 = arith.index_cast %c8_i32 : i32 to index
    %c0_46 = arith.constant 0 : index
    %198 = vector.load %arg10[%197, %c0_46] : memref<16x32xf32, #tpu.memory_space<vmem>>, vector<1x32xf32>
    tpu.vector_store %arg10[%197, %c0_46], %196 {strides = array<i32>} : memref<16x32xf32, #tpu.memory_space<vmem>>, vector<1x32xf32>,
    %c9_i32 = arith.constant 9 : i32
    %199 = arith.index_cast %c9_i32 : i32 to index
    %c0_47 = arith.constant 0 : index
    %200 = vector.load %arg9[%199, %c0_47] : memref<16x128xf32, #tpu.memory_space<vmem>>, vector<1x128xf32>
    %cst_48 = arith.constant dense<0.000000e+00> : vector<1x128xf32>
    %201 = tpu.matmul %196, %7, %cst_48 {dimension_numbers = #tpu.dot_dimension_numbers<[1], [0], [0], [1], [0, 0, 1, 1], [], []>, precision = #tpu.contract_precision<fp32>} : vector<1x32xf32>, vector<32x128xf32>, vector<1x128xf32> -> vector<1x128xf32>
    %202 = arith.addf %200, %201 : vector<1x128xf32>
    %203 = arith.negf %202 : vector<1x128xf32>
    %204 = math.exp %203 : vector<1x128xf32>
    %cst_49 = arith.constant 1.000000e+00 : f32
    %205 = vector.broadcast %cst_49 : f32 to vector<1x128xf32>
    %206 = arith.addf %205, %204 : vector<1x128xf32>
    %207 = arith.divf %205, %206 : vector<1x128xf32>
    %208 = math.tanh %202 : vector<1x128xf32>
    %209 = vector.extract_strided_slice %207 {offsets = [0, 0], sizes = [1, 32], strides = [1, 1]} : vector<1x128xf32> to vector<1x32xf32>
    %210 = vector.extract_strided_slice %207 {offsets = [0, 32], sizes = [1, 32], strides = [1, 1]} : vector<1x128xf32> to vector<1x32xf32>
    %211 = vector.extract_strided_slice %208 {offsets = [0, 64], sizes = [1, 32], strides = [1, 1]} : vector<1x128xf32> to vector<1x32xf32>
    %212 = vector.extract_strided_slice %207 {offsets = [0, 96], sizes = [1, 32], strides = [1, 1]} : vector<1x128xf32> to vector<1x32xf32>
    %213 = arith.mulf %210, %194 : vector<1x32xf32>
    %214 = arith.mulf %209, %211 : vector<1x32xf32>
    %215 = arith.addf %213, %214 : vector<1x32xf32>
    %216 = math.tanh %215 : vector<1x32xf32>
    %217 = arith.mulf %212, %216 : vector<1x32xf32>
    %218 = arith.index_cast %c9_i32 : i32 to index
    %c0_50 = arith.constant 0 : index
    %219 = vector.load %arg10[%218, %c0_50] : memref<16x32xf32, #tpu.memory_space<vmem>>, vector<1x32xf32>
    tpu.vector_store %arg10[%218, %c0_50], %217 {strides = array<i32>} : memref<16x32xf32, #tpu.memory_space<vmem>>, vector<1x32xf32>,
    %c10_i32 = arith.constant 10 : i32
    %220 = arith.index_cast %c10_i32 : i32 to index
    %c0_51 = arith.constant 0 : index
    %221 = vector.load %arg9[%220, %c0_51] : memref<16x128xf32, #tpu.memory_space<vmem>>, vector<1x128xf32>
    %cst_52 = arith.constant dense<0.000000e+00> : vector<1x128xf32>
    %222 = tpu.matmul %217, %7, %cst_52 {dimension_numbers = #tpu.dot_dimension_numbers<[1], [0], [0], [1], [0, 0, 1, 1], [], []>, precision = #tpu.contract_precision<fp32>} : vector<1x32xf32>, vector<32x128xf32>, vector<1x128xf32> -> vector<1x128xf32>
    %223 = arith.addf %221, %222 : vector<1x128xf32>
    %224 = arith.negf %223 : vector<1x128xf32>
    %225 = math.exp %224 : vector<1x128xf32>
    %cst_53 = arith.constant 1.000000e+00 : f32
    %226 = vector.broadcast %cst_53 : f32 to vector<1x128xf32>
    %227 = arith.addf %226, %225 : vector<1x128xf32>
    %228 = arith.divf %226, %227 : vector<1x128xf32>
    %229 = math.tanh %223 : vector<1x128xf32>
    %230 = vector.extract_strided_slice %228 {offsets = [0, 0], sizes = [1, 32], strides = [1, 1]} : vector<1x128xf32> to vector<1x32xf32>
    %231 = vector.extract_strided_slice %228 {offsets = [0, 32], sizes = [1, 32], strides = [1, 1]} : vector<1x128xf32> to vector<1x32xf32>
    %232 = vector.extract_strided_slice %229 {offsets = [0, 64], sizes = [1, 32], strides = [1, 1]} : vector<1x128xf32> to vector<1x32xf32>
    %233 = vector.extract_strided_slice %228 {offsets = [0, 96], sizes = [1, 32], strides = [1, 1]} : vector<1x128xf32> to vector<1x32xf32>
    %234 = arith.mulf %231, %215 : vector<1x32xf32>
    %235 = arith.mulf %230, %232 : vector<1x32xf32>
    %236 = arith.addf %234, %235 : vector<1x32xf32>
    %237 = math.tanh %236 : vector<1x32xf32>
    %238 = arith.mulf %233, %237 : vector<1x32xf32>
    %239 = arith.index_cast %c10_i32 : i32 to index
    %c0_54 = arith.constant 0 : index
    %240 = vector.load %arg10[%239, %c0_54] : memref<16x32xf32, #tpu.memory_space<vmem>>, vector<1x32xf32>
    tpu.vector_store %arg10[%239, %c0_54], %238 {strides = array<i32>} : memref<16x32xf32, #tpu.memory_space<vmem>>, vector<1x32xf32>,
    %c11_i32 = arith.constant 11 : i32
    %241 = arith.index_cast %c11_i32 : i32 to index
    %c0_55 = arith.constant 0 : index
    %242 = vector.load %arg9[%241, %c0_55] : memref<16x128xf32, #tpu.memory_space<vmem>>, vector<1x128xf32>
    %cst_56 = arith.constant dense<0.000000e+00> : vector<1x128xf32>
    %243 = tpu.matmul %238, %7, %cst_56 {dimension_numbers = #tpu.dot_dimension_numbers<[1], [0], [0], [1], [0, 0, 1, 1], [], []>, precision = #tpu.contract_precision<fp32>} : vector<1x32xf32>, vector<32x128xf32>, vector<1x128xf32> -> vector<1x128xf32>
    %244 = arith.addf %242, %243 : vector<1x128xf32>
    %245 = arith.negf %244 : vector<1x128xf32>
    %246 = math.exp %245 : vector<1x128xf32>
    %cst_57 = arith.constant 1.000000e+00 : f32
    %247 = vector.broadcast %cst_57 : f32 to vector<1x128xf32>
    %248 = arith.addf %247, %246 : vector<1x128xf32>
    %249 = arith.divf %247, %248 : vector<1x128xf32>
    %250 = math.tanh %244 : vector<1x128xf32>
    %251 = vector.extract_strided_slice %249 {offsets = [0, 0], sizes = [1, 32], strides = [1, 1]} : vector<1x128xf32> to vector<1x32xf32>
    %252 = vector.extract_strided_slice %249 {offsets = [0, 32], sizes = [1, 32], strides = [1, 1]} : vector<1x128xf32> to vector<1x32xf32>
    %253 = vector.extract_strided_slice %250 {offsets = [0, 64], sizes = [1, 32], strides = [1, 1]} : vector<1x128xf32> to vector<1x32xf32>
    %254 = vector.extract_strided_slice %249 {offsets = [0, 96], sizes = [1, 32], strides = [1, 1]} : vector<1x128xf32> to vector<1x32xf32>
    %255 = arith.mulf %252, %236 : vector<1x32xf32>
    %256 = arith.mulf %251, %253 : vector<1x32xf32>
    %257 = arith.addf %255, %256 : vector<1x32xf32>
    %258 = math.tanh %257 : vector<1x32xf32>
    %259 = arith.mulf %254, %258 : vector<1x32xf32>
    %260 = arith.index_cast %c11_i32 : i32 to index
    %c0_58 = arith.constant 0 : index
    %261 = vector.load %arg10[%260, %c0_58] : memref<16x32xf32, #tpu.memory_space<vmem>>, vector<1x32xf32>
    tpu.vector_store %arg10[%260, %c0_58], %259 {strides = array<i32>} : memref<16x32xf32, #tpu.memory_space<vmem>>, vector<1x32xf32>,
    %c12_i32 = arith.constant 12 : i32
    %262 = arith.index_cast %c12_i32 : i32 to index
    %c0_59 = arith.constant 0 : index
    %263 = vector.load %arg9[%262, %c0_59] : memref<16x128xf32, #tpu.memory_space<vmem>>, vector<1x128xf32>
    %cst_60 = arith.constant dense<0.000000e+00> : vector<1x128xf32>
    %264 = tpu.matmul %259, %7, %cst_60 {dimension_numbers = #tpu.dot_dimension_numbers<[1], [0], [0], [1], [0, 0, 1, 1], [], []>, precision = #tpu.contract_precision<fp32>} : vector<1x32xf32>, vector<32x128xf32>, vector<1x128xf32> -> vector<1x128xf32>
    %265 = arith.addf %263, %264 : vector<1x128xf32>
    %266 = arith.negf %265 : vector<1x128xf32>
    %267 = math.exp %266 : vector<1x128xf32>
    %cst_61 = arith.constant 1.000000e+00 : f32
    %268 = vector.broadcast %cst_61 : f32 to vector<1x128xf32>
    %269 = arith.addf %268, %267 : vector<1x128xf32>
    %270 = arith.divf %268, %269 : vector<1x128xf32>
    %271 = math.tanh %265 : vector<1x128xf32>
    %272 = vector.extract_strided_slice %270 {offsets = [0, 0], sizes = [1, 32], strides = [1, 1]} : vector<1x128xf32> to vector<1x32xf32>
    %273 = vector.extract_strided_slice %270 {offsets = [0, 32], sizes = [1, 32], strides = [1, 1]} : vector<1x128xf32> to vector<1x32xf32>
    %274 = vector.extract_strided_slice %271 {offsets = [0, 64], sizes = [1, 32], strides = [1, 1]} : vector<1x128xf32> to vector<1x32xf32>
    %275 = vector.extract_strided_slice %270 {offsets = [0, 96], sizes = [1, 32], strides = [1, 1]} : vector<1x128xf32> to vector<1x32xf32>
    %276 = arith.mulf %273, %257 : vector<1x32xf32>
    %277 = arith.mulf %272, %274 : vector<1x32xf32>
    %278 = arith.addf %276, %277 : vector<1x32xf32>
    %279 = math.tanh %278 : vector<1x32xf32>
    %280 = arith.mulf %275, %279 : vector<1x32xf32>
    %281 = arith.index_cast %c12_i32 : i32 to index
    %c0_62 = arith.constant 0 : index
    %282 = vector.load %arg10[%281, %c0_62] : memref<16x32xf32, #tpu.memory_space<vmem>>, vector<1x32xf32>
    tpu.vector_store %arg10[%281, %c0_62], %280 {strides = array<i32>} : memref<16x32xf32, #tpu.memory_space<vmem>>, vector<1x32xf32>,
    %c13_i32 = arith.constant 13 : i32
    %283 = arith.index_cast %c13_i32 : i32 to index
    %c0_63 = arith.constant 0 : index
    %284 = vector.load %arg9[%283, %c0_63] : memref<16x128xf32, #tpu.memory_space<vmem>>, vector<1x128xf32>
    %cst_64 = arith.constant dense<0.000000e+00> : vector<1x128xf32>
    %285 = tpu.matmul %280, %7, %cst_64 {dimension_numbers = #tpu.dot_dimension_numbers<[1], [0], [0], [1], [0, 0, 1, 1], [], []>, precision = #tpu.contract_precision<fp32>} : vector<1x32xf32>, vector<32x128xf32>, vector<1x128xf32> -> vector<1x128xf32>
    %286 = arith.addf %284, %285 : vector<1x128xf32>
    %287 = arith.negf %286 : vector<1x128xf32>
    %288 = math.exp %287 : vector<1x128xf32>
    %cst_65 = arith.constant 1.000000e+00 : f32
    %289 = vector.broadcast %cst_65 : f32 to vector<1x128xf32>
    %290 = arith.addf %289, %288 : vector<1x128xf32>
    %291 = arith.divf %289, %290 : vector<1x128xf32>
    %292 = math.tanh %286 : vector<1x128xf32>
    %293 = vector.extract_strided_slice %291 {offsets = [0, 0], sizes = [1, 32], strides = [1, 1]} : vector<1x128xf32> to vector<1x32xf32>
    %294 = vector.extract_strided_slice %291 {offsets = [0, 32], sizes = [1, 32], strides = [1, 1]} : vector<1x128xf32> to vector<1x32xf32>
    %295 = vector.extract_strided_slice %292 {offsets = [0, 64], sizes = [1, 32], strides = [1, 1]} : vector<1x128xf32> to vector<1x32xf32>
    %296 = vector.extract_strided_slice %291 {offsets = [0, 96], sizes = [1, 32], strides = [1, 1]} : vector<1x128xf32> to vector<1x32xf32>
    %297 = arith.mulf %294, %278 : vector<1x32xf32>
    %298 = arith.mulf %293, %295 : vector<1x32xf32>
    %299 = arith.addf %297, %298 : vector<1x32xf32>
    %300 = math.tanh %299 : vector<1x32xf32>
    %301 = arith.mulf %296, %300 : vector<1x32xf32>
    %302 = arith.index_cast %c13_i32 : i32 to index
    %c0_66 = arith.constant 0 : index
    %303 = vector.load %arg10[%302, %c0_66] : memref<16x32xf32, #tpu.memory_space<vmem>>, vector<1x32xf32>
    tpu.vector_store %arg10[%302, %c0_66], %301 {strides = array<i32>} : memref<16x32xf32, #tpu.memory_space<vmem>>, vector<1x32xf32>,
    %c14_i32 = arith.constant 14 : i32
    %304 = arith.index_cast %c14_i32 : i32 to index
    %c0_67 = arith.constant 0 : index
    %305 = vector.load %arg9[%304, %c0_67] : memref<16x128xf32, #tpu.memory_space<vmem>>, vector<1x128xf32>
    %cst_68 = arith.constant dense<0.000000e+00> : vector<1x128xf32>
    %306 = tpu.matmul %301, %7, %cst_68 {dimension_numbers = #tpu.dot_dimension_numbers<[1], [0], [0], [1], [0, 0, 1, 1], [], []>, precision = #tpu.contract_precision<fp32>} : vector<1x32xf32>, vector<32x128xf32>, vector<1x128xf32> -> vector<1x128xf32>
    %307 = arith.addf %305, %306 : vector<1x128xf32>
    %308 = arith.negf %307 : vector<1x128xf32>
    %309 = math.exp %308 : vector<1x128xf32>
    %cst_69 = arith.constant 1.000000e+00 : f32
    %310 = vector.broadcast %cst_69 : f32 to vector<1x128xf32>
    %311 = arith.addf %310, %309 : vector<1x128xf32>
    %312 = arith.divf %310, %311 : vector<1x128xf32>
    %313 = math.tanh %307 : vector<1x128xf32>
    %314 = vector.extract_strided_slice %312 {offsets = [0, 0], sizes = [1, 32], strides = [1, 1]} : vector<1x128xf32> to vector<1x32xf32>
    %315 = vector.extract_strided_slice %312 {offsets = [0, 32], sizes = [1, 32], strides = [1, 1]} : vector<1x128xf32> to vector<1x32xf32>
    %316 = vector.extract_strided_slice %313 {offsets = [0, 64], sizes = [1, 32], strides = [1, 1]} : vector<1x128xf32> to vector<1x32xf32>
    %317 = vector.extract_strided_slice %312 {offsets = [0, 96], sizes = [1, 32], strides = [1, 1]} : vector<1x128xf32> to vector<1x32xf32>
    %318 = arith.mulf %315, %299 : vector<1x32xf32>
    %319 = arith.mulf %314, %316 : vector<1x32xf32>
    %320 = arith.addf %318, %319 : vector<1x32xf32>
    %321 = math.tanh %320 : vector<1x32xf32>
    %322 = arith.mulf %317, %321 : vector<1x32xf32>
    %323 = arith.index_cast %c14_i32 : i32 to index
    %c0_70 = arith.constant 0 : index
    %324 = vector.load %arg10[%323, %c0_70] : memref<16x32xf32, #tpu.memory_space<vmem>>, vector<1x32xf32>
    tpu.vector_store %arg10[%323, %c0_70], %322 {strides = array<i32>} : memref<16x32xf32, #tpu.memory_space<vmem>>, vector<1x32xf32>,
    %c15_i32 = arith.constant 15 : i32
    %325 = arith.index_cast %c15_i32 : i32 to index
    %c0_71 = arith.constant 0 : index
    %326 = vector.load %arg9[%325, %c0_71] : memref<16x128xf32, #tpu.memory_space<vmem>>, vector<1x128xf32>
    %cst_72 = arith.constant dense<0.000000e+00> : vector<1x128xf32>
    %327 = tpu.matmul %322, %7, %cst_72 {dimension_numbers = #tpu.dot_dimension_numbers<[1], [0], [0], [1], [0, 0, 1, 1], [], []>, precision = #tpu.contract_precision<fp32>} : vector<1x32xf32>, vector<32x128xf32>, vector<1x128xf32> -> vector<1x128xf32>
    %328 = arith.addf %326, %327 : vector<1x128xf32>
    %329 = arith.negf %328 : vector<1x128xf32>
    %330 = math.exp %329 : vector<1x128xf32>
    %cst_73 = arith.constant 1.000000e+00 : f32
    %331 = vector.broadcast %cst_73 : f32 to vector<1x128xf32>
    %332 = arith.addf %331, %330 : vector<1x128xf32>
    %333 = arith.divf %331, %332 : vector<1x128xf32>
    %334 = math.tanh %328 : vector<1x128xf32>
    %335 = vector.extract_strided_slice %333 {offsets = [0, 0], sizes = [1, 32], strides = [1, 1]} : vector<1x128xf32> to vector<1x32xf32>
    %336 = vector.extract_strided_slice %333 {offsets = [0, 32], sizes = [1, 32], strides = [1, 1]} : vector<1x128xf32> to vector<1x32xf32>
    %337 = vector.extract_strided_slice %334 {offsets = [0, 64], sizes = [1, 32], strides = [1, 1]} : vector<1x128xf32> to vector<1x32xf32>
    %338 = vector.extract_strided_slice %333 {offsets = [0, 96], sizes = [1, 32], strides = [1, 1]} : vector<1x128xf32> to vector<1x32xf32>
    %339 = arith.mulf %336, %320 : vector<1x32xf32>
    %340 = arith.mulf %335, %337 : vector<1x32xf32>
    %341 = arith.addf %339, %340 : vector<1x32xf32>
    %342 = math.tanh %341 : vector<1x32xf32>
    %343 = arith.mulf %338, %342 : vector<1x32xf32>
    %344 = arith.index_cast %c15_i32 : i32 to index
    %c0_74 = arith.constant 0 : index
    %345 = vector.load %arg10[%344, %c0_74] : memref<16x32xf32, #tpu.memory_space<vmem>>, vector<1x32xf32>
    tpu.vector_store %arg10[%344, %c0_74], %343 {strides = array<i32>} : memref<16x32xf32, #tpu.memory_space<vmem>>, vector<1x32xf32>,
    %c16_i32 = arith.constant 16 : i32
    %346 = tpu.iota {dimensions = array<i32: 1>} : vector<1x32xi32>
    %c0_75 = arith.constant 0 : index
    %347 = memref.load %arg0[%c0_75] : memref<4xi32, #tpu.memory_space<smem>>
    %c1_i32_76 = arith.constant 1 : i32
    %348 = arith.subi %347, %c1_i32_76 : i32
    %349 = arith.index_cast %348 : i32 to index
    %c0_77 = arith.constant 0 : index
    %350 = vector.load %arg10[%349, %c0_77] : memref<16x32xf32, #tpu.memory_space<vmem>>, vector<1x32xf32>
    %c15_i32_78 = arith.constant 15 : i32
    %351 = arith.subi %c15_i32_78, %348 : i32
    %352 = arith.index_cast %351 : i32 to index
    %c0_79 = arith.constant 0 : index
    %353 = vector.load %arg10[%352, %c0_79] : memref<16x32xf32, #tpu.memory_space<vmem>>, vector<1x32xf32>
    %c16_i32_80 = arith.constant 16 : i32
    %354 = vector.broadcast %c16_i32_80 : i32 to vector<1x32xi32>
    %355 = arith.cmpi slt, %346, %354 : vector<1x32xi32>
    %356 = arith.select %355, %350, %353 : vector<1x32xi1>, vector<1x32xf32>
    %c0_81 = arith.constant 0 : index
    %c0_82 = arith.constant 0 : index
    %357 = vector.load %arg11[%c0_81, %c0_82] : memref<4x32xf32, #tpu.memory_space<vmem>>, vector<1x32xf32>
    tpu.vector_store %arg11[%c0_81, %c0_82], %356 {strides = array<i32>} : memref<4x32xf32, #tpu.memory_space<vmem>>, vector<1x32xf32>,
    %c1 = arith.constant 1 : index
    %358 = memref.load %arg0[%c1] : memref<4xi32, #tpu.memory_space<smem>>
    %c1_i32_83 = arith.constant 1 : i32
    %359 = arith.subi %358, %c1_i32_83 : i32
    %360 = arith.index_cast %359 : i32 to index
    %c0_84 = arith.constant 0 : index
    %361 = vector.load %arg10[%360, %c0_84] : memref<16x32xf32, #tpu.memory_space<vmem>>, vector<1x32xf32>
    %c15_i32_85 = arith.constant 15 : i32
    %362 = arith.subi %c15_i32_85, %359 : i32
    %363 = arith.index_cast %362 : i32 to index
    %c0_86 = arith.constant 0 : index
    %364 = vector.load %arg10[%363, %c0_86] : memref<16x32xf32, #tpu.memory_space<vmem>>, vector<1x32xf32>
    %c16_i32_87 = arith.constant 16 : i32
    %365 = vector.broadcast %c16_i32_87 : i32 to vector<1x32xi32>
    %366 = arith.cmpi slt, %346, %365 : vector<1x32xi32>
    %367 = arith.select %366, %361, %364 : vector<1x32xi1>, vector<1x32xf32>
    %c1_88 = arith.constant 1 : index
    %c0_89 = arith.constant 0 : index
    %368 = vector.load %arg11[%c1_88, %c0_89] : memref<4x32xf32, #tpu.memory_space<vmem>>, vector<1x32xf32>
    tpu.vector_store %arg11[%c1_88, %c0_89], %367 {strides = array<i32>} : memref<4x32xf32, #tpu.memory_space<vmem>>, vector<1x32xf32>,
    %c2 = arith.constant 2 : index
    %369 = memref.load %arg0[%c2] : memref<4xi32, #tpu.memory_space<smem>>
    %c1_i32_90 = arith.constant 1 : i32
    %370 = arith.subi %369, %c1_i32_90 : i32
    %371 = arith.index_cast %370 : i32 to index
    %c0_91 = arith.constant 0 : index
    %372 = vector.load %arg10[%371, %c0_91] : memref<16x32xf32, #tpu.memory_space<vmem>>, vector<1x32xf32>
    %c15_i32_92 = arith.constant 15 : i32
    %373 = arith.subi %c15_i32_92, %370 : i32
    %374 = arith.index_cast %373 : i32 to index
    %c0_93 = arith.constant 0 : index
    %375 = vector.load %arg10[%374, %c0_93] : memref<16x32xf32, #tpu.memory_space<vmem>>, vector<1x32xf32>
    %c16_i32_94 = arith.constant 16 : i32
    %376 = vector.broadcast %c16_i32_94 : i32 to vector<1x32xi32>
    %377 = arith.cmpi slt, %346, %376 : vector<1x32xi32>
    %378 = arith.select %377, %372, %375 : vector<1x32xi1>, vector<1x32xf32>
    %c2_95 = arith.constant 2 : index
    %c0_96 = arith.constant 0 : index
    %379 = vector.load %arg11[%c2_95, %c0_96] : memref<4x32xf32, #tpu.memory_space<vmem>>, vector<1x32xf32>
    tpu.vector_store %arg11[%c2_95, %c0_96], %378 {strides = array<i32>} : memref<4x32xf32, #tpu.memory_space<vmem>>, vector<1x32xf32>,
    %c3 = arith.constant 3 : index
    %380 = memref.load %arg0[%c3] : memref<4xi32, #tpu.memory_space<smem>>
    %c1_i32_97 = arith.constant 1 : i32
    %381 = arith.subi %380, %c1_i32_97 : i32
    %382 = arith.index_cast %381 : i32 to index
    %c0_98 = arith.constant 0 : index
    %383 = vector.load %arg10[%382, %c0_98] : memref<16x32xf32, #tpu.memory_space<vmem>>, vector<1x32xf32>
    %c15_i32_99 = arith.constant 15 : i32
    %384 = arith.subi %c15_i32_99, %381 : i32
    %385 = arith.index_cast %384 : i32 to index
    %c0_100 = arith.constant 0 : index
    %386 = vector.load %arg10[%385, %c0_100] : memref<16x32xf32, #tpu.memory_space<vmem>>, vector<1x32xf32>
    %c16_i32_101 = arith.constant 16 : i32
    %387 = vector.broadcast %c16_i32_101 : i32 to vector<1x32xi32>
    %388 = arith.cmpi slt, %346, %387 : vector<1x32xi32>
    %389 = arith.select %388, %383, %386 : vector<1x32xi1>, vector<1x32xf32>
    %c3_102 = arith.constant 3 : index
    %c0_103 = arith.constant 0 : index
    %390 = vector.load %arg11[%c3_102, %c0_103] : memref<4x32xf32, #tpu.memory_space<vmem>>, vector<1x32xf32>
    tpu.vector_store %arg11[%c3_102, %c0_103], %389 {strides = array<i32>} : memref<4x32xf32, #tpu.memory_space<vmem>>, vector<1x32xf32>,
    %c0_104 = arith.constant 0 : index
    %c0_105 = arith.constant 0 : index
    %391 = vector.load %arg11[%c0_104, %c0_105] : memref<4x32xf32, #tpu.memory_space<vmem>>, vector<3x32xf32>
    %c1_106 = arith.constant 1 : index
    %c0_107 = arith.constant 0 : index
    %392 = vector.load %arg11[%c1_106, %c0_107] : memref<4x32xf32, #tpu.memory_space<vmem>>, vector<3x32xf32>
    %c0_108 = arith.constant 0 : index
    %c0_109 = arith.constant 0 : index
    %393 = vector.load %arg5[%c0_108, %c0_109] : memref<32x4xf32, #tpu.memory_space<vmem>>, vector<32x4xf32>
    %cst_110 = arith.constant dense<0.000000e+00> : vector<3x4xf32>
    %394 = tpu.matmul %391, %393, %cst_110 {dimension_numbers = #tpu.dot_dimension_numbers<[1], [0], [0], [1], [0, 0, 1, 1], [], []>, precision = #tpu.contract_precision<fp32>} : vector<3x32xf32>, vector<32x4xf32>, vector<3x4xf32> -> vector<3x4xf32>
    %c0_111 = arith.constant 0 : index
    %c0_112 = arith.constant 0 : index
    %395 = vector.load %arg6[%c0_111, %c0_112] : memref<32x4xf32, #tpu.memory_space<vmem>>, vector<32x4xf32>
    %cst_113 = arith.constant dense<0.000000e+00> : vector<3x4xf32>
    %396 = tpu.matmul %392, %395, %cst_113 {dimension_numbers = #tpu.dot_dimension_numbers<[1], [0], [0], [1], [0, 0, 1, 1], [], []>, precision = #tpu.contract_precision<fp32>} : vector<3x32xf32>, vector<32x4xf32>, vector<3x4xf32> -> vector<3x4xf32>
    %397 = arith.addf %394, %396 : vector<3x4xf32>
    %c0_114 = arith.constant 0 : index
    %c0_115 = arith.constant 0 : index
    %398 = vector.load %arg7[%c0_114, %c0_115] : memref<1x4xf32, #tpu.memory_space<vmem>>, vector<1x4xf32>
    %399 = vector.broadcast %398 : vector<1x4xf32> to vector<3x4xf32>
    %400 = arith.addf %397, %399 : vector<3x4xf32>
    %cst_116 = arith.constant dense<0xFF800000> : vector<3xf32>
    %401 = vector.multi_reduction <maximumf>, %400, %cst_116 [1] : vector<3x4xf32> to vector<3xf32>
    %402 = vector.shape_cast %401 : vector<3xf32> to vector<3x1xf32>
    %403 = vector.broadcast %402 : vector<3x1xf32> to vector<3x4xf32>
    %404 = arith.subf %400, %403 : vector<3x4xf32>
    %405 = math.exp %404 : vector<3x4xf32>
    %cst_117 = arith.constant dense<0.000000e+00> : vector<3xf32>
    %406 = vector.multi_reduction <add>, %405, %cst_117 [1] : vector<3x4xf32> to vector<3xf32>
    %407 = vector.shape_cast %406 : vector<3xf32> to vector<3x1xf32>
    %408 = math.log %407 : vector<3x1xf32>
    %409 = vector.broadcast %408 : vector<3x1xf32> to vector<3x4xf32>
    %410 = arith.subf %404, %409 : vector<3x4xf32>
    %c0_118 = arith.constant 0 : index
    %c0_119 = arith.constant 0 : index
    %411 = vector.load %arg8[%c0_118, %c0_119] : memref<3x4xf32, #tpu.memory_space<vmem>>, vector<3x4xf32>
    tpu.vector_store %arg8[%c0_118, %c0_119], %410 {strides = array<i32>} : memref<3x4xf32, #tpu.memory_space<vmem>>, vector<3x4xf32>,
    return
  }
}

</mosaic_0001>

<llo_original>
// kernel: tpu_custom_call.1
$region0: #{tpu_custom_call.1}
  #allocation0 [shape = 'u32[]', space=smem, size = 0x4, offset = 0x4, fixed_abs, tag = 'smem constant byte address 0x4 - core index']
  #allocation1 [shape = 'u32[72,128]{1,0:T(1,128)}', space=vmem, size = 0x9000, scoped, tag = 'internal scratch']
  #allocation2 [shape = 'f32[16,128]{1,0:T(8,128)}', space=vmem, size = 0x2000, scoped, tag = 'scratch operand']
  #allocation3 [shape = 'f32[16,32]{1,0:T(8,128)}', space=vmem, size = 0x2000, scoped, tag = 'scratch operand']
  #allocation4 [shape = 'f32[4,32]{1,0:T(4,128)}', space=vmem, size = 0x800, scoped, tag = 'scratch operand']
  %s0 = inlined_call_operand.vmem [shape: s32[4], index: 0, kind: input, shape index: {}]
  %s1 = inlined_call_operand.hbm [shape: f32[16,64], index: 1, kind: input, shape index: {}]
  %s2 = inlined_call_operand.vmem [shape: f32[64,128], index: 2, kind: input, shape index: {}]
  %s3 = inlined_call_operand.hbm [shape: f32[32,128], index: 3, kind: input, shape index: {}]
  %s4 = inlined_call_operand.vmem [shape: f32[1,128], index: 4, kind: input, shape index: {}]
  %s5 = inlined_call_operand.vmem [shape: f32[32,4], index: 5, kind: input, shape index: {}]
  %s6 = inlined_call_operand.vmem [shape: f32[32,4], index: 6, kind: input, shape index: {}]
  %s7 = inlined_call_operand.vmem [shape: f32[1,4], index: 7, kind: input, shape index: {}]
  %s8 = inlined_call_operand.hbm [shape: f32[3,4], index: 8, kind: output, shape index: {}]
  %s9 = sld [smem:[#allocation0]]
  $region54: #{tpu_custom_call.1} parent=0
    _
  %s11 = ssub.s32 1, %s9
  %s12 = scalar_select 0, %s11, %s9
  $region1: #{tpu_custom_call.1} parent=0
    #allocation5 [shape = 'u8[512]{0}', space=smem, size = 0x200, scoped, tag = 'input window, operand 0, single buffered']
    #allocation6 [shape = 's32[1]{0}', space=sflag, size = 0x4, scoped, tag = 'scoped memory for tpu_custom_call.1']
    #allocation7 [shape = 's32[1]{0}', space=sflag, size = 0x4, scoped, tag = 'scoped memory for tpu_custom_call.1']
    #allocation8 [shape = 's32[1]{0}', space=sflag, size = 0x4, scoped, tag = 'scoped memory for tpu_custom_call.1']
    #allocation9 [shape = 'u8[8192]{0}', space=vmem, size = 0x2000, scoped, tag = 'input window, operand 1, single buffered']
    #allocation10 [shape = 'u8[16384]{0}', space=vmem, size = 0x4000, scoped, tag = 'input window, operand 3, single buffered']
    #allocation11 [shape = 's32[1]{0}', space=sflag, size = 0x4, scoped, tag = 'scoped memory for tpu_custom_call.1']
    #allocation12 [shape = 'u8[2048]{0}', space=vmem, size = 0x800, scoped, tag = 'output window, operand 0, single buffered']
    %13 = vsyncpa [#allocation8], 0
    %14 = vsyncpa [#allocation6], 0
    %15 = vsyncpa [#allocation11], 0
    %16 = vsyncpa [#allocation7], 0
    // Predicated region
    $region2: #{tpu_custom_call.1} parent=1 // pred_check
      _
    $region3: #{tpu_custom_call.1} parent=1 // pred_check_branch
      %18 = sbr.rel (0) target = $region5
    $region4: #{tpu_custom_call.1} parent=1 // pred_region
      %20 = vsyncadd [#allocation8], 0
      %s22 = sshll.u32 %s0, 4
      %s23 = int_to_ptr.vmem [resolvable:$true] %s22
      %25 = dma.vmem_to_smem %s23, 16, [#allocation5], [#allocation8]
    $region5: #{tpu_custom_call.1} parent=1 // pred_fallthru
      _
    // Predicated region
    $region6: #{tpu_custom_call.1} parent=1 // pred_check
      _
    $region7: #{tpu_custom_call.1} parent=1 // pred_check_branch
      %27 = sbr.rel (0) target = $region9
    $region8: #{tpu_custom_call.1} parent=1 // pred_region
      %29 = vsyncadd [#allocation6], 0
      %s30 = sshll.u32 %s1, 4
      %s31 = int_to_ptr.hbm [resolvable:$true] %s30
      %s32 = sshll.u32 [#allocation9], 4
      %s33 = int_to_ptr.vmem [resolvable:$true] %s32
      %38 = dma.hbm_to_vmem [thread:$0]  %s31, 256, %s33, [#allocation6], 128, 128, 8
    $region9: #{tpu_custom_call.1} parent=1 // pred_fallthru
      _
    // Predicated region
    $region10: #{tpu_custom_call.1} parent=1 // pred_check
      _
    $region11: #{tpu_custom_call.1} parent=1 // pred_check_branch
      %40 = sbr.rel (0) target = $region13
    $region12: #{tpu_custom_call.1} parent=1 // pred_region
      _
    $region13: #{tpu_custom_call.1} parent=1 // pred_fallthru
      _
    // Predicated region
    $region14: #{tpu_custom_call.1} parent=1 // pred_check
      _
    $region15: #{tpu_custom_call.1} parent=1 // pred_check_branch
      %42 = sbr.rel (0) target = $region17
    $region16: #{tpu_custom_call.1} parent=1 // pred_region
      %44 = vsyncadd [#allocation11], 0
      %s45 = sshll.u32 %s3, 4
      %s46 = int_to_ptr.hbm [resolvable:$true] %s45
      %s47 = sshll.u32 [#allocation10], 4
      %s48 = int_to_ptr.vmem [resolvable:$true] %s47
      %53 = dma.hbm_to_vmem [thread:$0]  %s46, 512, %s48, [#allocation11], 128, 128, 8
    $region17: #{tpu_custom_call.1} parent=1 // pred_fallthru
      _
    // Predicated region
    $region18: #{tpu_custom_call.1} parent=1 // pred_check
      _
    $region19: #{tpu_custom_call.1} parent=1 // pred_check_branch
      %55 = sbr.rel (0) target = $region21
    $region20: #{tpu_custom_call.1} parent=1 // pred_region
      _
    $region21: #{tpu_custom_call.1} parent=1 // pred_fallthru
      _
    // Predicated region
    $region22: #{tpu_custom_call.1} parent=1 // pred_check
      _
    $region23: #{tpu_custom_call.1} parent=1 // pred_check_branch
      %57 = sbr.rel (0) target = $region25
    $region24: #{tpu_custom_call.1} parent=1 // pred_region
      _
    $region25: #{tpu_custom_call.1} parent=1 // pred_fallthru
      _
    // Predicated region
    $region26: #{tpu_custom_call.1} parent=1 // pred_check
      _
    $region27: #{tpu_custom_call.1} parent=1 // pred_check_branch
      %59 = sbr.rel (0) target = $region29
    $region28: #{tpu_custom_call.1} parent=1 // pred_region
      _
    $region29: #{tpu_custom_call.1} parent=1 // pred_fallthru
      _
    // Predicated region
    $region30: #{tpu_custom_call.1} parent=1 // pred_check
      _
    $region31: #{tpu_custom_call.1} parent=1 // pred_check_branch
      %61 = sbr.rel (0) target = $region33
    $region32: #{tpu_custom_call.1} parent=1 // pred_region
      _
    $region33: #{tpu_custom_call.1} parent=1 // pred_fallthru
      _
    // Predicated region
    $region34: #{tpu_custom_call.1} parent=1 // pred_check
      _
    $region35: #{tpu_custom_call.1} parent=1 // pred_check_branch
      %63 = sbr.rel (0) target = $region37
    $region36: #{tpu_custom_call.1} parent=1 // pred_region
      %65 = dma.done [#allocation8], 16
    $region37: #{tpu_custom_call.1} parent=1 // pred_fallthru
      _
    // Predicated region
    $region38: #{tpu_custom_call.1} parent=1 // pred_check
      _
    $region39: #{tpu_custom_call.1} parent=1 // pred_check_branch
      %67 = sbr.rel (0) target = $region41
    $region40: #{tpu_custom_call.1} parent=1 // pred_region
      %69 = dma.done [#allocation6], 256
    $region41: #{tpu_custom_call.1} parent=1 // pred_fallthru
      _
    // Predicated region
    $region42: #{tpu_custom_call.1} parent=1 // pred_check
      _
    $region43: #{tpu_custom_call.1} parent=1 // pred_check_branch
      %71 = sbr.rel (0) target = $region45
    $region44: #{tpu_custom_call.1} parent=1 // pred_region
      %73 = dma.done [#allocation11], 512
    $region45: #{tpu_custom_call.1} parent=1 // pred_fallthru
      _
    %74 = sfence
    %v75 = vld [vmem:[#allocation9] sm:$0xff]
    %v76 = vld [vmem:[#allocation9 + $0x8] sm:$0xff]
    %v77 = vld [vmem:[%s2] sm:$0xff]
    %v78 = vld [vmem:[%s2 + $0x8] sm:$0xff]
    %v79 = vld [vmem:[%s2 + $0x10] sm:$0xff]
    %v80 = vld [vmem:[%s2 + $0x18] sm:$0xff]
    %v81 = vld [vmem:[%s2 + $0x20] sm:$0xff]
    %v82 = vld [vmem:[%s2 + $0x28] sm:$0xff]
    %v83 = vld [vmem:[%s2 + $0x30] sm:$0xff]
    %v84 = vld [vmem:[%s2 + $0x38] sm:$0xff]
    %v85 = vld [vmem:[%s4] sm:$0x1]
    %v87 = vperm.slane %v85, 0
    %vm89 = vcmask 523264
    %v91 = vsel %vm89, %v75, 0
    %v94 = vsel %vm89, %v76, 0
    %96 = vmatpush.msra.mxu0 0.0
    %97 = vmatpush.msra.mxu0 0.0
    %98 = vmatpush.msra.mxu0 0.0
    %99 = vmatpush.msra.mxu0 0.0
    %100 = vmatpush.msra.mxu0 0.0
    %101 = vmatpush.msra.mxu0 0.0
    %102 = vmatpush.msra.mxu0 0.0
    %103 = vmatpush.msra.mxu0 0.0
    %v104 = vand.u32 %v84, 4294901760
    %105 = vmatpush.msra.mxu0 %v104
    %v106 = vand.u32 %v83, 4294901760
    %107 = vmatpush.msra.mxu0 %v106
    %v108 = vand.u32 %v82, 4294901760
    %109 = vmatpush.msra.mxu0 %v108
    %v110 = vand.u32 %v81, 4294901760
    %111 = vmatpush.msra.mxu0 %v110
    %v112 = vand.u32 %v80, 4294901760
    %113 = vmatpush.msra.mxu0 %v112
    %v114 = vand.u32 %v79, 4294901760
    %115 = vmatpush.msra.mxu0 %v114
    %v116 = vand.u32 %v78, 4294901760
    %117 = vmatpush.msra.mxu0 %v116
    %v118 = vand.u32 %v77, 4294901760
    %119 = vmatpush.msra.mxu0 %v118
    %v120 = vand.u32 %v91, 4294901760
    %v121 = vsub.f32 %v91, %v120
    %v122 = vand.u32 %v121, 4294901760
    %v123 = vsub.f32 %v121, %v122
    %v124 = vand.u32 %v123, 4294901760
    %125 = vmatmul.f32.gmra.mxu0 %v124
    %v126 = vpop.f32.mrf.mxu0
    %v127 = vadd.f32 %v87, %v126
    %v128 = vand.u32 %v94, 4294901760
    %v129 = vsub.f32 %v94, %v128
    %v130 = vand.u32 %v129, 4294901760
    %v131 = vsub.f32 %v129, %v130
    %v132 = vand.u32 %v131, 4294901760
    %133 = vmatmul.f32.gmra.mxu0 %v132
    %v134 = vpop.f32.mrf.mxu0
    %v135 = vadd.f32 %v87, %v134
    %136 = vdwg.mxu0
    %137 = vmatpush.msra.mxu0 0.0
    %138 = vmatpush.msra.mxu0 0.0
    %139 = vmatpush.msra.mxu0 0.0
    %140 = vmatpush.msra.mxu0 0.0
    %141 = vmatpush.msra.mxu0 0.0
    %142 = vmatpush.msra.mxu0 0.0
    %143 = vmatpush.msra.mxu0 0.0
    %144 = vmatpush.msra.mxu0 0.0
    %v145 = vand.u32 %v84, 4294901760
    %v146 = vsub.f32 %v84, %v145
    %v147 = vand.u32 %v146, 4294901760
    %v148 = vsub.f32 %v146, %v147
    %v149 = vand.u32 %v148, 4294901760
    %150 = vmatpush.msra.mxu0 %v149
    %v151 = vand.u32 %v83, 4294901760
    %v152 = vsub.f32 %v83, %v151
    %v153 = vand.u32 %v152, 4294901760
    %v154 = vsub.f32 %v152, %v153
    %v155 = vand.u32 %v154, 4294901760
    %156 = vmatpush.msra.mxu0 %v155
    %v157 = vand.u32 %v82, 4294901760
    %v158 = vsub.f32 %v82, %v157
    %v159 = vand.u32 %v158, 4294901760
    %v160 = vsub.f32 %v158, %v159
    %v161 = vand.u32 %v160, 4294901760
    %162 = vmatpush.msra.mxu0 %v161
    %v163 = vand.u32 %v81, 4294901760
    %v164 = vsub.f32 %v81, %v163
    %v165 = vand.u32 %v164, 4294901760
    %v166 = vsub.f32 %v164, %v165
    %v167 = vand.u32 %v166, 4294901760
    %168 = vmatpush.msra.mxu0 %v167
    %v169 = vand.u32 %v80, 4294901760
    %v170 = vsub.f32 %v80, %v169
    %v171 = vand.u32 %v170, 4294901760
    %v172 = vsub.f32 %v170, %v171
    %v173 = vand.u32 %v172, 4294901760
    %174 = vmatpush.msra.mxu0 %v173
    %v175 = vand.u32 %v79, 4294901760
    %v176 = vsub.f32 %v79, %v175
    %v177 = vand.u32 %v176, 4294901760
    %v178 = vsub.f32 %v176, %v177
    %v179 = vand.u32 %v178, 4294901760
    %180 = vmatpush.msra.mxu0 %v179
    %v181 = vand.u32 %v78, 4294901760
    %v182 = vsub.f32 %v78, %v181
    %v183 = vand.u32 %v182, 4294901760
    %v184 = vsub.f32 %v182, %v183
    %v185 = vand.u32 %v184, 4294901760
    %186 = vmatpush.msra.mxu0 %v185
    %v187 = vand.u32 %v77, 4294901760
    %v188 = vsub.f32 %v77, %v187
    %v189 = vand.u32 %v188, 4294901760
    %v190 = vsub.f32 %v188, %v189
    %v191 = vand.u32 %v190, 4294901760
    %192 = vmatpush.msra.mxu0 %v191
    %v193 = vand.u32 %v91, 4294901760
    %194 = vmatmul.f32.gmra.mxu0 %v193
    %v195 = vpop.f32.mrf.mxu0
    %v196 = vadd.f32 %v127, %v195
    %v197 = vand.u32 %v94, 4294901760
    %198 = vmatmul.f32.gmra.mxu0 %v197
    %v199 = vpop.f32.mrf.mxu0
    %v200 = vadd.f32 %v135, %v199
    %201 = vdwg.mxu0
    %202 = vmatpush.msra.mxu0 0.0
    %203 = vmatpush.msra.mxu0 0.0
    %204 = vmatpush.msra.mxu0 0.0
    %205 = vmatpush.msra.mxu0 0.0
    %206 = vmatpush.msra.mxu0 0.0
    %207 = vmatpush.msra.mxu0 0.0
    %208 = vmatpush.msra.mxu0 0.0
    %209 = vmatpush.msra.mxu0 0.0
    %v210 = vand.u32 %v84, 4294901760
    %v211 = vsub.f32 %v84, %v210
    %212 = vmatpush.msra.mxu0 %v211
    %v213 = vand.u32 %v83, 4294901760
    %v214 = vsub.f32 %v83, %v213
    %215 = vmatpush.msra.mxu0 %v214
    %v216 = vand.u32 %v82, 4294901760
    %v217 = vsub.f32 %v82, %v216
    %218 = vmatpush.msra.mxu0 %v217
    %v219 = vand.u32 %v81, 4294901760
    %v220 = vsub.f32 %v81, %v219
    %221 = vmatpush.msra.mxu0 %v220
    %v222 = vand.u32 %v80, 4294901760
    %v223 = vsub.f32 %v80, %v222
    %224 = vmatpush.msra.mxu0 %v223
    %v225 = vand.u32 %v79, 4294901760
    %v226 = vsub.f32 %v79, %v225
    %227 = vmatpush.msra.mxu0 %v226
    %v228 = vand.u32 %v78, 4294901760
    %v229 = vsub.f32 %v78, %v228
    %230 = vmatpush.msra.mxu0 %v229
    %v231 = vand.u32 %v77, 4294901760
    %v232 = vsub.f32 %v77, %v231
    %233 = vmatpush.msra.mxu0 %v232
    %v234 = vand.u32 %v91, 4294901760
    %v235 = vsub.f32 %v91, %v234
    %236 = vmatmul.f32.gmra.mxu0 %v235
    %v237 = vpop.f32.mrf.mxu0
    %v238 = vadd.f32 %v196, %v237
    %v239 = vand.u32 %v94, 4294901760
    %v240 = vsub.f32 %v94, %v239
    %241 = vmatmul.f32.gmra.mxu0 %v240
    %v242 = vpop.f32.mrf.mxu0
    %v243 = vadd.f32 %v200, %v242
    %244 = vdwg.mxu0
    %245 = vmatpush.msra.mxu0 0.0
    %246 = vmatpush.msra.mxu0 0.0
    %247 = vmatpush.msra.mxu0 0.0
    %248 = vmatpush.msra.mxu0 0.0
    %249 = vmatpush.msra.mxu0 0.0
    %250 = vmatpush.msra.mxu0 0.0
    %251 = vmatpush.msra.mxu0 0.0
    %252 = vmatpush.msra.mxu0 0.0
    %v253 = vand.u32 %v84, 4294901760
    %254 = vmatpush.msra.mxu0 %v253
    %v255 = vand.u32 %v83, 4294901760
    %256 = vmatpush.msra.mxu0 %v255
    %v257 = vand.u32 %v82, 4294901760
    %258 = vmatpush.msra.mxu0 %v257
    %v259 = vand.u32 %v81, 4294901760
    %260 = vmatpush.msra.mxu0 %v259
    %v261 = vand.u32 %v80, 4294901760
    %262 = vmatpush.msra.mxu0 %v261
    %v263 = vand.u32 %v79, 4294901760
    %264 = vmatpush.msra.mxu0 %v263
    %v265 = vand.u32 %v78, 4294901760
    %266 = vmatpush.msra.mxu0 %v265
    %v267 = vand.u32 %v77, 4294901760
    %268 = vmatpush.msra.mxu0 %v267
    %v269 = vand.u32 %v91, 4294901760
    %v270 = vsub.f32 %v91, %v269
    %v271 = vand.u32 %v270, 4294901760
    %272 = vmatmul.f32.gmra.mxu0 %v271
    %v273 = vpop.f32.mrf.mxu0
    %v274 = vadd.f32 %v238, %v273
    %v275 = vand.u32 %v94, 4294901760
    %v276 = vsub.f32 %v94, %v275
    %v277 = vand.u32 %v276, 4294901760
    %278 = vmatmul.f32.gmra.mxu0 %v277
    %v279 = vpop.f32.mrf.mxu0
    %v280 = vadd.f32 %v243, %v279
    %281 = vdwg.mxu0
    %282 = vmatpush.msra.mxu0 0.0
    %283 = vmatpush.msra.mxu0 0.0
    %284 = vmatpush.msra.mxu0 0.0
    %285 = vmatpush.msra.mxu0 0.0
    %286 = vmatpush.msra.mxu0 0.0
    %287 = vmatpush.msra.mxu0 0.0
    %288 = vmatpush.msra.mxu0 0.0
    %289 = vmatpush.msra.mxu0 0.0
    %v290 = vand.u32 %v84, 4294901760
    %v291 = vsub.f32 %v84, %v290
    %v292 = vand.u32 %v291, 4294901760
    %293 = vmatpush.msra.mxu0 %v292
    %v294 = vand.u32 %v83, 4294901760
    %v295 = vsub.f32 %v83, %v294
    %v296 = vand.u32 %v295, 4294901760
    %297 = vmatpush.msra.mxu0 %v296
    %v298 = vand.u32 %v82, 4294901760
    %v299 = vsub.f32 %v82, %v298
    %v300 = vand.u32 %v299, 4294901760
    %301 = vmatpush.msra.mxu0 %v300
    %v302 = vand.u32 %v81, 4294901760
    %v303 = vsub.f32 %v81, %v302
    %v304 = vand.u32 %v303, 4294901760
    %305 = vmatpush.msra.mxu0 %v304
    %v306 = vand.u32 %v80, 4294901760
    %v307 = vsub.f32 %v80, %v306
    %v308 = vand.u32 %v307, 4294901760
    %309 = vmatpush.msra.mxu0 %v308
    %v310 = vand.u32 %v79, 4294901760
    %v311 = vsub.f32 %v79, %v310
    %v312 = vand.u32 %v311, 4294901760
    %313 = vmatpush.msra.mxu0 %v312
    %v314 = vand.u32 %v78, 4294901760
    %v315 = vsub.f32 %v78, %v314
    %v316 = vand.u32 %v315, 4294901760
    %317 = vmatpush.msra.mxu0 %v316
    %v318 = vand.u32 %v77, 4294901760
    %v319 = vsub.f32 %v77, %v318
    %v320 = vand.u32 %v319, 4294901760
    %321 = vmatpush.msra.mxu0 %v320
    %v322 = vand.u32 %v91, 4294901760
    %323 = vmatmul.f32.gmra.mxu0 %v322
    %v324 = vpop.f32.mrf.mxu0
    %v325 = vadd.f32 %v274, %v324
    %v326 = vand.u32 %v94, 4294901760
    %327 = vmatmul.f32.gmra.mxu0 %v326
    %v328 = vpop.f32.mrf.mxu0
    %v329 = vadd.f32 %v280, %v328
    %330 = vdwg.mxu0
    %331 = vmatpush.msra.mxu0 0.0
    %332 = vmatpush.msra.mxu0 0.0
    %333 = vmatpush.msra.mxu0 0.0
    %334 = vmatpush.msra.mxu0 0.0
    %335 = vmatpush.msra.mxu0 0.0
    %336 = vmatpush.msra.mxu0 0.0
    %337 = vmatpush.msra.mxu0 0.0
    %338 = vmatpush.msra.mxu0 0.0
    %v339 = vand.u32 %v84, 4294901760
    %340 = vmatpush.msra.mxu0 %v339
    %v341 = vand.u32 %v83, 4294901760
    %342 = vmatpush.msra.mxu0 %v341
    %v343 = vand.u32 %v82, 4294901760
    %344 = vmatpush.msra.mxu0 %v343
    %v345 = vand.u32 %v81, 4294901760
    %346 = vmatpush.msra.mxu0 %v345
    %v347 = vand.u32 %v80, 4294901760
    %348 = vmatpush.msra.mxu0 %v347
    %v349 = vand.u32 %v79, 4294901760
    %350 = vmatpush.msra.mxu0 %v349
    %v351 = vand.u32 %v78, 4294901760
    %352 = vmatpush.msra.mxu0 %v351
    %v353 = vand.u32 %v77, 4294901760
    %354 = vmatpush.msra.mxu0 %v353
    %v355 = vand.u32 %v91, 4294901760
    %356 = vmatmul.f32.gmra.mxu0 %v355
    %v357 = vpop.f32.mrf.mxu0
    %v358 = vadd.f32 %v325, %v357
    %v359 = vand.u32 %v94, 4294901760
    %360 = vmatmul.f32.gmra.mxu0 %v359
    %v361 = vpop.f32.mrf.mxu0
    %v362 = vadd.f32 %v329, %v361
    %363 = vdwg.mxu0
    %364 = vst [vmem:[#allocation2] sm:$0xff] %v358
    %365 = vst [vmem:[#allocation2 + $0x8] sm:$0xff] %v362
    %v366 = vld [vmem:[#allocation10] sm:$0xff]
    %v367 = vld [vmem:[#allocation10 + $0x8] sm:$0xff]
    %v368 = vld [vmem:[#allocation10 + $0x10] sm:$0xff]
    %v369 = vld [vmem:[#allocation10 + $0x18] sm:$0xff]
    %v370 = vld [vmem:[#allocation2] sm:$0x1]
    %vm371 = vcmask 261120
    %v373 = vsel %vm371, 0.0, 0
    %375 = vmatpush.msra.mxu0 0.0
    %376 = vmatpush.msra.mxu0 0.0
    %377 = vmatpush.msra.mxu0 0.0
    %378 = vmatpush.msra.mxu0 0.0
    %379 = vmatpush.msra.mxu0 0.0
    %380 = vmatpush.msra.mxu0 0.0
    %381 = vmatpush.msra.mxu0 0.0
    %382 = vmatpush.msra.mxu0 0.0
    %383 = vmatpush.msra.mxu0 0.0
    %384 = vmatpush.msra.mxu0 0.0
    %385 = vmatpush.msra.mxu0 0.0
    %386 = vmatpush.msra.mxu0 0.0
    %v387 = vand.u32 %v369, 4294901760
    %388 = vmatpush.msra.mxu0 %v387
    %v389 = vand.u32 %v368, 4294901760
    %390 = vmatpush.msra.mxu0 %v389
    %v391 = vand.u32 %v367, 4294901760
    %392 = vmatpush.msra.mxu0 %v391
    %v393 = vand.u32 %v366, 4294901760
    %394 = vmatpush.msra.mxu0 %v393
    %v395 = vand.u32 %v373, 4294901760
    %v396 = vsub.f32 %v373, %v395
    %v397 = vand.u32 %v396, 4294901760
    %v398 = vsub.f32 %v396, %v397
    %v399 = vand.u32 %v398, 4294901760
    %400 = vmatmul.f32.gmra.mxu0 %v399
    %v401 = vpop.f32.mrf.mxu0
    %v402 = vadd.f32 0.0, %v401
    %403 = vdwg.mxu0
    %404 = vmatpush.msra.mxu0 0.0
    %405 = vmatpush.msra.mxu0 0.0
    %406 = vmatpush.msra.mxu0 0.0
    %407 = vmatpush.msra.mxu0 0.0
    %408 = vmatpush.msra.mxu0 0.0
    %409 = vmatpush.msra.mxu0 0.0
    %410 = vmatpush.msra.mxu0 0.0
    %411 = vmatpush.msra.mxu0 0.0
    %412 = vmatpush.msra.mxu0 0.0
    %413 = vmatpush.msra.mxu0 0.0
    %414 = vmatpush.msra.mxu0 0.0
    %415 = vmatpush.msra.mxu0 0.0
    %v416 = vand.u32 %v369, 4294901760
    %v417 = vsub.f32 %v369, %v416
    %v418 = vand.u32 %v417, 4294901760
    %v419 = vsub.f32 %v417, %v418
    %v420 = vand.u32 %v419, 4294901760
    %421 = vmatpush.msra.mxu0 %v420
    %v422 = vand.u32 %v368, 4294901760
    %v423 = vsub.f32 %v368, %v422
    %v424 = vand.u32 %v423, 4294901760
    %v425 = vsub.f32 %v423, %v424
    %v426 = vand.u32 %v425, 4294901760
    %427 = vmatpush.msra.mxu0 %v426
    %v428 = vand.u32 %v367, 4294901760
    %v429 = vsub.f32 %v367, %v428
    %v430 = vand.u32 %v429, 4294901760
    %v431 = vsub.f32 %v429, %v430
    %v432 = vand.u32 %v431, 4294901760
    %433 = vmatpush.msra.mxu0 %v432
    %v434 = vand.u32 %v366, 4294901760
    %v435 = vsub.f32 %v366, %v434
    %v436 = vand.u32 %v435, 4294901760
    %v437 = vsub.f32 %v435, %v436
    %v438 = vand.u32 %v437, 4294901760
    %439 = vmatpush.msra.mxu0 %v438
    %v440 = vand.u32 %v373, 4294901760
    %441 = vmatmul.f32.gmra.mxu0 %v440
    %v442 = vpop.f32.mrf.mxu0
    %v443 = vadd.f32 %v402, %v442
    %444 = vdwg.mxu0
    %445 = vmatpush.msra.mxu0 0.0
    %446 = vmatpush.msra.mxu0 0.0
    %447 = vmatpush.msra.mxu0 0.0
    %448 = vmatpush.msra.mxu0 0.0
    %449 = vmatpush.msra.mxu0 0.0
    %450 = vmatpush.msra.mxu0 0.0
    %451 = vmatpush.msra.mxu0 0.0
    %452 = vmatpush.msra.mxu0 0.0
    %453 = vmatpush.msra.mxu0 0.0
    %454 = vmatpush.msra.mxu0 0.0
    %455 = vmatpush.msra.mxu0 0.0
    %456 = vmatpush.msra.mxu0 0.0
    %v457 = vand.u32 %v369, 4294901760
    %v458 = vsub.f32 %v369, %v457
    %459 = vmatpush.msra.mxu0 %v458
    %v460 = vand.u32 %v368, 4294901760
    %v461 = vsub.f32 %v368, %v460
    %462 = vmatpush.msra.mxu0 %v461
    %v463 = vand.u32 %v367, 4294901760
    %v464 = vsub.f32 %v367, %v463
    %465 = vmatpush.msra.mxu0 %v464
    %v466 = vand.u32 %v366, 4294901760
    %v467 = vsub.f32 %v366, %v466
    %468 = vmatpush.msra.mxu0 %v467
    %v469 = vand.u32 %v373, 4294901760
    %v470 = vsub.f32 %v373, %v469
    %471 = vmatmul.f32.gmra.mxu0 %v470
    %v472 = vpop.f32.mrf.mxu0
    %v473 = vadd.f32 %v443, %v472
    %474 = vdwg.mxu0
    %475 = vmatpush.msra.mxu0 0.0
    %476 = vmatpush.msra.mxu0 0.0
    %477 = vmatpush.msra.mxu0 0.0
    %478 = vmatpush.msra.mxu0 0.0
    %479 = vmatpush.msra.mxu0 0.0
    %480 = vmatpush.msra.mxu0 0.0
    %481 = vmatpush.msra.mxu0 0.0
    %482 = vmatpush.msra.mxu0 0.0
    %483 = vmatpush.msra.mxu0 0.0
    %484 = vmatpush.msra.mxu0 0.0
    %485 = vmatpush.msra.mxu0 0.0
    %486 = vmatpush.msra.mxu0 0.0
    %v487 = vand.u32 %v369, 4294901760
    %488 = vmatpush.msra.mxu0 %v487
    %v489 = vand.u32 %v368, 4294901760
    %490 = vmatpush.msra.mxu0 %v489
    %v491 = vand.u32 %v367, 4294901760
    %492 = vmatpush.msra.mxu0 %v491
    %v493 = vand.u32 %v366, 4294901760
    %494 = vmatpush.msra.mxu0 %v493
    %v495 = vand.u32 %v373, 4294901760
    %v496 = vsub.f32 %v373, %v495
    %v497 = vand.u32 %v496, 4294901760
    %498 = vmatmul.f32.gmra.mxu0 %v497
    %v499 = vpop.f32.mrf.mxu0
    %v500 = vadd.f32 %v473, %v499
    %501 = vdwg.mxu0
    %502 = vmatpush.msra.mxu0 0.0
    %503 = vmatpush.msra.mxu0 0.0
    %504 = vmatpush.msra.mxu0 0.0
    %505 = vmatpush.msra.mxu0 0.0
    %506 = vmatpush.msra.mxu0 0.0
    %507 = vmatpush.msra.mxu0 0.0
    %508 = vmatpush.msra.mxu0 0.0
    %509 = vmatpush.msra.mxu0 0.0
    %510 = vmatpush.msra.mxu0 0.0
    %511 = vmatpush.msra.mxu0 0.0
    %512 = vmatpush.msra.mxu0 0.0
    %513 = vmatpush.msra.mxu0 0.0
    %v514 = vand.u32 %v369, 4294901760
    %v515 = vsub.f32 %v369, %v514
    %v516 = vand.u32 %v515, 4294901760
    %517 = vmatpush.msra.mxu0 %v516
    %v518 = vand.u32 %v368, 4294901760
    %v519 = vsub.f32 %v368, %v518
    %v520 = vand.u32 %v519, 4294901760
    %521 = vmatpush.msra.mxu0 %v520
    %v522 = vand.u32 %v367, 4294901760
    %v523 = vsub.f32 %v367, %v522
    %v524 = vand.u32 %v523, 4294901760
    %525 = vmatpush.msra.mxu0 %v524
    %v526 = vand.u32 %v366, 4294901760
    %v527 = vsub.f32 %v366, %v526
    %v528 = vand.u32 %v527, 4294901760
    %529 = vmatpush.msra.mxu0 %v528
    %v530 = vand.u32 %v373, 4294901760
    %531 = vmatmul.f32.gmra.mxu0 %v530
    %v532 = vpop.f32.mrf.mxu0
    %v533 = vadd.f32 %v500, %v532
    %534 = vdwg.mxu0
    %535 = vmatpush.msra.mxu0 0.0
    %536 = vmatpush.msra.mxu0 0.0
    %537 = vmatpush.msra.mxu0 0.0
    %538 = vmatpush.msra.mxu0 0.0
    %539 = vmatpush.msra.mxu0 0.0
    %540 = vmatpush.msra.mxu0 0.0
    %541 = vmatpush.msra.mxu0 0.0
    %542 = vmatpush.msra.mxu0 0.0
    %543 = vmatpush.msra.mxu0 0.0
    %544 = vmatpush.msra.mxu0 0.0
    %545 = vmatpush.msra.mxu0 0.0
    %546 = vmatpush.msra.mxu0 0.0
    %v547 = vand.u32 %v369, 4294901760
    %548 = vmatpush.msra.mxu0 %v547
    %v549 = vand.u32 %v368, 4294901760
    %550 = vmatpush.msra.mxu0 %v549
    %v551 = vand.u32 %v367, 4294901760
    %552 = vmatpush.msra.mxu0 %v551
    %v553 = vand.u32 %v366, 4294901760
    %554 = vmatpush.msra.mxu0 %v553
    %v555 = vand.u32 %v373, 4294901760
    %556 = vmatmul.f32.gmra.mxu0 %v555
    %v557 = vpop.f32.mrf.mxu0
    %v558 = vadd.f32 %v533, %v557
    %559 = vdwg.mxu0
    %v560 = vadd.f32 %v370, %v558
    %v561 = vxor.u32 %v560, 2147483648
    %v562 = vmul.f32 %v561, 1.442695
    %v563 = vpow.pop %v562
    %v564 = vadd.f32 %v563, 1.0
    %v565 = vrcp.pop %v564
    %v566 = vmul.f32 %v564, %v565
    %v567 = vsub.f32 1.0, %v566
    %v568 = vmul.f32 %v565, %v567
    %v569 = vadd.f32 %v565, %v568
    %vm570 = vweird.f32 %v564
    %vm571 = vweird.f32 %v565
    %vm572 = vmor %vm570, %vm571
    %v573 = vsel %vm572, %v565, %v569
    %v574 = vand.u32 2147483647, %v564
    %vm575 = vcmp.eq.f32.partialorder %v574, 8.507059e+37
    %v576 = vand.u32 %v564, 2147483648
    %v577 = vor.u32 1.1754944e-38, %v576
    %v578 = vsel %vm575, %v577, %v573
    %v579 = vmul.f32 1.0, %v578
    %v580 = vtanh.pop %v560
    %v581 = vmul.f32 %v579, 0.0
    %583 = vrot.lane.b32.xlu0 %v580, 64
    %v584 = vpop.permute.xlu0 %583
    %v586 = vmul.f32 %v579, %v584
    %588 = vrot.lane.b32.xlu0 %v586, 32
    %v589 = vpop.permute.xlu0 %588
    %v591 = vadd.f32 %v581, %v589
    %v592 = vtanh.pop %v591
    %594 = vrot.lane.b32.xlu0 %v592, 64
    %v595 = vpop.permute.xlu0 %594
    %v597 = vmul.f32 %v579, %v595
    %599 = vrot.lane.b32.xlu0 %v597, 32
    %v600 = vpop.permute.xlu0 %599
    %vm602 = vcmask 253952
    %603 = vst.msk [vmem:[#allocation3] sm:$0x1] %vm602, %v600
    %v604 = vld [vmem:[#allocation2 + $0x1] sm:$0x1]
    %v605 = vsel %vm371, %v600, 0
    %607 = vmatpush.msra.mxu0 0.0
    %608 = vmatpush.msra.mxu0 0.0
    %609 = vmatpush.msra.mxu0 0.0
    %610 = vmatpush.msra.mxu0 0.0
    %611 = vmatpush.msra.mxu0 0.0
    %612 = vmatpush.msra.mxu0 0.0
    %613 = vmatpush.msra.mxu0 0.0
    %614 = vmatpush.msra.mxu0 0.0
    %615 = vmatpush.msra.mxu0 0.0
    %616 = vmatpush.msra.mxu0 0.0
    %617 = vmatpush.msra.mxu0 0.0
    %618 = vmatpush.msra.mxu0 0.0
    %v619 = vand.u32 %v369, 4294901760
    %620 = vmatpush.msra.mxu0 %v619
    %v621 = vand.u32 %v368, 4294901760
    %622 = vmatpush.msra.mxu0 %v621
    %v623 = vand.u32 %v367, 4294901760
    %624 = vmatpush.msra.mxu0 %v623
    %v625 = vand.u32 %v366, 4294901760
    %626 = vmatpush.msra.mxu0 %v625
    %v627 = vand.u32 %v605, 4294901760
    %v628 = vsub.f32 %v605, %v627
    %v629 = vand.u32 %v628, 4294901760
    %v630 = vsub.f32 %v628, %v629
    %v631 = vand.u32 %v630, 4294901760
    %632 = vmatmul.f32.gmra.mxu0 %v631
    %v633 = vpop.f32.mrf.mxu0
    %v634 = vadd.f32 0.0, %v633
    %635 = vdwg.mxu0
    %636 = vmatpush.msra.mxu0 0.0
    %637 = vmatpush.msra.mxu0 0.0
    %638 = vmatpush.msra.mxu0 0.0
    %639 = vmatpush.msra.mxu0 0.0
    %640 = vmatpush.msra.mxu0 0.0
    %641 = vmatpush.msra.mxu0 0.0
    %642 = vmatpush.msra.mxu0 0.0
    %643 = vmatpush.msra.mxu0 0.0
    %644 = vmatpush.msra.mxu0 0.0
    %645 = vmatpush.msra.mxu0 0.0
    %646 = vmatpush.msra.mxu0 0.0
    %647 = vmatpush.msra.mxu0 0.0
    %v648 = vand.u32 %v369, 4294901760
    %v649 = vsub.f32 %v369, %v648
    %v650 = vand.u32 %v649, 4294901760
    %v651 = vsub.f32 %v649, %v650
    %v652 = vand.u32 %v651, 4294901760
    %653 = vmatpush.msra.mxu0 %v652
    %v654 = vand.u32 %v368, 4294901760
    %v655 = vsub.f32 %v368, %v654
    %v656 = vand.u32 %v655, 4294901760
    %v657 = vsub.f32 %v655, %v656
    %v658 = vand.u32 %v657, 4294901760
    %659 = vmatpush.msra.mxu0 %v658
    %v660 = vand.u32 %v367, 4294901760
    %v661 = vsub.f32 %v367, %v660
    %v662 = vand.u32 %v661, 4294901760
    %v663 = vsub.f32 %v661, %v662
    %v664 = vand.u32 %v663, 4294901760
    %665 = vmatpush.msra.mxu0 %v664
    %v666 = vand.u32 %v366, 4294901760
    %v667 = vsub.f32 %v366, %v666
    %v668 = vand.u32 %v667, 4294901760
    %v669 = vsub.f32 %v667, %v668
    %v670 = vand.u32 %v669, 4294901760
    %671 = vmatpush.msra.mxu0 %v670
    %v672 = vand.u32 %v605, 4294901760
    %673 = vmatmul.f32.gmra.mxu0 %v672
    %v674 = vpop.f32.mrf.mxu0
    %v675 = vadd.f32 %v634, %v674
    %676 = vdwg.mxu0
    %677 = vmatpush.msra.mxu0 0.0
    %678 = vmatpush.msra.mxu0 0.0
    %679 = vmatpush.msra.mxu0 0.0
    %680 = vmatpush.msra.mxu0 0.0
    %681 = vmatpush.msra.mxu0 0.0
    %682 = vmatpush.msra.mxu0 0.0
    %683 = vmatpush.msra.mxu0 0.0
    %684 = vmatpush.msra.mxu0 0.0
    %685 = vmatpush.msra.mxu0 0.0
    %686 = vmatpush.msra.mxu0 0.0
    %687 = vmatpush.msra.mxu0 0.0
    %688 = vmatpush.msra.mxu0 0.0
    %v689 = vand.u32 %v369, 4294901760
    %v690 = vsub.f32 %v369, %v689
    %691 = vmatpush.msra.mxu0 %v690
    %v692 = vand.u32 %v368, 4294901760
    %v693 = vsub.f32 %v368, %v692
    %694 = vmatpush.msra.mxu0 %v693
    %v695 = vand.u32 %v367, 4294901760
    %v696 = vsub.f32 %v367, %v695
    %697 = vmatpush.msra.mxu0 %v696
    %v698 = vand.u32 %v366, 4294901760
    %v699 = vsub.f32 %v366, %v698
    %700 = vmatpush.msra.mxu0 %v699
    %v701 = vand.u32 %v605, 4294901760
    %v702 = vsub.f32 %v605, %v701
    %703 = vmatmul.f32.gmra.mxu0 %v702
    %v704 = vpop.f32.mrf.mxu0
    %v705 = vadd.f32 %v675, %v704
    %706 = vdwg.mxu0
    %707 = vmatpush.msra.mxu0 0.0
    %708 = vmatpush.msra.mxu0 0.0
    %709 = vmatpush.msra.mxu0 0.0
    %710 = vmatpush.msra.mxu0 0.0
    %711 = vmatpush.msra.mxu0 0.0
    %712 = vmatpush.msra.mxu0 0.0
    %713 = vmatpush.msra.mxu0 0.0
    %714 = vmatpush.msra.mxu0 0.0
    %715 = vmatpush.msra.mxu0 0.0
    %716 = vmatpush.msra.mxu0 0.0
    %717 = vmatpush.msra.mxu0 0.0
    %718 = vmatpush.msra.mxu0 0.0
    %v719 = vand.u32 %v369, 4294901760
    %720 = vmatpush.msra.mxu0 %v719
    %v721 = vand.u32 %v368, 4294901760
    %722 = vmatpush.msra.mxu0 %v721
    %v723 = vand.u32 %v367, 4294901760
    %724 = vmatpush.msra.mxu0 %v723
    %v725 = vand.u32 %v366, 4294901760
    %726 = vmatpush.msra.mxu0 %v725
    %v727 = vand.u32 %v605, 4294901760
    %v728 = vsub.f32 %v605, %v727
    %v729 = vand.u32 %v728, 4294901760
    %730 = vmatmul.f32.gmra.mxu0 %v729
    %v731 = vpop.f32.mrf.mxu0
    %v732 = vadd.f32 %v705, %v731
    %733 = vdwg.mxu0
    %734 = vmatpush.msra.mxu0 0.0
    %735 = vmatpush.msra.mxu0 0.0
    %736 = vmatpush.msra.mxu0 0.0
    %737 = vmatpush.msra.mxu0 0.0
    %738 = vmatpush.msra.mxu0 0.0
    %739 = vmatpush.msra.mxu0 0.0
    %740 = vmatpush.msra.mxu0 0.0
    %741 = vmatpush.msra.mxu0 0.0
    %742 = vmatpush.msra.mxu0 0.0
    %743 = vmatpush.msra.mxu0 0.0
    %744 = vmatpush.msra.mxu0 0.0
    %745 = vmatpush.msra.mxu0 0.0
    %v746 = vand.u32 %v369, 4294901760
    %v747 = vsub.f32 %v369, %v746
    %v748 = vand.u32 %v747, 4294901760
    %749 = vmatpush.msra.mxu0 %v748
    %v750 = vand.u32 %v368, 4294901760
    %v751 = vsub.f32 %v368, %v750
    %v752 = vand.u32 %v751, 4294901760
    %753 = vmatpush.msra.mxu0 %v752
    %v754 = vand.u32 %v367, 4294901760
    %v755 = vsub.f32 %v367, %v754
    %v756 = vand.u32 %v755, 4294901760
    %757 = vmatpush.msra.mxu0 %v756
    %v758 = vand.u32 %v366, 4294901760
    %v759 = vsub.f32 %v366, %v758
    %v760 = vand.u32 %v759, 4294901760
    %761 = vmatpush.msra.mxu0 %v760
    %v762 = vand.u32 %v605, 4294901760
    %763 = vmatmul.f32.gmra.mxu0 %v762
    %v764 = vpop.f32.mrf.mxu0
    %v765 = vadd.f32 %v732, %v764
    %766 = vdwg.mxu0
    %767 = vmatpush.msra.mxu0 0.0
    %768 = vmatpush.msra.mxu0 0.0
    %769 = vmatpush.msra.mxu0 0.0
    %770 = vmatpush.msra.mxu0 0.0
    %771 = vmatpush.msra.mxu0 0.0
    %772 = vmatpush.msra.mxu0 0.0
    %773 = vmatpush.msra.mxu0 0.0
    %774 = vmatpush.msra.mxu0 0.0
    %775 = vmatpush.msra.mxu0 0.0
    %776 = vmatpush.msra.mxu0 0.0
    %777 = vmatpush.msra.mxu0 0.0
    %778 = vmatpush.msra.mxu0 0.0
    %v779 = vand.u32 %v369, 4294901760
    %780 = vmatpush.msra.mxu0 %v779
    %v781 = vand.u32 %v368, 4294901760
    %782 = vmatpush.msra.mxu0 %v781
    %v783 = vand.u32 %v367, 4294901760
    %784 = vmatpush.msra.mxu0 %v783
    %v785 = vand.u32 %v366, 4294901760
    %786 = vmatpush.msra.mxu0 %v785
    %v787 = vand.u32 %v605, 4294901760
    %788 = vmatmul.f32.gmra.mxu0 %v787
    %v789 = vpop.f32.mrf.mxu0
    %v790 = vadd.f32 %v765, %v789
    %791 = vdwg.mxu0
    %v792 = vadd.f32 %v604, %v790
    %v793 = vxor.u32 %v792, 2147483648
    %v794 = vmul.f32 %v793, 1.442695
    %v795 = vpow.pop %v794
    %v796 = vadd.f32 %v795, 1.0
    %v797 = vrcp.pop %v796
    %v798 = vmul.f32 %v796, %v797
    %v799 = vsub.f32 1.0, %v798
    %v800 = vmul.f32 %v797, %v799
    %v801 = vadd.f32 %v797, %v800
    %vm802 = vweird.f32 %v796
    %vm803 = vweird.f32 %v797
    %vm804 = vmor %vm802, %vm803
    %v805 = vsel %vm804, %v797, %v801
    %v806 = vand.u32 2147483647, %v796
    %vm807 = vcmp.eq.f32.partialorder %v806, 8.507059e+37
    %v808 = vand.u32 %v796, 2147483648
    %v809 = vor.u32 1.1754944e-38, %v808
    %v810 = vsel %vm807, %v809, %v805
    %v811 = vmul.f32 1.0, %v810
    %v812 = vtanh.pop %v792
    %v813 = vmul.f32 %v811, %v591
    %815 = vrot.lane.b32.xlu0 %v812, 64
    %v816 = vpop.permute.xlu0 %815
    %v818 = vmul.f32 %v811, %v816
    %820 = vrot.lane.b32.xlu0 %v818, 32
    %v821 = vpop.permute.xlu0 %820
    %v823 = vadd.f32 %v813, %v821
    %v824 = vtanh.pop %v823
    %826 = vrot.lane.b32.xlu0 %v824, 64
    %v827 = vpop.permute.xlu0 %826
    %v829 = vmul.f32 %v811, %v827
    %831 = vrot.lane.b32.xlu0 %v829, 32
    %v832 = vpop.permute.xlu0 %831
    %834 = vst.msk [vmem:[#allocation3 + $0x1] sm:$0x1] %vm602, %v832
    %v835 = vld [vmem:[#allocation2 + $0x2] sm:$0x1]
    %v836 = vsel %vm371, %v832, 0
    %838 = vmatpush.msra.mxu0 0.0
    %839 = vmatpush.msra.mxu0 0.0
    %840 = vmatpush.msra.mxu0 0.0
    %841 = vmatpush.msra.mxu0 0.0
    %842 = vmatpush.msra.mxu0 0.0
    %843 = vmatpush.msra.mxu0 0.0
    %844 = vmatpush.msra.mxu0 0.0
    %845 = vmatpush.msra.mxu0 0.0
    %846 = vmatpush.msra.mxu0 0.0
    %847 = vmatpush.msra.mxu0 0.0
    %848 = vmatpush.msra.mxu0 0.0
    %849 = vmatpush.msra.mxu0 0.0
    %v850 = vand.u32 %v369, 4294901760
    %851 = vmatpush.msra.mxu0 %v850
    %v852 = vand.u32 %v368, 4294901760
    %853 = vmatpush.msra.mxu0 %v852
    %v854 = vand.u32 %v367, 4294901760
    %855 = vmatpush.msra.mxu0 %v854
    %v856 = vand.u32 %v366, 4294901760
    %857 = vmatpush.msra.mxu0 %v856
    %v858 = vand.u32 %v836, 4294901760
    %v859 = vsub.f32 %v836, %v858
    %v860 = vand.u32 %v859, 4294901760
    %v861 = vsub.f32 %v859, %v860
    %v862 = vand.u32 %v861, 4294901760
    %863 = vmatmul.f32.gmra.mxu0 %v862
    %v864 = vpop.f32.mrf.mxu0
    %v865 = vadd.f32 0.0, %v864
    %866 = vdwg.mxu0
    %867 = vmatpush.msra.mxu0 0.0
    %868 = vmatpush.msra.mxu0 0.0
    %869 = vmatpush.msra.mxu0 0.0
    %870 = vmatpush.msra.mxu0 0.0
    %871 = vmatpush.msra.mxu0 0.0
    %872 = vmatpush.msra.mxu0 0.0
    %873 = vmatpush.msra.mxu0 0.0
    %874 = vmatpush.msra.mxu0 0.0
    %875 = vmatpush.msra.mxu0 0.0
    %876 = vmatpush.msra.mxu0 0.0
    %877 = vmatpush.msra.mxu0 0.0
    %878 = vmatpush.msra.mxu0 0.0
    %v879 = vand.u32 %v369, 4294901760
    %v880 = vsub.f32 %v369, %v879
    %v881 = vand.u32 %v880, 4294901760
    %v882 = vsub.f32 %v880, %v881
    %v883 = vand.u32 %v882, 4294901760
    %884 = vmatpush.msra.mxu0 %v883
    %v885 = vand.u32 %v368, 4294901760
    %v886 = vsub.f32 %v368, %v885
    %v887 = vand.u32 %v886, 4294901760
    %v888 = vsub.f32 %v886, %v887
    %v889 = vand.u32 %v888, 4294901760
    %890 = vmatpush.msra.mxu0 %v889
    %v891 = vand.u32 %v367, 4294901760
    %v892 = vsub.f32 %v367, %v891
    %v893 = vand.u32 %v892, 4294901760
    %v894 = vsub.f32 %v892, %v893
    %v895 = vand.u32 %v894, 4294901760
    %896 = vmatpush.msra.mxu0 %v895
    %v897 = vand.u32 %v366, 4294901760
    %v898 = vsub.f32 %v366, %v897
    %v899 = vand.u32 %v898, 4294901760
    %v900 = vsub.f32 %v898, %v899
    %v901 = vand.u32 %v900, 4294901760
    %902 = vmatpush.msra.mxu0 %v901
    %v903 = vand.u32 %v836, 4294901760
    %904 = vmatmul.f32.gmra.mxu0 %v903
    %v905 = vpop.f32.mrf.mxu0
    %v906 = vadd.f32 %v865, %v905
    %907 = vdwg.mxu0
    %908 = vmatpush.msra.mxu0 0.0
    %909 = vmatpush.msra.mxu0 0.0
    %910 = vmatpush.msra.mxu0 0.0
    %911 = vmatpush.msra.mxu0 0.0
    %912 = vmatpush.msra.mxu0 0.0
    %913 = vmatpush.msra.mxu0 0.0
    %914 = vmatpush.msra.mxu0 0.0
    %915 = vmatpush.msra.mxu0 0.0
    %916 = vmatpush.msra.mxu0 0.0
    %917 = vmatpush.msra.mxu0 0.0
    %918 = vmatpush.msra.mxu0 0.0
    %919 = vmatpush.msra.mxu0 0.0
    %v920 = vand.u32 %v369, 4294901760
    %v921 = vsub.f32 %v369, %v920
    %922 = vmatpush.msra.mxu0 %v921
    %v923 = vand.u32 %v368, 4294901760
    %v924 = vsub.f32 %v368, %v923
    %925 = vmatpush.msra.mxu0 %v924
    %v926 = vand.u32 %v367, 4294901760
    %v927 = vsub.f32 %v367, %v926
    %928 = vmatpush.msra.mxu0 %v927
    %v929 = vand.u32 %v366, 4294901760
    %v930 = vsub.f32 %v366, %v929
    %931 = vmatpush.msra.mxu0 %v930
    %v932 = vand.u32 %v836, 4294901760
    %v933 = vsub.f32 %v836, %v932
    %934 = vmatmul.f32.gmra.mxu0 %v933
    %v935 = vpop.f32.mrf.mxu0
    %v936 = vadd.f32 %v906, %v935
    %937 = vdwg.mxu0
    %938 = vmatpush.msra.mxu0 0.0
    %939 = vmatpush.msra.mxu0 0.0
    %940 = vmatpush.msra.mxu0 0.0
    %941 = vmatpush.msra.mxu0 0.0
    %942 = vmatpush.msra.mxu0 0.0
    %943 = vmatpush.msra.mxu0 0.0
    %944 = vmatpush.msra.mxu0 0.0
    %945 = vmatpush.msra.mxu0 0.0
    %946 = vmatpush.msra.mxu0 0.0
    %947 = vmatpush.msra.mxu0 0.0
    %948 = vmatpush.msra.mxu0 0.0
    %949 = vmatpush.msra.mxu0 0.0
    %v950 = vand.u32 %v369, 4294901760
    %951 = vmatpush.msra.mxu0 %v950
    %v952 = vand.u32 %v368, 4294901760
    %953 = vmatpush.msra.mxu0 %v952
    %v954 = vand.u32 %v367, 4294901760
    %955 = vmatpush.msra.mxu0 %v954
    %v956 = vand.u32 %v366, 4294901760
    %957 = vmatpush.msra.mxu0 %v956
    %v958 = vand.u32 %v836, 4294901760
    %v959 = vsub.f32 %v836, %v958
    %v960 = vand.u32 %v959, 4294901760
    %961 = vmatmul.f32.gmra.mxu0 %v960
    %v962 = vpop.f32.mrf.mxu0
    %v963 = vadd.f32 %v936, %v962
    %964 = vdwg.mxu0
    %965 = vmatpush.msra.mxu0 0.0
    %966 = vmatpush.msra.mxu0 0.0
    %967 = vmatpush.msra.mxu0 0.0
    %968 = vmatpush.msra.mxu0 0.0
    %969 = vmatpush.msra.mxu0 0.0
    %970 = vmatpush.msra.mxu0 0.0
    %971 = vmatpush.msra.mxu0 0.0
    %972 = vmatpush.msra.mxu0 0.0
    %973 = vmatpush.msra.mxu0 0.0
    %974 = vmatpush.msra.mxu0 0.0
    %975 = vmatpush.msra.mxu0 0.0
    %976 = vmatpush.msra.mxu0 0.0
    %v977 = vand.u32 %v369, 4294901760
    %v978 = vsub.f32 %v369, %v977
    %v979 = vand.u32 %v978, 4294901760
    %980 = vmatpush.msra.mxu0 %v979
    %v981 = vand.u32 %v368, 4294901760
    %v982 = vsub.f32 %v368, %v981
    %v983 = vand.u32 %v982, 4294901760
    %984 = vmatpush.msra.mxu0 %v983
    %v985 = vand.u32 %v367, 4294901760
    %v986 = vsub.f32 %v367, %v985
    %v987 = vand.u32 %v986, 4294901760
    %988 = vmatpush.msra.mxu0 %v987
    %v989 = vand.u32 %v366, 4294901760
    %v990 = vsub.f32 %v366, %v989
    %v991 = vand.u32 %v990, 4294901760
    %992 = vmatpush.msra.mxu0 %v991
    %v993 = vand.u32 %v836, 4294901760
    %994 = vmatmul.f32.gmra.mxu0 %v993
    %v995 = vpop.f32.mrf.mxu0
    %v996 = vadd.f32 %v963, %v995
    %997 = vdwg.mxu0
    %998 = vmatpush.msra.mxu0 0.0
    %999 = vmatpush.msra.mxu0 0.0
    %1000 = vmatpush.msra.mxu0 0.0
    %1001 = vmatpush.msra.mxu0 0.0
    %1002 = vmatpush.msra.mxu0 0.0
    %1003 = vmatpush.msra.mxu0 0.0
    %1004 = vmatpush.msra.mxu0 0.0
    %1005 = vmatpush.msra.mxu0 0.0
    %1006 = vmatpush.msra.mxu0 0.0
    %1007 = vmatpush.msra.mxu0 0.0
    %1008 = vmatpush.msra.mxu0 0.0
    %1009 = vmatpush.msra.mxu0 0.0
    %v1010 = vand.u32 %v369, 4294901760
    %1011 = vmatpush.msra.mxu0 %v1010
    %v1012 = vand.u32 %v368, 4294901760
    %1013 = vmatpush.msra.mxu0 %v1012
    %v1014 = vand.u32 %v367, 4294901760
    %1015 = vmatpush.msra.mxu0 %v1014
    %v1016 = vand.u32 %v366, 4294901760
    %1017 = vmatpush.msra.mxu0 %v1016
    %v1018 = vand.u32 %v836, 4294901760
    %1019 = vmatmul.f32.gmra.mxu0 %v1018
    %v1020 = vpop.f32.mrf.mxu0
    %v1021 = vadd.f32 %v996, %v1020
    %1022 = vdwg.mxu0
    %v1023 = vadd.f32 %v835, %v1021
    %v1024 = vxor.u32 %v1023, 2147483648
    %v1025 = vmul.f32 %v1024, 1.442695
    %v1026 = vpow.pop %v1025
    %v1027 = vadd.f32 %v1026, 1.0
    %v1028 = vrcp.pop %v1027
    %v1029 = vmul.f32 %v1027, %v1028
    %v1030 = vsub.f32 1.0, %v1029
    %v1031 = vmul.f32 %v1028, %v1030
    %v1032 = vadd.f32 %v1028, %v1031
    %vm1033 = vweird.f32 %v1027
    %vm1034 = vweird.f32 %v1028
    %vm1035 = vmor %vm1033, %vm1034
    %v1036 = vsel %vm1035, %v1028, %v1032
    %v1037 = vand.u32 2147483647, %v1027
    %vm1038 = vcmp.eq.f32.partialorder %v1037, 8.507059e+37
    %v1039 = vand.u32 %v1027, 2147483648
    %v1040 = vor.u32 1.1754944e-38, %v1039
    %v1041 = vsel %vm1038, %v1040, %v1036
    %v1042 = vmul.f32 1.0, %v1041
    %v1043 = vtanh.pop %v1023
    %v1044 = vmul.f32 %v1042, %v823
    %1046 = vrot.lane.b32.xlu0 %v1043, 64
    %v1047 = vpop.permute.xlu0 %1046
    %v1049 = vmul.f32 %v1042, %v1047
    %1051 = vrot.lane.b32.xlu0 %v1049, 32
    %v1052 = vpop.permute.xlu0 %1051
    %v1054 = vadd.f32 %v1044, %v1052
    %v1055 = vtanh.pop %v1054
    %1057 = vrot.lane.b32.xlu0 %v1055, 64
    %v1058 = vpop.permute.xlu0 %1057
    %v1060 = vmul.f32 %v1042, %v1058
    %1062 = vrot.lane.b32.xlu0 %v1060, 32
    %v1063 = vpop.permute.xlu0 %1062
    %1065 = vst.msk [vmem:[#allocation3 + $0x2] sm:$0x1] %vm602, %v1063
    %v1066 = vld [vmem:[#allocation2 + $0x3] sm:$0x1]
    %v1067 = vsel %vm371, %v1063, 0
    %1069 = vmatpush.msra.mxu0 0.0
    %1070 = vmatpush.msra.mxu0 0.0
    %1071 = vmatpush.msra.mxu0 0.0
    %1072 = vmatpush.msra.mxu0 0.0
    %1073 = vmatpush.msra.mxu0 0.0
    %1074 = vmatpush.msra.mxu0 0.0
    %1075 = vmatpush.msra.mxu0 0.0
    %1076 = vmatpush.msra.mxu0 0.0
    %1077 = vmatpush.msra.mxu0 0.0
    %1078 = vmatpush.msra.mxu0 0.0
    %1079 = vmatpush.msra.mxu0 0.0
    %1080 = vmatpush.msra.mxu0 0.0
    %v1081 = vand.u32 %v369, 4294901760
    %1082 = vmatpush.msra.mxu0 %v1081
    %v1083 = vand.u32 %v368, 4294901760
    %1084 = vmatpush.msra.mxu0 %v1083
    %v1085 = vand.u32 %v367, 4294901760
    %1086 = vmatpush.msra.mxu0 %v1085
    %v1087 = vand.u32 %v366, 4294901760
    %1088 = vmatpush.msra.mxu0 %v1087
    %v1089 = vand.u32 %v1067, 4294901760
    %v1090 = vsub.f32 %v1067, %v1089
    %v1091 = vand.u32 %v1090, 4294901760
    %v1092 = vsub.f32 %v1090, %v1091
    %v1093 = vand.u32 %v1092, 4294901760
    %1094 = vmatmul.f32.gmra.mxu0 %v1093
    %v1095 = vpop.f32.mrf.mxu0
    %v1096 = vadd.f32 0.0, %v1095
    %1097 = vdwg.mxu0
    %1098 = vmatpush.msra.mxu0 0.0
    %1099 = vmatpush.msra.mxu0 0.0
    %1100 = vmatpush.msra.mxu0 0.0
    %1101 = vmatpush.msra.mxu0 0.0
    %1102 = vmatpush.msra.mxu0 0.0
    %1103 = vmatpush.msra.mxu0 0.0
    %1104 = vmatpush.msra.mxu0 0.0
    %1105 = vmatpush.msra.mxu0 0.0
    %1106 = vmatpush.msra.mxu0 0.0
    %1107 = vmatpush.msra.mxu0 0.0
    %1108 = vmatpush.msra.mxu0 0.0
    %1109 = vmatpush.msra.mxu0 0.0
    %v1110 = vand.u32 %v369, 4294901760
    %v1111 = vsub.f32 %v369, %v1110
    %v1112 = vand.u32 %v1111, 4294901760
    %v1113 = vsub.f32 %v1111, %v1112
    %v1114 = vand.u32 %v1113, 4294901760
    %1115 = vmatpush.msra.mxu0 %v1114
    %v1116 = vand.u32 %v368, 4294901760
    %v1117 = vsub.f32 %v368, %v1116
    %v1118 = vand.u32 %v1117, 4294901760
    %v1119 = vsub.f32 %v1117, %v1118
    %v1120 = vand.u32 %v1119, 4294901760
    %1121 = vmatpush.msra.mxu0 %v1120
    %v1122 = vand.u32 %v367, 4294901760
    %v1123 = vsub.f32 %v367, %v1122
    %v1124 = vand.u32 %v1123, 4294901760
    %v1125 = vsub.f32 %v1123, %v1124
    %v1126 = vand.u32 %v1125, 4294901760
    %1127 = vmatpush.msra.mxu0 %v1126
    %v1128 = vand.u32 %v366, 4294901760
    %v1129 = vsub.f32 %v366, %v1128
    %v1130 = vand.u32 %v1129, 4294901760
    %v1131 = vsub.f32 %v1129, %v1130
    %v1132 = vand.u32 %v1131, 4294901760
    %1133 = vmatpush.msra.mxu0 %v1132
    %v1134 = vand.u32 %v1067, 4294901760
    %1135 = vmatmul.f32.gmra.mxu0 %v1134
    %v1136 = vpop.f32.mrf.mxu0
    %v1137 = vadd.f32 %v1096, %v1136
    %1138 = vdwg.mxu0
    %1139 = vmatpush.msra.mxu0 0.0
    %1140 = vmatpush.msra.mxu0 0.0
    %1141 = vmatpush.msra.mxu0 0.0
    %1142 = vmatpush.msra.mxu0 0.0
    %1143 = vmatpush.msra.mxu0 0.0
    %1144 = vmatpush.msra.mxu0 0.0
    %1145 = vmatpush.msra.mxu0 0.0
    %1146 = vmatpush.msra.mxu0 0.0
    %1147 = vmatpush.msra.mxu0 0.0
    %1148 = vmatpush.msra.mxu0 0.0
    %1149 = vmatpush.msra.mxu0 0.0
    %1150 = vmatpush.msra.mxu0 0.0
    %v1151 = vand.u32 %v369, 4294901760
    %v1152 = vsub.f32 %v369, %v1151
    %1153 = vmatpush.msra.mxu0 %v1152
    %v1154 = vand.u32 %v368, 4294901760
    %v1155 = vsub.f32 %v368, %v1154
    %1156 = vmatpush.msra.mxu0 %v1155
    %v1157 = vand.u32 %v367, 4294901760
    %v1158 = vsub.f32 %v367, %v1157
    %1159 = vmatpush.msra.mxu0 %v1158
    %v1160 = vand.u32 %v366, 4294901760
    %v1161 = vsub.f32 %v366, %v1160
    %1162 = vmatpush.msra.mxu0 %v1161
    %v1163 = vand.u32 %v1067, 4294901760
    %v1164 = vsub.f32 %v1067, %v1163
    %1165 = vmatmul.f32.gmra.mxu0 %v1164
    %v1166 = vpop.f32.mrf.mxu0
    %v1167 = vadd.f32 %v1137, %v1166
    %1168 = vdwg.mxu0
    %1169 = vmatpush.msra.mxu0 0.0
    %1170 = vmatpush.msra.mxu0 0.0
    %1171 = vmatpush.msra.mxu0 0.0
    %1172 = vmatpush.msra.mxu0 0.0
    %1173 = vmatpush.msra.mxu0 0.0
    %1174 = vmatpush.msra.mxu0 0.0
    %1175 = vmatpush.msra.mxu0 0.0
    %1176 = vmatpush.msra.mxu0 0.0
    %1177 = vmatpush.msra.mxu0 0.0
    %1178 = vmatpush.msra.mxu0 0.0
    %1179 = vmatpush.msra.mxu0 0.0
    %1180 = vmatpush.msra.mxu0 0.0
    %v1181 = vand.u32 %v369, 4294901760
    %1182 = vmatpush.msra.mxu0 %v1181
    %v1183 = vand.u32 %v368, 4294901760
    %1184 = vmatpush.msra.mxu0 %v1183
    %v1185 = vand.u32 %v367, 4294901760
    %1186 = vmatpush.msra.mxu0 %v1185
    %v1187 = vand.u32 %v366, 4294901760
    %1188 = vmatpush.msra.mxu0 %v1187
    %v1189 = vand.u32 %v1067, 4294901760
    %v1190 = vsub.f32 %v1067, %v1189
    %v1191 = vand.u32 %v1190, 4294901760
    %1192 = vmatmul.f32.gmra.mxu0 %v1191
    %v1193 = vpop.f32.mrf.mxu0
    %v1194 = vadd.f32 %v1167, %v1193
    %1195 = vdwg.mxu0
    %1196 = vmatpush.msra.mxu0 0.0
    %1197 = vmatpush.msra.mxu0 0.0
    %1198 = vmatpush.msra.mxu0 0.0
    %1199 = vmatpush.msra.mxu0 0.0
    %1200 = vmatpush.msra.mxu0 0.0
    %1201 = vmatpush.msra.mxu0 0.0
    %1202 = vmatpush.msra.mxu0 0.0
    %1203 = vmatpush.msra.mxu0 0.0
    %1204 = vmatpush.msra.mxu0 0.0
    %1205 = vmatpush.msra.mxu0 0.0
    %1206 = vmatpush.msra.mxu0 0.0
    %1207 = vmatpush.msra.mxu0 0.0
    %v1208 = vand.u32 %v369, 4294901760
    %v1209 = vsub.f32 %v369, %v1208
    %v1210 = vand.u32 %v1209, 4294901760
    %1211 = vmatpush.msra.mxu0 %v1210
    %v1212 = vand.u32 %v368, 4294901760
    %v1213 = vsub.f32 %v368, %v1212
    %v1214 = vand.u32 %v1213, 4294901760
    %1215 = vmatpush.msra.mxu0 %v1214
    %v1216 = vand.u32 %v367, 4294901760
    %v1217 = vsub.f32 %v367, %v1216
    %v1218 = vand.u32 %v1217, 4294901760
    %1219 = vmatpush.msra.mxu0 %v1218
    %v1220 = vand.u32 %v366, 4294901760
    %v1221 = vsub.f32 %v366, %v1220
    %v1222 = vand.u32 %v1221, 4294901760
    %1223 = vmatpush.msra.mxu0 %v1222
    %v1224 = vand.u32 %v1067, 4294901760
    %1225 = vmatmul.f32.gmra.mxu0 %v1224
    %v1226 = vpop.f32.mrf.mxu0
    %v1227 = vadd.f32 %v1194, %v1226
    %1228 = vdwg.mxu0
    %1229 = vmatpush.msra.mxu0 0.0
    %1230 = vmatpush.msra.mxu0 0.0
    %1231 = vmatpush.msra.mxu0 0.0
    %1232 = vmatpush.msra.mxu0 0.0
    %1233 = vmatpush.msra.mxu0 0.0
    %1234 = vmatpush.msra.mxu0 0.0
    %1235 = vmatpush.msra.mxu0 0.0
    %1236 = vmatpush.msra.mxu0 0.0
    %1237 = vmatpush.msra.mxu0 0.0
    %1238 = vmatpush.msra.mxu0 0.0
    %1239 = vmatpush.msra.mxu0 0.0
    %1240 = vmatpush.msra.mxu0 0.0
    %v1241 = vand.u32 %v369, 4294901760
    %1242 = vmatpush.msra.mxu0 %v1241
    %v1243 = vand.u32 %v368, 4294901760
    %1244 = vmatpush.msra.mxu0 %v1243
    %v1245 = vand.u32 %v367, 4294901760
    %1246 = vmatpush.msra.mxu0 %v1245
    %v1247 = vand.u32 %v366, 4294901760
    %1248 = vmatpush.msra.mxu0 %v1247
    %v1249 = vand.u32 %v1067, 4294901760
    %1250 = vmatmul.f32.gmra.mxu0 %v1249
    %v1251 = vpop.f32.mrf.mxu0
    %v1252 = vadd.f32 %v1227, %v1251
    %1253 = vdwg.mxu0
    %v1254 = vadd.f32 %v1066, %v1252
    %v1255 = vxor.u32 %v1254, 2147483648
    %v1256 = vmul.f32 %v1255, 1.442695
    %v1257 = vpow.pop %v1256
    %v1258 = vadd.f32 %v1257, 1.0
    %v1259 = vrcp.pop %v1258
    %v1260 = vmul.f32 %v1258, %v1259
    %v1261 = vsub.f32 1.0, %v1260
    %v1262 = vmul.f32 %v1259, %v1261
    %v1263 = vadd.f32 %v1259, %v1262
    %vm1264 = vweird.f32 %v1258
    %vm1265 = vweird.f32 %v1259
    %vm1266 = vmor %vm1264, %vm1265
    %v1267 = vsel %vm1266, %v1259, %v1263
    %v1268 = vand.u32 2147483647, %v1258
    %vm1269 = vcmp.eq.f32.partialorder %v1268, 8.507059e+37
    %v1270 = vand.u32 %v1258, 2147483648
    %v1271 = vor.u32 1.1754944e-38, %v1270
    %v1272 = vsel %vm1269, %v1271, %v1267
    %v1273 = vmul.f32 1.0, %v1272
    %v1274 = vtanh.pop %v1254
    %v1275 = vmul.f32 %v1273, %v1054
    %1277 = vrot.lane.b32.xlu0 %v1274, 64
    %v1278 = vpop.permute.xlu0 %1277
    %v1280 = vmul.f32 %v1273, %v1278
    %1282 = vrot.lane.b32.xlu0 %v1280, 32
    %v1283 = vpop.permute.xlu0 %1282
    %v1285 = vadd.f32 %v1275, %v1283
    %v1286 = vtanh.pop %v1285
    %1288 = vrot.lane.b32.xlu0 %v1286, 64
    %v1289 = vpop.permute.xlu0 %1288
    %v1291 = vmul.f32 %v1273, %v1289
    %1293 = vrot.lane.b32.xlu0 %v1291, 32
    %v1294 = vpop.permute.xlu0 %1293
    %1296 = vst.msk [vmem:[#allocation3 + $0x3] sm:$0x1] %vm602, %v1294
    %v1297 = vld [vmem:[#allocation2 + $0x4] sm:$0x1]
    %v1298 = vsel %vm371, %v1294, 0
    %1300 = vmatpush.msra.mxu0 0.0
    %1301 = vmatpush.msra.mxu0 0.0
    %1302 = vmatpush.msra.mxu0 0.0
    %1303 = vmatpush.msra.mxu0 0.0
    %1304 = vmatpush.msra.mxu0 0.0
    %1305 = vmatpush.msra.mxu0 0.0
    %1306 = vmatpush.msra.mxu0 0.0
    %1307 = vmatpush.msra.mxu0 0.0
    %1308 = vmatpush.msra.mxu0 0.0
    %1309 = vmatpush.msra.mxu0 0.0
    %1310 = vmatpush.msra.mxu0 0.0
    %1311 = vmatpush.msra.mxu0 0.0
    %v1312 = vand.u32 %v369, 4294901760
    %1313 = vmatpush.msra.mxu0 %v1312
    %v1314 = vand.u32 %v368, 4294901760
    %1315 = vmatpush.msra.mxu0 %v1314
    %v1316 = vand.u32 %v367, 4294901760
    %1317 = vmatpush.msra.mxu0 %v1316
    %v1318 = vand.u32 %v366, 4294901760
    %1319 = vmatpush.msra.mxu0 %v1318
    %v1320 = vand.u32 %v1298, 4294901760
    %v1321 = vsub.f32 %v1298, %v1320
    %v1322 = vand.u32 %v1321, 4294901760
    %v1323 = vsub.f32 %v1321, %v1322
    %v1324 = vand.u32 %v1323, 4294901760
    %1325 = vmatmul.f32.gmra.mxu0 %v1324
    %v1326 = vpop.f32.mrf.mxu0
    %v1327 = vadd.f32 0.0, %v1326
    %1328 = vdwg.mxu0
    %1329 = vmatpush.msra.mxu0 0.0
    %1330 = vmatpush.msra.mxu0 0.0
    %1331 = vmatpush.msra.mxu0 0.0
    %1332 = vmatpush.msra.mxu0 0.0
    %1333 = vmatpush.msra.mxu0 0.0
    %1334 = vmatpush.msra.mxu0 0.0
    %1335 = vmatpush.msra.mxu0 0.0
    %1336 = vmatpush.msra.mxu0 0.0
    %1337 = vmatpush.msra.mxu0 0.0
    %1338 = vmatpush.msra.mxu0 0.0
    %1339 = vmatpush.msra.mxu0 0.0
    %1340 = vmatpush.msra.mxu0 0.0
    %v1341 = vand.u32 %v369, 4294901760
    %v1342 = vsub.f32 %v369, %v1341
    %v1343 = vand.u32 %v1342, 4294901760
    %v1344 = vsub.f32 %v1342, %v1343
    %v1345 = vand.u32 %v1344, 4294901760
    %1346 = vmatpush.msra.mxu0 %v1345
    %v1347 = vand.u32 %v368, 4294901760
    %v1348 = vsub.f32 %v368, %v1347
    %v1349 = vand.u32 %v1348, 4294901760
    %v1350 = vsub.f32 %v1348, %v1349
    %v1351 = vand.u32 %v1350, 4294901760
    %1352 = vmatpush.msra.mxu0 %v1351
    %v1353 = vand.u32 %v367, 4294901760
    %v1354 = vsub.f32 %v367, %v1353
    %v1355 = vand.u32 %v1354, 4294901760
    %v1356 = vsub.f32 %v1354, %v1355
    %v1357 = vand.u32 %v1356, 4294901760
    %1358 = vmatpush.msra.mxu0 %v1357
    %v1359 = vand.u32 %v366, 4294901760
    %v1360 = vsub.f32 %v366, %v1359
    %v1361 = vand.u32 %v1360, 4294901760
    %v1362 = vsub.f32 %v1360, %v1361
    %v1363 = vand.u32 %v1362, 4294901760
    %1364 = vmatpush.msra.mxu0 %v1363
    %v1365 = vand.u32 %v1298, 4294901760
    %1366 = vmatmul.f32.gmra.mxu0 %v1365
    %v1367 = vpop.f32.mrf.mxu0
    %v1368 = vadd.f32 %v1327, %v1367
    %1369 = vdwg.mxu0
    %1370 = vmatpush.msra.mxu0 0.0
    %1371 = vmatpush.msra.mxu0 0.0
    %1372 = vmatpush.msra.mxu0 0.0
    %1373 = vmatpush.msra.mxu0 0.0
    %1374 = vmatpush.msra.mxu0 0.0
    %1375 = vmatpush.msra.mxu0 0.0
    %1376 = vmatpush.msra.mxu0 0.0
    %1377 = vmatpush.msra.mxu0 0.0
    %1378 = vmatpush.msra.mxu0 0.0
    %1379 = vmatpush.msra.mxu0 0.0
    %1380 = vmatpush.msra.mxu0 0.0
    %1381 = vmatpush.msra.mxu0 0.0
    %v1382 = vand.u32 %v369, 4294901760
    %v1383 = vsub.f32 %v369, %v1382
    %1384 = vmatpush.msra.mxu0 %v1383
    %v1385 = vand.u32 %v368, 4294901760
    %v1386 = vsub.f32 %v368, %v1385
    %1387 = vmatpush.msra.mxu0 %v1386
    %v1388 = vand.u32 %v367, 4294901760
    %v1389 = vsub.f32 %v367, %v1388
    %1390 = vmatpush.msra.mxu0 %v1389
    %v1391 = vand.u32 %v366, 4294901760
    %v1392 = vsub.f32 %v366, %v1391
    %1393 = vmatpush.msra.mxu0 %v1392
    %v1394 = vand.u32 %v1298, 4294901760
    %v1395 = vsub.f32 %v1298, %v1394
    %1396 = vmatmul.f32.gmra.mxu0 %v1395
    %v1397 = vpop.f32.mrf.mxu0
    %v1398 = vadd.f32 %v1368, %v1397
    %1399 = vdwg.mxu0
    %1400 = vmatpush.msra.mxu0 0.0
    %1401 = vmatpush.msra.mxu0 0.0
    %1402 = vmatpush.msra.mxu0 0.0
    %1403 = vmatpush.msra.mxu0 0.0
    %1404 = vmatpush.msra.mxu0 0.0
    %1405 = vmatpush.msra.mxu0 0.0
    %1406 = vmatpush.msra.mxu0 0.0
    %1407 = vmatpush.msra.mxu0 0.0
    %1408 = vmatpush.msra.mxu0 0.0
    %1409 = vmatpush.msra.mxu0 0.0
    %1410 = vmatpush.msra.mxu0 0.0
    %1411 = vmatpush.msra.mxu0 0.0
    %v1412 = vand.u32 %v369, 4294901760
    %1413 = vmatpush.msra.mxu0 %v1412
    %v1414 = vand.u32 %v368, 4294901760
    %1415 = vmatpush.msra.mxu0 %v1414
    %v1416 = vand.u32 %v367, 4294901760
    %1417 = vmatpush.msra.mxu0 %v1416
    %v1418 = vand.u32 %v366, 4294901760
    %1419 = vmatpush.msra.mxu0 %v1418
    %v1420 = vand.u32 %v1298, 4294901760
    %v1421 = vsub.f32 %v1298, %v1420
    %v1422 = vand.u32 %v1421, 4294901760
    %1423 = vmatmul.f32.gmra.mxu0 %v1422
    %v1424 = vpop.f32.mrf.mxu0
    %v1425 = vadd.f32 %v1398, %v1424
    %1426 = vdwg.mxu0
    %1427 = vmatpush.msra.mxu0 0.0
    %1428 = vmatpush.msra.mxu0 0.0
    %1429 = vmatpush.msra.mxu0 0.0
    %1430 = vmatpush.msra.mxu0 0.0
    %1431 = vmatpush.msra.mxu0 0.0
    %1432 = vmatpush.msra.mxu0 0.0
    %1433 = vmatpush.msra.mxu0 0.0
    %1434 = vmatpush.msra.mxu0 0.0
    %1435 = vmatpush.msra.mxu0 0.0
    %1436 = vmatpush.msra.mxu0 0.0
    %1437 = vmatpush.msra.mxu0 0.0
    %1438 = vmatpush.msra.mxu0 0.0
    %v1439 = vand.u32 %v369, 4294901760
    %v1440 = vsub.f32 %v369, %v1439
    %v1441 = vand.u32 %v1440, 4294901760
    %1442 = vmatpush.msra.mxu0 %v1441
    %v1443 = vand.u32 %v368, 4294901760
    %v1444 = vsub.f32 %v368, %v1443
    %v1445 = vand.u32 %v1444, 4294901760
    %1446 = vmatpush.msra.mxu0 %v1445
    %v1447 = vand.u32 %v367, 4294901760
    %v1448 = vsub.f32 %v367, %v1447
    %v1449 = vand.u32 %v1448, 4294901760
    %1450 = vmatpush.msra.mxu0 %v1449
    %v1451 = vand.u32 %v366, 4294901760
    %v1452 = vsub.f32 %v366, %v1451
    %v1453 = vand.u32 %v1452, 4294901760
    %1454 = vmatpush.msra.mxu0 %v1453
    %v1455 = vand.u32 %v1298, 4294901760
    %1456 = vmatmul.f32.gmra.mxu0 %v1455
    %v1457 = vpop.f32.mrf.mxu0
    %v1458 = vadd.f32 %v1425, %v1457
    %1459 = vdwg.mxu0
    %1460 = vmatpush.msra.mxu0 0.0
    %1461 = vmatpush.msra.mxu0 0.0
    %1462 = vmatpush.msra.mxu0 0.0
    %1463 = vmatpush.msra.mxu0 0.0
    %1464 = vmatpush.msra.mxu0 0.0
    %1465 = vmatpush.msra.mxu0 0.0
    %1466 = vmatpush.msra.mxu0 0.0
    %1467 = vmatpush.msra.mxu0 0.0
    %1468 = vmatpush.msra.mxu0 0.0
    %1469 = vmatpush.msra.mxu0 0.0
    %1470 = vmatpush.msra.mxu0 0.0
    %1471 = vmatpush.msra.mxu0 0.0
    %v1472 = vand.u32 %v369, 4294901760
    %1473 = vmatpush.msra.mxu0 %v1472
    %v1474 = vand.u32 %v368, 4294901760
    %1475 = vmatpush.msra.mxu0 %v1474
    %v1476 = vand.u32 %v367, 4294901760
    %1477 = vmatpush.msra.mxu0 %v1476
    %v1478 = vand.u32 %v366, 4294901760
    %1479 = vmatpush.msra.mxu0 %v1478
    %v1480 = vand.u32 %v1298, 4294901760
    %1481 = vmatmul.f32.gmra.mxu0 %v1480
    %v1482 = vpop.f32.mrf.mxu0
    %v1483 = vadd.f32 %v1458, %v1482
    %1484 = vdwg.mxu0
    %v1485 = vadd.f32 %v1297, %v1483
    %v1486 = vxor.u32 %v1485, 2147483648
    %v1487 = vmul.f32 %v1486, 1.442695
    %v1488 = vpow.pop %v1487
    %v1489 = vadd.f32 %v1488, 1.0
    %v1490 = vrcp.pop %v1489
    %v1491 = vmul.f32 %v1489, %v1490
    %v1492 = vsub.f32 1.0, %v1491
    %v1493 = vmul.f32 %v1490, %v1492
    %v1494 = vadd.f32 %v1490, %v1493
    %vm1495 = vweird.f32 %v1489
    %vm1496 = vweird.f32 %v1490
    %vm1497 = vmor %vm1495, %vm1496
    %v1498 = vsel %vm1497, %v1490, %v1494
    %v1499 = vand.u32 2147483647, %v1489
    %vm1500 = vcmp.eq.f32.partialorder %v1499, 8.507059e+37
    %v1501 = vand.u32 %v1489, 2147483648
    %v1502 = vor.u32 1.1754944e-38, %v1501
    %v1503 = vsel %vm1500, %v1502, %v1498
    %v1504 = vmul.f32 1.0, %v1503
    %v1505 = vtanh.pop %v1485
    %v1506 = vmul.f32 %v1504, %v1285
    %1508 = vrot.lane.b32.xlu0 %v1505, 64
    %v1509 = vpop.permute.xlu0 %1508
    %v1511 = vmul.f32 %v1504, %v1509
    %1513 = vrot.lane.b32.xlu0 %v1511, 32
    %v1514 = vpop.permute.xlu0 %1513
    %v1516 = vadd.f32 %v1506, %v1514
    %v1517 = vtanh.pop %v1516
    %1519 = vrot.lane.b32.xlu0 %v1517, 64
    %v1520 = vpop.permute.xlu0 %1519
    %v1522 = vmul.f32 %v1504, %v1520
    %1524 = vrot.lane.b32.xlu0 %v1522, 32
    %v1525 = vpop.permute.xlu0 %1524
    %1527 = vst.msk [vmem:[#allocation3 + $0x4] sm:$0x1] %vm602, %v1525
    %v1528 = vld [vmem:[#allocation2 + $0x5] sm:$0x1]
    %v1529 = vsel %vm371, %v1525, 0
    %1531 = vmatpush.msra.mxu0 0.0
    %1532 = vmatpush.msra.mxu0 0.0
    %1533 = vmatpush.msra.mxu0 0.0
    %1534 = vmatpush.msra.mxu0 0.0
    %1535 = vmatpush.msra.mxu0 0.0
    %1536 = vmatpush.msra.mxu0 0.0
    %1537 = vmatpush.msra.mxu0 0.0
    %1538 = vmatpush.msra.mxu0 0.0
    %1539 = vmatpush.msra.mxu0 0.0
    %1540 = vmatpush.msra.mxu0 0.0
    %1541 = vmatpush.msra.mxu0 0.0
    %1542 = vmatpush.msra.mxu0 0.0
    %v1543 = vand.u32 %v369, 4294901760
    %1544 = vmatpush.msra.mxu0 %v1543
    %v1545 = vand.u32 %v368, 4294901760
    %1546 = vmatpush.msra.mxu0 %v1545
    %v1547 = vand.u32 %v367, 4294901760
    %1548 = vmatpush.msra.mxu0 %v1547
    %v1549 = vand.u32 %v366, 4294901760
    %1550 = vmatpush.msra.mxu0 %v1549
    %v1551 = vand.u32 %v1529, 4294901760
    %v1552 = vsub.f32 %v1529, %v1551
    %v1553 = vand.u32 %v1552, 4294901760
    %v1554 = vsub.f32 %v1552, %v1553
    %v1555 = vand.u32 %v1554, 4294901760
    %1556 = vmatmul.f32.gmra.mxu0 %v1555
    %v1557 = vpop.f32.mrf.mxu0
    %v1558 = vadd.f32 0.0, %v1557
    %1559 = vdwg.mxu0
    %1560 = vmatpush.msra.mxu0 0.0
    %1561 = vmatpush.msra.mxu0 0.0
    %1562 = vmatpush.msra.mxu0 0.0
    %1563 = vmatpush.msra.mxu0 0.0
    %1564 = vmatpush.msra.mxu0 0.0
    %1565 = vmatpush.msra.mxu0 0.0
    %1566 = vmatpush.msra.mxu0 0.0
    %1567 = vmatpush.msra.mxu0 0.0
    %1568 = vmatpush.msra.mxu0 0.0
    %1569 = vmatpush.msra.mxu0 0.0
    %1570 = vmatpush.msra.mxu0 0.0
    %1571 = vmatpush.msra.mxu0 0.0
    %v1572 = vand.u32 %v369, 4294901760
    %v1573 = vsub.f32 %v369, %v1572
    %v1574 = vand.u32 %v1573, 4294901760
    %v1575 = vsub.f32 %v1573, %v1574
    %v1576 = vand.u32 %v1575, 4294901760
    %1577 = vmatpush.msra.mxu0 %v1576
    %v1578 = vand.u32 %v368, 4294901760
    %v1579 = vsub.f32 %v368, %v1578
    %v1580 = vand.u32 %v1579, 4294901760
    %v1581 = vsub.f32 %v1579, %v1580
    %v1582 = vand.u32 %v1581, 4294901760
    %1583 = vmatpush.msra.mxu0 %v1582
    %v1584 = vand.u32 %v367, 4294901760
    %v1585 = vsub.f32 %v367, %v1584
    %v1586 = vand.u32 %v1585, 4294901760
    %v1587 = vsub.f32 %v1585, %v1586
    %v1588 = vand.u32 %v1587, 4294901760
    %1589 = vmatpush.msra.mxu0 %v1588
    %v1590 = vand.u32 %v366, 4294901760
    %v1591 = vsub.f32 %v366, %v1590
    %v1592 = vand.u32 %v1591, 4294901760
    %v1593 = vsub.f32 %v1591, %v1592
    %v1594 = vand.u32 %v1593, 4294901760
    %1595 = vmatpush.msra.mxu0 %v1594
    %v1596 = vand.u32 %v1529, 4294901760
    %1597 = vmatmul.f32.gmra.mxu0 %v1596
    %v1598 = vpop.f32.mrf.mxu0
    %v1599 = vadd.f32 %v1558, %v1598
    %1600 = vdwg.mxu0
    %1601 = vmatpush.msra.mxu0 0.0
    %1602 = vmatpush.msra.mxu0 0.0
    %1603 = vmatpush.msra.mxu0 0.0
    %1604 = vmatpush.msra.mxu0 0.0
    %1605 = vmatpush.msra.mxu0 0.0
    %1606 = vmatpush.msra.mxu0 0.0
    %1607 = vmatpush.msra.mxu0 0.0
    %1608 = vmatpush.msra.mxu0 0.0
    %1609 = vmatpush.msra.mxu0 0.0
    %1610 = vmatpush.msra.mxu0 0.0
    %1611 = vmatpush.msra.mxu0 0.0
    %1612 = vmatpush.msra.mxu0 0.0
    %v1613 = vand.u32 %v369, 4294901760
    %v1614 = vsub.f32 %v369, %v1613
    %1615 = vmatpush.msra.mxu0 %v1614
    %v1616 = vand.u32 %v368, 4294901760
    %v1617 = vsub.f32 %v368, %v1616
    %1618 = vmatpush.msra.mxu0 %v1617
    %v1619 = vand.u32 %v367, 4294901760
    %v1620 = vsub.f32 %v367, %v1619
    %1621 = vmatpush.msra.mxu0 %v1620
    %v1622 = vand.u32 %v366, 4294901760
    %v1623 = vsub.f32 %v366, %v1622
    %1624 = vmatpush.msra.mxu0 %v1623
    %v1625 = vand.u32 %v1529, 4294901760
    %v1626 = vsub.f32 %v1529, %v1625
    %1627 = vmatmul.f32.gmra.mxu0 %v1626
    %v1628 = vpop.f32.mrf.mxu0
    %v1629 = vadd.f32 %v1599, %v1628
    %1630 = vdwg.mxu0
    %1631 = vmatpush.msra.mxu0 0.0
    %1632 = vmatpush.msra.mxu0 0.0
    %1633 = vmatpush.msra.mxu0 0.0
    %1634 = vmatpush.msra.mxu0 0.0
    %1635 = vmatpush.msra.mxu0 0.0
    %1636 = vmatpush.msra.mxu0 0.0
    %1637 = vmatpush.msra.mxu0 0.0
    %1638 = vmatpush.msra.mxu0 0.0
    %1639 = vmatpush.msra.mxu0 0.0
    %1640 = vmatpush.msra.mxu0 0.0
    %1641 = vmatpush.msra.mxu0 0.0
    %1642 = vmatpush.msra.mxu0 0.0
    %v1643 = vand.u32 %v369, 4294901760
    %1644 = vmatpush.msra.mxu0 %v1643
    %v1645 = vand.u32 %v368, 4294901760
    %1646 = vmatpush.msra.mxu0 %v1645
    %v1647 = vand.u32 %v367, 4294901760
    %1648 = vmatpush.msra.mxu0 %v1647
    %v1649 = vand.u32 %v366, 4294901760
    %1650 = vmatpush.msra.mxu0 %v1649
    %v1651 = vand.u32 %v1529, 4294901760
    %v1652 = vsub.f32 %v1529, %v1651
    %v1653 = vand.u32 %v1652, 4294901760
    %1654 = vmatmul.f32.gmra.mxu0 %v1653
    %v1655 = vpop.f32.mrf.mxu0
    %v1656 = vadd.f32 %v1629, %v1655
    %1657 = vdwg.mxu0
    %1658 = vmatpush.msra.mxu0 0.0
    %1659 = vmatpush.msra.mxu0 0.0
    %1660 = vmatpush.msra.mxu0 0.0
    %1661 = vmatpush.msra.mxu0 0.0
    %1662 = vmatpush.msra.mxu0 0.0
    %1663 = vmatpush.msra.mxu0 0.0
    %1664 = vmatpush.msra.mxu0 0.0
    %1665 = vmatpush.msra.mxu0 0.0
    %1666 = vmatpush.msra.mxu0 0.0
    %1667 = vmatpush.msra.mxu0 0.0
    %1668 = vmatpush.msra.mxu0 0.0
    %1669 = vmatpush.msra.mxu0 0.0
    %v1670 = vand.u32 %v369, 4294901760
    %v1671 = vsub.f32 %v369, %v1670
    %v1672 = vand.u32 %v1671, 4294901760
    %1673 = vmatpush.msra.mxu0 %v1672
    %v1674 = vand.u32 %v368, 4294901760
    %v1675 = vsub.f32 %v368, %v1674
    %v1676 = vand.u32 %v1675, 4294901760
    %1677 = vmatpush.msra.mxu0 %v1676
    %v1678 = vand.u32 %v367, 4294901760
    %v1679 = vsub.f32 %v367, %v1678
    %v1680 = vand.u32 %v1679, 4294901760
    %1681 = vmatpush.msra.mxu0 %v1680
    %v1682 = vand.u32 %v366, 4294901760
    %v1683 = vsub.f32 %v366, %v1682
    %v1684 = vand.u32 %v1683, 4294901760
    %1685 = vmatpush.msra.mxu0 %v1684
    %v1686 = vand.u32 %v1529, 4294901760
    %1687 = vmatmul.f32.gmra.mxu0 %v1686
    %v1688 = vpop.f32.mrf.mxu0
    %v1689 = vadd.f32 %v1656, %v1688
    %1690 = vdwg.mxu0
    %1691 = vmatpush.msra.mxu0 0.0
    %1692 = vmatpush.msra.mxu0 0.0
    %1693 = vmatpush.msra.mxu0 0.0
    %1694 = vmatpush.msra.mxu0 0.0
    %1695 = vmatpush.msra.mxu0 0.0
    %1696 = vmatpush.msra.mxu0 0.0
    %1697 = vmatpush.msra.mxu0 0.0
    %1698 = vmatpush.msra.mxu0 0.0
    %1699 = vmatpush.msra.mxu0 0.0
    %1700 = vmatpush.msra.mxu0 0.0
    %1701 = vmatpush.msra.mxu0 0.0
    %1702 = vmatpush.msra.mxu0 0.0
    %v1703 = vand.u32 %v369, 4294901760
    %1704 = vmatpush.msra.mxu0 %v1703
    %v1705 = vand.u32 %v368, 4294901760
    %1706 = vmatpush.msra.mxu0 %v1705
    %v1707 = vand.u32 %v367, 4294901760
    %1708 = vmatpush.msra.mxu0 %v1707
    %v1709 = vand.u32 %v366, 4294901760
    %1710 = vmatpush.msra.mxu0 %v1709
    %v1711 = vand.u32 %v1529, 4294901760
    %1712 = vmatmul.f32.gmra.mxu0 %v1711
    %v1713 = vpop.f32.mrf.mxu0
    %v1714 = vadd.f32 %v1689, %v1713
    %1715 = vdwg.mxu0
    %v1716 = vadd.f32 %v1528, %v1714
    %v1717 = vxor.u32 %v1716, 2147483648
    %v1718 = vmul.f32 %v1717, 1.442695
    %v1719 = vpow.pop %v1718
    %v1720 = vadd.f32 %v1719, 1.0
    %v1721 = vrcp.pop %v1720
    %v1722 = vmul.f32 %v1720, %v1721
    %v1723 = vsub.f32 1.0, %v1722
    %v1724 = vmul.f32 %v1721, %v1723
    %v1725 = vadd.f32 %v1721, %v1724
    %vm1726 = vweird.f32 %v1720
    %vm1727 = vweird.f32 %v1721
    %vm1728 = vmor %vm1726, %vm1727
    %v1729 = vsel %vm1728, %v1721, %v1725
    %v1730 = vand.u32 2147483647, %v1720
    %vm1731 = vcmp.eq.f32.partialorder %v1730, 8.507059e+37
    %v1732 = vand.u32 %v1720, 2147483648
    %v1733 = vor.u32 1.1754944e-38, %v1732
    %v1734 = vsel %vm1731, %v1733, %v1729
    %v1735 = vmul.f32 1.0, %v1734
    %v1736 = vtanh.pop %v1716
    %v1737 = vmul.f32 %v1735, %v1516
    %1739 = vrot.lane.b32.xlu0 %v1736, 64
    %v1740 = vpop.permute.xlu0 %1739
    %v1742 = vmul.f32 %v1735, %v1740
    %1744 = vrot.lane.b32.xlu0 %v1742, 32
    %v1745 = vpop.permute.xlu0 %1744
    %v1747 = vadd.f32 %v1737, %v1745
    %v1748 = vtanh.pop %v1747
    %1750 = vrot.lane.b32.xlu0 %v1748, 64
    %v1751 = vpop.permute.xlu0 %1750
    %v1753 = vmul.f32 %v1735, %v1751
    %1755 = vrot.lane.b32.xlu0 %v1753, 32
    %v1756 = vpop.permute.xlu0 %1755
    %1758 = vst.msk [vmem:[#allocation3 + $0x5] sm:$0x1] %vm602, %v1756
    %v1759 = vld [vmem:[#allocation2 + $0x6] sm:$0x1]
    %v1760 = vsel %vm371, %v1756, 0
    %1762 = vmatpush.msra.mxu0 0.0
    %1763 = vmatpush.msra.mxu0 0.0
    %1764 = vmatpush.msra.mxu0 0.0
    %1765 = vmatpush.msra.mxu0 0.0
    %1766 = vmatpush.msra.mxu0 0.0
    %1767 = vmatpush.msra.mxu0 0.0
    %1768 = vmatpush.msra.mxu0 0.0
    %1769 = vmatpush.msra.mxu0 0.0
    %1770 = vmatpush.msra.mxu0 0.0
    %1771 = vmatpush.msra.mxu0 0.0
    %1772 = vmatpush.msra.mxu0 0.0
    %1773 = vmatpush.msra.mxu0 0.0
    %v1774 = vand.u32 %v369, 4294901760
    %1775 = vmatpush.msra.mxu0 %v1774
    %v1776 = vand.u32 %v368, 4294901760
    %1777 = vmatpush.msra.mxu0 %v1776
    %v1778 = vand.u32 %v367, 4294901760
    %1779 = vmatpush.msra.mxu0 %v1778
    %v1780 = vand.u32 %v366, 4294901760
    %1781 = vmatpush.msra.mxu0 %v1780
    %v1782 = vand.u32 %v1760, 4294901760
    %v1783 = vsub.f32 %v1760, %v1782
    %v1784 = vand.u32 %v1783, 4294901760
    %v1785 = vsub.f32 %v1783, %v1784
    %v1786 = vand.u32 %v1785, 4294901760
    %1787 = vmatmul.f32.gmra.mxu0 %v1786
    %v1788 = vpop.f32.mrf.mxu0
    %v1789 = vadd.f32 0.0, %v1788
    %1790 = vdwg.mxu0
    %1791 = vmatpush.msra.mxu0 0.0
    %1792 = vmatpush.msra.mxu0 0.0
    %1793 = vmatpush.msra.mxu0 0.0
    %1794 = vmatpush.msra.mxu0 0.0
    %1795 = vmatpush.msra.mxu0 0.0
    %1796 = vmatpush.msra.mxu0 0.0
    %1797 = vmatpush.msra.mxu0 0.0
    %1798 = vmatpush.msra.mxu0 0.0
    %1799 = vmatpush.msra.mxu0 0.0
    %1800 = vmatpush.msra.mxu0 0.0
    %1801 = vmatpush.msra.mxu0 0.0
    %1802 = vmatpush.msra.mxu0 0.0
    %v1803 = vand.u32 %v369, 4294901760
    %v1804 = vsub.f32 %v369, %v1803
    %v1805 = vand.u32 %v1804, 4294901760
    %v1806 = vsub.f32 %v1804, %v1805
    %v1807 = vand.u32 %v1806, 4294901760
    %1808 = vmatpush.msra.mxu0 %v1807
    %v1809 = vand.u32 %v368, 4294901760
    %v1810 = vsub.f32 %v368, %v1809
    %v1811 = vand.u32 %v1810, 4294901760
    %v1812 = vsub.f32 %v1810, %v1811
    %v1813 = vand.u32 %v1812, 4294901760
    %1814 = vmatpush.msra.mxu0 %v1813
    %v1815 = vand.u32 %v367, 4294901760
    %v1816 = vsub.f32 %v367, %v1815
    %v1817 = vand.u32 %v1816, 4294901760
    %v1818 = vsub.f32 %v1816, %v1817
    %v1819 = vand.u32 %v1818, 4294901760
    %1820 = vmatpush.msra.mxu0 %v1819
    %v1821 = vand.u32 %v366, 4294901760
    %v1822 = vsub.f32 %v366, %v1821
    %v1823 = vand.u32 %v1822, 4294901760
    %v1824 = vsub.f32 %v1822, %v1823
    %v1825 = vand.u32 %v1824, 4294901760
    %1826 = vmatpush.msra.mxu0 %v1825
    %v1827 = vand.u32 %v1760, 4294901760
    %1828 = vmatmul.f32.gmra.mxu0 %v1827
    %v1829 = vpop.f32.mrf.mxu0
    %v1830 = vadd.f32 %v1789, %v1829
    %1831 = vdwg.mxu0
    %1832 = vmatpush.msra.mxu0 0.0
    %1833 = vmatpush.msra.mxu0 0.0
    %1834 = vmatpush.msra.mxu0 0.0
    %1835 = vmatpush.msra.mxu0 0.0
    %1836 = vmatpush.msra.mxu0 0.0
    %1837 = vmatpush.msra.mxu0 0.0
    %1838 = vmatpush.msra.mxu0 0.0
    %1839 = vmatpush.msra.mxu0 0.0
    %1840 = vmatpush.msra.mxu0 0.0
    %1841 = vmatpush.msra.mxu0 0.0
    %1842 = vmatpush.msra.mxu0 0.0
    %1843 = vmatpush.msra.mxu0 0.0
    %v1844 = vand.u32 %v369, 4294901760
    %v1845 = vsub.f32 %v369, %v1844
    %1846 = vmatpush.msra.mxu0 %v1845
    %v1847 = vand.u32 %v368, 4294901760
    %v1848 = vsub.f32 %v368, %v1847
    %1849 = vmatpush.msra.mxu0 %v1848
    %v1850 = vand.u32 %v367, 4294901760
    %v1851 = vsub.f32 %v367, %v1850
    %1852 = vmatpush.msra.mxu0 %v1851
    %v1853 = vand.u32 %v366, 4294901760
    %v1854 = vsub.f32 %v366, %v1853
    %1855 = vmatpush.msra.mxu0 %v1854
    %v1856 = vand.u32 %v1760, 4294901760
    %v1857 = vsub.f32 %v1760, %v1856
    %1858 = vmatmul.f32.gmra.mxu0 %v1857
    %v1859 = vpop.f32.mrf.mxu0
    %v1860 = vadd.f32 %v1830, %v1859
    %1861 = vdwg.mxu0
    %1862 = vmatpush.msra.mxu0 0.0
    %1863 = vmatpush.msra.mxu0 0.0
    %1864 = vmatpush.msra.mxu0 0.0
    %1865 = vmatpush.msra.mxu0 0.0
    %1866 = vmatpush.msra.mxu0 0.0
    %1867 = vmatpush.msra.mxu0 0.0
    %1868 = vmatpush.msra.mxu0 0.0
    %1869 = vmatpush.msra.mxu0 0.0
    %1870 = vmatpush.msra.mxu0 0.0
    %1871 = vmatpush.msra.mxu0 0.0
    %1872 = vmatpush.msra.mxu0 0.0
    %1873 = vmatpush.msra.mxu0 0.0
    %v1874 = vand.u32 %v369, 4294901760
    %1875 = vmatpush.msra.mxu0 %v1874
    %v1876 = vand.u32 %v368, 4294901760
    %1877 = vmatpush.msra.mxu0 %v1876
    %v1878 = vand.u32 %v367, 4294901760
    %1879 = vmatpush.msra.mxu0 %v1878
    %v1880 = vand.u32 %v366, 4294901760
    %1881 = vmatpush.msra.mxu0 %v1880
    %v1882 = vand.u32 %v1760, 4294901760
    %v1883 = vsub.f32 %v1760, %v1882
    %v1884 = vand.u32 %v1883, 4294901760
    %1885 = vmatmul.f32.gmra.mxu0 %v1884
    %v1886 = vpop.f32.mrf.mxu0
    %v1887 = vadd.f32 %v1860, %v1886
    %1888 = vdwg.mxu0
    %1889 = vmatpush.msra.mxu0 0.0
    %1890 = vmatpush.msra.mxu0 0.0
    %1891 = vmatpush.msra.mxu0 0.0
    %1892 = vmatpush.msra.mxu0 0.0
    %1893 = vmatpush.msra.mxu0 0.0
    %1894 = vmatpush.msra.mxu0 0.0
    %1895 = vmatpush.msra.mxu0 0.0
    %1896 = vmatpush.msra.mxu0 0.0
    %1897 = vmatpush.msra.mxu0 0.0
    %1898 = vmatpush.msra.mxu0 0.0
    %1899 = vmatpush.msra.mxu0 0.0
    %1900 = vmatpush.msra.mxu0 0.0
    %v1901 = vand.u32 %v369, 4294901760
    %v1902 = vsub.f32 %v369, %v1901
    %v1903 = vand.u32 %v1902, 4294901760
    %1904 = vmatpush.msra.mxu0 %v1903
    %v1905 = vand.u32 %v368, 4294901760
    %v1906 = vsub.f32 %v368, %v1905
    %v1907 = vand.u32 %v1906, 4294901760
    %1908 = vmatpush.msra.mxu0 %v1907
    %v1909 = vand.u32 %v367, 4294901760
    %v1910 = vsub.f32 %v367, %v1909
    %v1911 = vand.u32 %v1910, 4294901760
    %1912 = vmatpush.msra.mxu0 %v1911
    %v1913 = vand.u32 %v366, 4294901760
    %v1914 = vsub.f32 %v366, %v1913
    %v1915 = vand.u32 %v1914, 4294901760
    %1916 = vmatpush.msra.mxu0 %v1915
    %v1917 = vand.u32 %v1760, 4294901760
    %1918 = vmatmul.f32.gmra.mxu0 %v1917
    %v1919 = vpop.f32.mrf.mxu0
    %v1920 = vadd.f32 %v1887, %v1919
    %1921 = vdwg.mxu0
    %1922 = vmatpush.msra.mxu0 0.0
    %1923 = vmatpush.msra.mxu0 0.0
    %1924 = vmatpush.msra.mxu0 0.0
    %1925 = vmatpush.msra.mxu0 0.0
    %1926 = vmatpush.msra.mxu0 0.0
    %1927 = vmatpush.msra.mxu0 0.0
    %1928 = vmatpush.msra.mxu0 0.0
    %1929 = vmatpush.msra.mxu0 0.0
    %1930 = vmatpush.msra.mxu0 0.0
    %1931 = vmatpush.msra.mxu0 0.0
    %1932 = vmatpush.msra.mxu0 0.0
    %1933 = vmatpush.msra.mxu0 0.0
    %v1934 = vand.u32 %v369, 4294901760
    %1935 = vmatpush.msra.mxu0 %v1934
    %v1936 = vand.u32 %v368, 4294901760
    %1937 = vmatpush.msra.mxu0 %v1936
    %v1938 = vand.u32 %v367, 4294901760
    %1939 = vmatpush.msra.mxu0 %v1938
    %v1940 = vand.u32 %v366, 4294901760
    %1941 = vmatpush.msra.mxu0 %v1940
    %v1942 = vand.u32 %v1760, 4294901760
    %1943 = vmatmul.f32.gmra.mxu0 %v1942
    %v1944 = vpop.f32.mrf.mxu0
    %v1945 = vadd.f32 %v1920, %v1944
    %1946 = vdwg.mxu0
    %v1947 = vadd.f32 %v1759, %v1945
    %v1948 = vxor.u32 %v1947, 2147483648
    %v1949 = vmul.f32 %v1948, 1.442695
    %v1950 = vpow.pop %v1949
    %v1951 = vadd.f32 %v1950, 1.0
    %v1952 = vrcp.pop %v1951
    %v1953 = vmul.f32 %v1951, %v1952
    %v1954 = vsub.f32 1.0, %v1953
    %v1955 = vmul.f32 %v1952, %v1954
    %v1956 = vadd.f32 %v1952, %v1955
    %vm1957 = vweird.f32 %v1951
    %vm1958 = vweird.f32 %v1952
    %vm1959 = vmor %vm1957, %vm1958
    %v1960 = vsel %vm1959, %v1952, %v1956
    %v1961 = vand.u32 2147483647, %v1951
    %vm1962 = vcmp.eq.f32.partialorder %v1961, 8.507059e+37
    %v1963 = vand.u32 %v1951, 2147483648
    %v1964 = vor.u32 1.1754944e-38, %v1963
    %v1965 = vsel %vm1962, %v1964, %v1960
    %v1966 = vmul.f32 1.0, %v1965
    %v1967 = vtanh.pop %v1947
    %v1968 = vmul.f32 %v1966, %v1747
    %1970 = vrot.lane.b32.xlu0 %v1967, 64
    %v1971 = vpop.permute.xlu0 %1970
    %v1973 = vmul.f32 %v1966, %v1971
    %1975 = vrot.lane.b32.xlu0 %v1973, 32
    %v1976 = vpop.permute.xlu0 %1975
    %v1978 = vadd.f32 %v1968, %v1976
    %v1979 = vtanh.pop %v1978
    %1981 = vrot.lane.b32.xlu0 %v1979, 64
    %v1982 = vpop.permute.xlu0 %1981
    %v1984 = vmul.f32 %v1966, %v1982
    %1986 = vrot.lane.b32.xlu0 %v1984, 32
    %v1987 = vpop.permute.xlu0 %1986
    %1989 = vst.msk [vmem:[#allocation3 + $0x6] sm:$0x1] %vm602, %v1987
    %v1990 = vld [vmem:[#allocation2 + $0x7] sm:$0x1]
    %v1991 = vsel %vm371, %v1987, 0
    %1993 = vmatpush.msra.mxu0 0.0
    %1994 = vmatpush.msra.mxu0 0.0
    %1995 = vmatpush.msra.mxu0 0.0
    %1996 = vmatpush.msra.mxu0 0.0
    %1997 = vmatpush.msra.mxu0 0.0
    %1998 = vmatpush.msra.mxu0 0.0
    %1999 = vmatpush.msra.mxu0 0.0
    %2000 = vmatpush.msra.mxu0 0.0
    %2001 = vmatpush.msra.mxu0 0.0
    %2002 = vmatpush.msra.mxu0 0.0
    %2003 = vmatpush.msra.mxu0 0.0
    %2004 = vmatpush.msra.mxu0 0.0
    %v2005 = vand.u32 %v369, 4294901760
    %2006 = vmatpush.msra.mxu0 %v2005
    %v2007 = vand.u32 %v368, 4294901760
    %2008 = vmatpush.msra.mxu0 %v2007
    %v2009 = vand.u32 %v367, 4294901760
    %2010 = vmatpush.msra.mxu0 %v2009
    %v2011 = vand.u32 %v366, 4294901760
    %2012 = vmatpush.msra.mxu0 %v2011
    %v2013 = vand.u32 %v1991, 4294901760
    %v2014 = vsub.f32 %v1991, %v2013
    %v2015 = vand.u32 %v2014, 4294901760
    %v2016 = vsub.f32 %v2014, %v2015
    %v2017 = vand.u32 %v2016, 4294901760
    %2018 = vmatmul.f32.gmra.mxu0 %v2017
    %v2019 = vpop.f32.mrf.mxu0
    %v2020 = vadd.f32 0.0, %v2019
    %2021 = vdwg.mxu0
    %2022 = vmatpush.msra.mxu0 0.0
    %2023 = vmatpush.msra.mxu0 0.0
    %2024 = vmatpush.msra.mxu0 0.0
    %2025 = vmatpush.msra.mxu0 0.0
    %2026 = vmatpush.msra.mxu0 0.0
    %2027 = vmatpush.msra.mxu0 0.0
    %2028 = vmatpush.msra.mxu0 0.0
    %2029 = vmatpush.msra.mxu0 0.0
    %2030 = vmatpush.msra.mxu0 0.0
    %2031 = vmatpush.msra.mxu0 0.0
    %2032 = vmatpush.msra.mxu0 0.0
    %2033 = vmatpush.msra.mxu0 0.0
    %v2034 = vand.u32 %v369, 4294901760
    %v2035 = vsub.f32 %v369, %v2034
    %v2036 = vand.u32 %v2035, 4294901760
    %v2037 = vsub.f32 %v2035, %v2036
    %v2038 = vand.u32 %v2037, 4294901760
    %2039 = vmatpush.msra.mxu0 %v2038
    %v2040 = vand.u32 %v368, 4294901760
    %v2041 = vsub.f32 %v368, %v2040
    %v2042 = vand.u32 %v2041, 4294901760
    %v2043 = vsub.f32 %v2041, %v2042
    %v2044 = vand.u32 %v2043, 4294901760
    %2045 = vmatpush.msra.mxu0 %v2044
    %v2046 = vand.u32 %v367, 4294901760
    %v2047 = vsub.f32 %v367, %v2046
    %v2048 = vand.u32 %v2047, 4294901760
    %v2049 = vsub.f32 %v2047, %v2048
    %v2050 = vand.u32 %v2049, 4294901760
    %2051 = vmatpush.msra.mxu0 %v2050
    %v2052 = vand.u32 %v366, 4294901760
    %v2053 = vsub.f32 %v366, %v2052
    %v2054 = vand.u32 %v2053, 4294901760
    %v2055 = vsub.f32 %v2053, %v2054
    %v2056 = vand.u32 %v2055, 4294901760
    %2057 = vmatpush.msra.mxu0 %v2056
    %v2058 = vand.u32 %v1991, 4294901760
    %2059 = vmatmul.f32.gmra.mxu0 %v2058
    %v2060 = vpop.f32.mrf.mxu0
    %v2061 = vadd.f32 %v2020, %v2060
    %2062 = vdwg.mxu0
    %2063 = vmatpush.msra.mxu0 0.0
    %2064 = vmatpush.msra.mxu0 0.0
    %2065 = vmatpush.msra.mxu0 0.0
    %2066 = vmatpush.msra.mxu0 0.0
    %2067 = vmatpush.msra.mxu0 0.0
    %2068 = vmatpush.msra.mxu0 0.0
    %2069 = vmatpush.msra.mxu0 0.0
    %2070 = vmatpush.msra.mxu0 0.0
    %2071 = vmatpush.msra.mxu0 0.0
    %2072 = vmatpush.msra.mxu0 0.0
    %2073 = vmatpush.msra.mxu0 0.0
    %2074 = vmatpush.msra.mxu0 0.0
    %v2075 = vand.u32 %v369, 4294901760
    %v2076 = vsub.f32 %v369, %v2075
    %2077 = vmatpush.msra.mxu0 %v2076
    %v2078 = vand.u32 %v368, 4294901760
    %v2079 = vsub.f32 %v368, %v2078
    %2080 = vmatpush.msra.mxu0 %v2079
    %v2081 = vand.u32 %v367, 4294901760
    %v2082 = vsub.f32 %v367, %v2081
    %2083 = vmatpush.msra.mxu0 %v2082
    %v2084 = vand.u32 %v366, 4294901760
    %v2085 = vsub.f32 %v366, %v2084
    %2086 = vmatpush.msra.mxu0 %v2085
    %v2087 = vand.u32 %v1991, 4294901760
    %v2088 = vsub.f32 %v1991, %v2087
    %2089 = vmatmul.f32.gmra.mxu0 %v2088
    %v2090 = vpop.f32.mrf.mxu0
    %v2091 = vadd.f32 %v2061, %v2090
    %2092 = vdwg.mxu0
    %2093 = vmatpush.msra.mxu0 0.0
    %2094 = vmatpush.msra.mxu0 0.0
    %2095 = vmatpush.msra.mxu0 0.0
    %2096 = vmatpush.msra.mxu0 0.0
    %2097 = vmatpush.msra.mxu0 0.0
    %2098 = vmatpush.msra.mxu0 0.0
    %2099 = vmatpush.msra.mxu0 0.0
    %2100 = vmatpush.msra.mxu0 0.0
    %2101 = vmatpush.msra.mxu0 0.0
    %2102 = vmatpush.msra.mxu0 0.0
    %2103 = vmatpush.msra.mxu0 0.0
    %2104 = vmatpush.msra.mxu0 0.0
    %v2105 = vand.u32 %v369, 4294901760
    %2106 = vmatpush.msra.mxu0 %v2105
    %v2107 = vand.u32 %v368, 4294901760
    %2108 = vmatpush.msra.mxu0 %v2107
    %v2109 = vand.u32 %v367, 4294901760
    %2110 = vmatpush.msra.mxu0 %v2109
    %v2111 = vand.u32 %v366, 4294901760
    %2112 = vmatpush.msra.mxu0 %v2111
    %v2113 = vand.u32 %v1991, 4294901760
    %v2114 = vsub.f32 %v1991, %v2113
    %v2115 = vand.u32 %v2114, 4294901760
    %2116 = vmatmul.f32.gmra.mxu0 %v2115
    %v2117 = vpop.f32.mrf.mxu0
    %v2118 = vadd.f32 %v2091, %v2117
    %2119 = vdwg.mxu0
    %2120 = vmatpush.msra.mxu0 0.0
    %2121 = vmatpush.msra.mxu0 0.0
    %2122 = vmatpush.msra.mxu0 0.0
    %2123 = vmatpush.msra.mxu0 0.0
    %2124 = vmatpush.msra.mxu0 0.0
    %2125 = vmatpush.msra.mxu0 0.0
    %2126 = vmatpush.msra.mxu0 0.0
    %2127 = vmatpush.msra.mxu0 0.0
    %2128 = vmatpush.msra.mxu0 0.0
    %2129 = vmatpush.msra.mxu0 0.0
    %2130 = vmatpush.msra.mxu0 0.0
    %2131 = vmatpush.msra.mxu0 0.0
    %v2132 = vand.u32 %v369, 4294901760
    %v2133 = vsub.f32 %v369, %v2132
    %v2134 = vand.u32 %v2133, 4294901760
    %2135 = vmatpush.msra.mxu0 %v2134
    %v2136 = vand.u32 %v368, 4294901760
    %v2137 = vsub.f32 %v368, %v2136
    %v2138 = vand.u32 %v2137, 4294901760
    %2139 = vmatpush.msra.mxu0 %v2138
    %v2140 = vand.u32 %v367, 4294901760
    %v2141 = vsub.f32 %v367, %v2140
    %v2142 = vand.u32 %v2141, 4294901760
    %2143 = vmatpush.msra.mxu0 %v2142
    %v2144 = vand.u32 %v366, 4294901760
    %v2145 = vsub.f32 %v366, %v2144
    %v2146 = vand.u32 %v2145, 4294901760
    %2147 = vmatpush.msra.mxu0 %v2146
    %v2148 = vand.u32 %v1991, 4294901760
    %2149 = vmatmul.f32.gmra.mxu0 %v2148
    %v2150 = vpop.f32.mrf.mxu0
    %v2151 = vadd.f32 %v2118, %v2150
    %2152 = vdwg.mxu0
    %2153 = vmatpush.msra.mxu0 0.0
    %2154 = vmatpush.msra.mxu0 0.0
    %2155 = vmatpush.msra.mxu0 0.0
    %2156 = vmatpush.msra.mxu0 0.0
    %2157 = vmatpush.msra.mxu0 0.0
    %2158 = vmatpush.msra.mxu0 0.0
    %2159 = vmatpush.msra.mxu0 0.0
    %2160 = vmatpush.msra.mxu0 0.0
    %2161 = vmatpush.msra.mxu0 0.0
    %2162 = vmatpush.msra.mxu0 0.0
    %2163 = vmatpush.msra.mxu0 0.0
    %2164 = vmatpush.msra.mxu0 0.0
    %v2165 = vand.u32 %v369, 4294901760
    %2166 = vmatpush.msra.mxu0 %v2165
    %v2167 = vand.u32 %v368, 4294901760
    %2168 = vmatpush.msra.mxu0 %v2167
    %v2169 = vand.u32 %v367, 4294901760
    %2170 = vmatpush.msra.mxu0 %v2169
    %v2171 = vand.u32 %v366, 4294901760
    %2172 = vmatpush.msra.mxu0 %v2171
    %v2173 = vand.u32 %v1991, 4294901760
    %2174 = vmatmul.f32.gmra.mxu0 %v2173
    %v2175 = vpop.f32.mrf.mxu0
    %v2176 = vadd.f32 %v2151, %v2175
    %2177 = vdwg.mxu0
    %v2178 = vadd.f32 %v1990, %v2176
    %v2179 = vxor.u32 %v2178, 2147483648
    %v2180 = vmul.f32 %v2179, 1.442695
    %v2181 = vpow.pop %v2180
    %v2182 = vadd.f32 %v2181, 1.0
    %v2183 = vrcp.pop %v2182
    %v2184 = vmul.f32 %v2182, %v2183
    %v2185 = vsub.f32 1.0, %v2184
    %v2186 = vmul.f32 %v2183, %v2185
    %v2187 = vadd.f32 %v2183, %v2186
    %vm2188 = vweird.f32 %v2182
    %vm2189 = vweird.f32 %v2183
    %vm2190 = vmor %vm2188, %vm2189
    %v2191 = vsel %vm2190, %v2183, %v2187
    %v2192 = vand.u32 2147483647, %v2182
    %vm2193 = vcmp.eq.f32.partialorder %v2192, 8.507059e+37
    %v2194 = vand.u32 %v2182, 2147483648
    %v2195 = vor.u32 1.1754944e-38, %v2194
    %v2196 = vsel %vm2193, %v2195, %v2191
    %v2197 = vmul.f32 1.0, %v2196
    %v2198 = vtanh.pop %v2178
    %v2199 = vmul.f32 %v2197, %v1978
    %2201 = vrot.lane.b32.xlu0 %v2198, 64
    %v2202 = vpop.permute.xlu0 %2201
    %v2204 = vmul.f32 %v2197, %v2202
    %2206 = vrot.lane.b32.xlu0 %v2204, 32
    %v2207 = vpop.permute.xlu0 %2206
    %v2209 = vadd.f32 %v2199, %v2207
    %v2210 = vtanh.pop %v2209
    %2212 = vrot.lane.b32.xlu0 %v2210, 64
    %v2213 = vpop.permute.xlu0 %2212
    %v2215 = vmul.f32 %v2197, %v2213
    %2217 = vrot.lane.b32.xlu0 %v2215, 32
    %v2218 = vpop.permute.xlu0 %2217
    %2220 = vst.msk [vmem:[#allocation3 + $0x7] sm:$0x1] %vm602, %v2218
    %v2221 = vld [vmem:[#allocation2 + $0x8] sm:$0x1]
    %v2222 = vsel %vm371, %v2218, 0
    %2224 = vmatpush.msra.mxu0 0.0
    %2225 = vmatpush.msra.mxu0 0.0
    %2226 = vmatpush.msra.mxu0 0.0
    %2227 = vmatpush.msra.mxu0 0.0
    %2228 = vmatpush.msra.mxu0 0.0
    %2229 = vmatpush.msra.mxu0 0.0
    %2230 = vmatpush.msra.mxu0 0.0
    %2231 = vmatpush.msra.mxu0 0.0
    %2232 = vmatpush.msra.mxu0 0.0
    %2233 = vmatpush.msra.mxu0 0.0
    %2234 = vmatpush.msra.mxu0 0.0
    %2235 = vmatpush.msra.mxu0 0.0
    %v2236 = vand.u32 %v369, 4294901760
    %2237 = vmatpush.msra.mxu0 %v2236
    %v2238 = vand.u32 %v368, 4294901760
    %2239 = vmatpush.msra.mxu0 %v2238
    %v2240 = vand.u32 %v367, 4294901760
    %2241 = vmatpush.msra.mxu0 %v2240
    %v2242 = vand.u32 %v366, 4294901760
    %2243 = vmatpush.msra.mxu0 %v2242
    %v2244 = vand.u32 %v2222, 4294901760
    %v2245 = vsub.f32 %v2222, %v2244
    %v2246 = vand.u32 %v2245, 4294901760
    %v2247 = vsub.f32 %v2245, %v2246
    %v2248 = vand.u32 %v2247, 4294901760
    %2249 = vmatmul.f32.gmra.mxu0 %v2248
    %v2250 = vpop.f32.mrf.mxu0
    %v2251 = vadd.f32 0.0, %v2250
    %2252 = vdwg.mxu0
    %2253 = vmatpush.msra.mxu0 0.0
    %2254 = vmatpush.msra.mxu0 0.0
    %2255 = vmatpush.msra.mxu0 0.0
    %2256 = vmatpush.msra.mxu0 0.0
    %2257 = vmatpush.msra.mxu0 0.0
    %2258 = vmatpush.msra.mxu0 0.0
    %2259 = vmatpush.msra.mxu0 0.0
    %2260 = vmatpush.msra.mxu0 0.0
    %2261 = vmatpush.msra.mxu0 0.0
    %2262 = vmatpush.msra.mxu0 0.0
    %2263 = vmatpush.msra.mxu0 0.0
    %2264 = vmatpush.msra.mxu0 0.0
    %v2265 = vand.u32 %v369, 4294901760
    %v2266 = vsub.f32 %v369, %v2265
    %v2267 = vand.u32 %v2266, 4294901760
    %v2268 = vsub.f32 %v2266, %v2267
    %v2269 = vand.u32 %v2268, 4294901760
    %2270 = vmatpush.msra.mxu0 %v2269
    %v2271 = vand.u32 %v368, 4294901760
    %v2272 = vsub.f32 %v368, %v2271
    %v2273 = vand.u32 %v2272, 4294901760
    %v2274 = vsub.f32 %v2272, %v2273
    %v2275 = vand.u32 %v2274, 4294901760
    %2276 = vmatpush.msra.mxu0 %v2275
    %v2277 = vand.u32 %v367, 4294901760
    %v2278 = vsub.f32 %v367, %v2277
    %v2279 = vand.u32 %v2278, 4294901760
    %v2280 = vsub.f32 %v2278, %v2279
    %v2281 = vand.u32 %v2280, 4294901760
    %2282 = vmatpush.msra.mxu0 %v2281
    %v2283 = vand.u32 %v366, 4294901760
    %v2284 = vsub.f32 %v366, %v2283
    %v2285 = vand.u32 %v2284, 4294901760
    %v2286 = vsub.f32 %v2284, %v2285
    %v2287 = vand.u32 %v2286, 4294901760
    %2288 = vmatpush.msra.mxu0 %v2287
    %v2289 = vand.u32 %v2222, 4294901760
    %2290 = vmatmul.f32.gmra.mxu0 %v2289
    %v2291 = vpop.f32.mrf.mxu0
    %v2292 = vadd.f32 %v2251, %v2291
    %2293 = vdwg.mxu0
    %2294 = vmatpush.msra.mxu0 0.0
    %2295 = vmatpush.msra.mxu0 0.0
    %2296 = vmatpush.msra.mxu0 0.0
    %2297 = vmatpush.msra.mxu0 0.0
    %2298 = vmatpush.msra.mxu0 0.0
    %2299 = vmatpush.msra.mxu0 0.0
    %2300 = vmatpush.msra.mxu0 0.0
    %2301 = vmatpush.msra.mxu0 0.0
    %2302 = vmatpush.msra.mxu0 0.0
    %2303 = vmatpush.msra.mxu0 0.0
    %2304 = vmatpush.msra.mxu0 0.0
    %2305 = vmatpush.msra.mxu0 0.0
    %v2306 = vand.u32 %v369, 4294901760
    %v2307 = vsub.f32 %v369, %v2306
    %2308 = vmatpush.msra.mxu0 %v2307
    %v2309 = vand.u32 %v368, 4294901760
    %v2310 = vsub.f32 %v368, %v2309
    %2311 = vmatpush.msra.mxu0 %v2310
    %v2312 = vand.u32 %v367, 4294901760
    %v2313 = vsub.f32 %v367, %v2312
    %2314 = vmatpush.msra.mxu0 %v2313
    %v2315 = vand.u32 %v366, 4294901760
    %v2316 = vsub.f32 %v366, %v2315
    %2317 = vmatpush.msra.mxu0 %v2316
    %v2318 = vand.u32 %v2222, 4294901760
    %v2319 = vsub.f32 %v2222, %v2318
    %2320 = vmatmul.f32.gmra.mxu0 %v2319
    %v2321 = vpop.f32.mrf.mxu0
    %v2322 = vadd.f32 %v2292, %v2321
    %2323 = vdwg.mxu0
    %2324 = vmatpush.msra.mxu0 0.0
    %2325 = vmatpush.msra.mxu0 0.0
    %2326 = vmatpush.msra.mxu0 0.0
    %2327 = vmatpush.msra.mxu0 0.0
    %2328 = vmatpush.msra.mxu0 0.0
    %2329 = vmatpush.msra.mxu0 0.0
    %2330 = vmatpush.msra.mxu0 0.0
    %2331 = vmatpush.msra.mxu0 0.0
    %2332 = vmatpush.msra.mxu0 0.0
    %2333 = vmatpush.msra.mxu0 0.0
    %2334 = vmatpush.msra.mxu0 0.0
    %2335 = vmatpush.msra.mxu0 0.0
    %v2336 = vand.u32 %v369, 4294901760
    %2337 = vmatpush.msra.mxu0 %v2336
    %v2338 = vand.u32 %v368, 4294901760
    %2339 = vmatpush.msra.mxu0 %v2338
    %v2340 = vand.u32 %v367, 4294901760
    %2341 = vmatpush.msra.mxu0 %v2340
    %v2342 = vand.u32 %v366, 4294901760
    %2343 = vmatpush.msra.mxu0 %v2342
    %v2344 = vand.u32 %v2222, 4294901760
    %v2345 = vsub.f32 %v2222, %v2344
    %v2346 = vand.u32 %v2345, 4294901760
    %2347 = vmatmul.f32.gmra.mxu0 %v2346
    %v2348 = vpop.f32.mrf.mxu0
    %v2349 = vadd.f32 %v2322, %v2348
    %2350 = vdwg.mxu0
    %2351 = vmatpush.msra.mxu0 0.0
    %2352 = vmatpush.msra.mxu0 0.0
    %2353 = vmatpush.msra.mxu0 0.0
    %2354 = vmatpush.msra.mxu0 0.0
    %2355 = vmatpush.msra.mxu0 0.0
    %2356 = vmatpush.msra.mxu0 0.0
    %2357 = vmatpush.msra.mxu0 0.0
    %2358 = vmatpush.msra.mxu0 0.0
    %2359 = vmatpush.msra.mxu0 0.0
    %2360 = vmatpush.msra.mxu0 0.0
    %2361 = vmatpush.msra.mxu0 0.0
    %2362 = vmatpush.msra.mxu0 0.0
    %v2363 = vand.u32 %v369, 4294901760
    %v2364 = vsub.f32 %v369, %v2363
    %v2365 = vand.u32 %v2364, 4294901760
    %2366 = vmatpush.msra.mxu0 %v2365
    %v2367 = vand.u32 %v368, 4294901760
    %v2368 = vsub.f32 %v368, %v2367
    %v2369 = vand.u32 %v2368, 4294901760
    %2370 = vmatpush.msra.mxu0 %v2369
    %v2371 = vand.u32 %v367, 4294901760
    %v2372 = vsub.f32 %v367, %v2371
    %v2373 = vand.u32 %v2372, 4294901760
    %2374 = vmatpush.msra.mxu0 %v2373
    %v2375 = vand.u32 %v366, 4294901760
    %v2376 = vsub.f32 %v366, %v2375
    %v2377 = vand.u32 %v2376, 4294901760
    %2378 = vmatpush.msra.mxu0 %v2377
    %v2379 = vand.u32 %v2222, 4294901760
    %2380 = vmatmul.f32.gmra.mxu0 %v2379
    %v2381 = vpop.f32.mrf.mxu0
    %v2382 = vadd.f32 %v2349, %v2381
    %2383 = vdwg.mxu0
    %2384 = vmatpush.msra.mxu0 0.0
    %2385 = vmatpush.msra.mxu0 0.0
    %2386 = vmatpush.msra.mxu0 0.0
    %2387 = vmatpush.msra.mxu0 0.0
    %2388 = vmatpush.msra.mxu0 0.0
    %2389 = vmatpush.msra.mxu0 0.0
    %2390 = vmatpush.msra.mxu0 0.0
    %2391 = vmatpush.msra.mxu0 0.0
    %2392 = vmatpush.msra.mxu0 0.0
    %2393 = vmatpush.msra.mxu0 0.0
    %2394 = vmatpush.msra.mxu0 0.0
    %2395 = vmatpush.msra.mxu0 0.0
    %v2396 = vand.u32 %v369, 4294901760
    %2397 = vmatpush.msra.mxu0 %v2396
    %v2398 = vand.u32 %v368, 4294901760
    %2399 = vmatpush.msra.mxu0 %v2398
    %v2400 = vand.u32 %v367, 4294901760
    %2401 = vmatpush.msra.mxu0 %v2400
    %v2402 = vand.u32 %v366, 4294901760
    %2403 = vmatpush.msra.mxu0 %v2402
    %v2404 = vand.u32 %v2222, 4294901760
    %2405 = vmatmul.f32.gmra.mxu0 %v2404
    %v2406 = vpop.f32.mrf.mxu0
    %v2407 = vadd.f32 %v2382, %v2406
    %2408 = vdwg.mxu0
    %v2409 = vadd.f32 %v2221, %v2407
    %v2410 = vxor.u32 %v2409, 2147483648
    %v2411 = vmul.f32 %v2410, 1.442695
    %v2412 = vpow.pop %v2411
    %v2413 = vadd.f32 %v2412, 1.0
    %v2414 = vrcp.pop %v2413
    %v2415 = vmul.f32 %v2413, %v2414
    %v2416 = vsub.f32 1.0, %v2415
    %v2417 = vmul.f32 %v2414, %v2416
    %v2418 = vadd.f32 %v2414, %v2417
    %vm2419 = vweird.f32 %v2413
    %vm2420 = vweird.f32 %v2414
    %vm2421 = vmor %vm2419, %vm2420
    %v2422 = vsel %vm2421, %v2414, %v2418
    %v2423 = vand.u32 2147483647, %v2413
    %vm2424 = vcmp.eq.f32.partialorder %v2423, 8.507059e+37
    %v2425 = vand.u32 %v2413, 2147483648
    %v2426 = vor.u32 1.1754944e-38, %v2425
    %v2427 = vsel %vm2424, %v2426, %v2422
    %v2428 = vmul.f32 1.0, %v2427
    %v2429 = vtanh.pop %v2409
    %v2430 = vmul.f32 %v2428, %v2209
    %2432 = vrot.lane.b32.xlu0 %v2429, 64
    %v2433 = vpop.permute.xlu0 %2432
    %v2435 = vmul.f32 %v2428, %v2433
    %2437 = vrot.lane.b32.xlu0 %v2435, 32
    %v2438 = vpop.permute.xlu0 %2437
    %v2440 = vadd.f32 %v2430, %v2438
    %v2441 = vtanh.pop %v2440
    %2443 = vrot.lane.b32.xlu0 %v2441, 64
    %v2444 = vpop.permute.xlu0 %2443
    %v2446 = vmul.f32 %v2428, %v2444
    %2448 = vrot.lane.b32.xlu0 %v2446, 32
    %v2449 = vpop.permute.xlu0 %2448
    %2451 = vst.msk [vmem:[#allocation3 + $0x8] sm:$0x1] %vm602, %v2449
    %v2452 = vld [vmem:[#allocation2 + $0x9] sm:$0x1]
    %v2453 = vsel %vm371, %v2449, 0
    %2455 = vmatpush.msra.mxu0 0.0
    %2456 = vmatpush.msra.mxu0 0.0
    %2457 = vmatpush.msra.mxu0 0.0
    %2458 = vmatpush.msra.mxu0 0.0
    %2459 = vmatpush.msra.mxu0 0.0
    %2460 = vmatpush.msra.mxu0 0.0
    %2461 = vmatpush.msra.mxu0 0.0
    %2462 = vmatpush.msra.mxu0 0.0
    %2463 = vmatpush.msra.mxu0 0.0
    %2464 = vmatpush.msra.mxu0 0.0
    %2465 = vmatpush.msra.mxu0 0.0
    %2466 = vmatpush.msra.mxu0 0.0
    %v2467 = vand.u32 %v369, 4294901760
    %2468 = vmatpush.msra.mxu0 %v2467
    %v2469 = vand.u32 %v368, 4294901760
    %2470 = vmatpush.msra.mxu0 %v2469
    %v2471 = vand.u32 %v367, 4294901760
    %2472 = vmatpush.msra.mxu0 %v2471
    %v2473 = vand.u32 %v366, 4294901760
    %2474 = vmatpush.msra.mxu0 %v2473
    %v2475 = vand.u32 %v2453, 4294901760
    %v2476 = vsub.f32 %v2453, %v2475
    %v2477 = vand.u32 %v2476, 4294901760
    %v2478 = vsub.f32 %v2476, %v2477
    %v2479 = vand.u32 %v2478, 4294901760
    %2480 = vmatmul.f32.gmra.mxu0 %v2479
    %v2481 = vpop.f32.mrf.mxu0
    %v2482 = vadd.f32 0.0, %v2481
    %2483 = vdwg.mxu0
    %2484 = vmatpush.msra.mxu0 0.0
    %2485 = vmatpush.msra.mxu0 0.0
    %2486 = vmatpush.msra.mxu0 0.0
    %2487 = vmatpush.msra.mxu0 0.0
    %2488 = vmatpush.msra.mxu0 0.0
    %2489 = vmatpush.msra.mxu0 0.0
    %2490 = vmatpush.msra.mxu0 0.0
    %2491 = vmatpush.msra.mxu0 0.0
    %2492 = vmatpush.msra.mxu0 0.0
    %2493 = vmatpush.msra.mxu0 0.0
    %2494 = vmatpush.msra.mxu0 0.0
    %2495 = vmatpush.msra.mxu0 0.0
    %v2496 = vand.u32 %v369, 4294901760
    %v2497 = vsub.f32 %v369, %v2496
    %v2498 = vand.u32 %v2497, 4294901760
    %v2499 = vsub.f32 %v2497, %v2498
    %v2500 = vand.u32 %v2499, 4294901760
    %2501 = vmatpush.msra.mxu0 %v2500
    %v2502 = vand.u32 %v368, 4294901760
    %v2503 = vsub.f32 %v368, %v2502
    %v2504 = vand.u32 %v2503, 4294901760
    %v2505 = vsub.f32 %v2503, %v2504
    %v2506 = vand.u32 %v2505, 4294901760
    %2507 = vmatpush.msra.mxu0 %v2506
    %v2508 = vand.u32 %v367, 4294901760
    %v2509 = vsub.f32 %v367, %v2508
    %v2510 = vand.u32 %v2509, 4294901760
    %v2511 = vsub.f32 %v2509, %v2510
    %v2512 = vand.u32 %v2511, 4294901760
    %2513 = vmatpush.msra.mxu0 %v2512
    %v2514 = vand.u32 %v366, 4294901760
    %v2515 = vsub.f32 %v366, %v2514
    %v2516 = vand.u32 %v2515, 4294901760
    %v2517 = vsub.f32 %v2515, %v2516
    %v2518 = vand.u32 %v2517, 4294901760
    %2519 = vmatpush.msra.mxu0 %v2518
    %v2520 = vand.u32 %v2453, 4294901760
    %2521 = vmatmul.f32.gmra.mxu0 %v2520
    %v2522 = vpop.f32.mrf.mxu0
    %v2523 = vadd.f32 %v2482, %v2522
    %2524 = vdwg.mxu0
    %2525 = vmatpush.msra.mxu0 0.0
    %2526 = vmatpush.msra.mxu0 0.0
    %2527 = vmatpush.msra.mxu0 0.0
    %2528 = vmatpush.msra.mxu0 0.0
    %2529 = vmatpush.msra.mxu0 0.0
    %2530 = vmatpush.msra.mxu0 0.0
    %2531 = vmatpush.msra.mxu0 0.0
    %2532 = vmatpush.msra.mxu0 0.0
    %2533 = vmatpush.msra.mxu0 0.0
    %2534 = vmatpush.msra.mxu0 0.0
    %2535 = vmatpush.msra.mxu0 0.0
    %2536 = vmatpush.msra.mxu0 0.0
    %v2537 = vand.u32 %v369, 4294901760
    %v2538 = vsub.f32 %v369, %v2537
    %2539 = vmatpush.msra.mxu0 %v2538
    %v2540 = vand.u32 %v368, 4294901760
    %v2541 = vsub.f32 %v368, %v2540
    %2542 = vmatpush.msra.mxu0 %v2541
    %v2543 = vand.u32 %v367, 4294901760
    %v2544 = vsub.f32 %v367, %v2543
    %2545 = vmatpush.msra.mxu0 %v2544
    %v2546 = vand.u32 %v366, 4294901760
    %v2547 = vsub.f32 %v366, %v2546
    %2548 = vmatpush.msra.mxu0 %v2547
    %v2549 = vand.u32 %v2453, 4294901760
    %v2550 = vsub.f32 %v2453, %v2549
    %2551 = vmatmul.f32.gmra.mxu0 %v2550
    %v2552 = vpop.f32.mrf.mxu0
    %v2553 = vadd.f32 %v2523, %v2552
    %2554 = vdwg.mxu0
    %2555 = vmatpush.msra.mxu0 0.0
    %2556 = vmatpush.msra.mxu0 0.0
    %2557 = vmatpush.msra.mxu0 0.0
    %2558 = vmatpush.msra.mxu0 0.0
    %2559 = vmatpush.msra.mxu0 0.0
    %2560 = vmatpush.msra.mxu0 0.0
    %2561 = vmatpush.msra.mxu0 0.0
    %2562 = vmatpush.msra.mxu0 0.0
    %2563 = vmatpush.msra.mxu0 0.0
    %2564 = vmatpush.msra.mxu0 0.0
    %2565 = vmatpush.msra.mxu0 0.0
    %2566 = vmatpush.msra.mxu0 0.0
    %v2567 = vand.u32 %v369, 4294901760
    %2568 = vmatpush.msra.mxu0 %v2567
    %v2569 = vand.u32 %v368, 4294901760
    %2570 = vmatpush.msra.mxu0 %v2569
    %v2571 = vand.u32 %v367, 4294901760
    %2572 = vmatpush.msra.mxu0 %v2571
    %v2573 = vand.u32 %v366, 4294901760
    %2574 = vmatpush.msra.mxu0 %v2573
    %v2575 = vand.u32 %v2453, 4294901760
    %v2576 = vsub.f32 %v2453, %v2575
    %v2577 = vand.u32 %v2576, 4294901760
    %2578 = vmatmul.f32.gmra.mxu0 %v2577
    %v2579 = vpop.f32.mrf.mxu0
    %v2580 = vadd.f32 %v2553, %v2579
    %2581 = vdwg.mxu0
    %2582 = vmatpush.msra.mxu0 0.0
    %2583 = vmatpush.msra.mxu0 0.0
    %2584 = vmatpush.msra.mxu0 0.0
    %2585 = vmatpush.msra.mxu0 0.0
    %2586 = vmatpush.msra.mxu0 0.0
    %2587 = vmatpush.msra.mxu0 0.0
    %2588 = vmatpush.msra.mxu0 0.0
    %2589 = vmatpush.msra.mxu0 0.0
    %2590 = vmatpush.msra.mxu0 0.0
    %2591 = vmatpush.msra.mxu0 0.0
    %2592 = vmatpush.msra.mxu0 0.0
    %2593 = vmatpush.msra.mxu0 0.0
    %v2594 = vand.u32 %v369, 4294901760
    %v2595 = vsub.f32 %v369, %v2594
    %v2596 = vand.u32 %v2595, 4294901760
    %2597 = vmatpush.msra.mxu0 %v2596
    %v2598 = vand.u32 %v368, 4294901760
    %v2599 = vsub.f32 %v368, %v2598
    %v2600 = vand.u32 %v2599, 4294901760
    %2601 = vmatpush.msra.mxu0 %v2600
    %v2602 = vand.u32 %v367, 4294901760
    %v2603 = vsub.f32 %v367, %v2602
    %v2604 = vand.u32 %v2603, 4294901760
    %2605 = vmatpush.msra.mxu0 %v2604
    %v2606 = vand.u32 %v366, 4294901760
    %v2607 = vsub.f32 %v366, %v2606
    %v2608 = vand.u32 %v2607, 4294901760
    %2609 = vmatpush.msra.mxu0 %v2608
    %v2610 = vand.u32 %v2453, 4294901760
    %2611 = vmatmul.f32.gmra.mxu0 %v2610
    %v2612 = vpop.f32.mrf.mxu0
    %v2613 = vadd.f32 %v2580, %v2612
    %2614 = vdwg.mxu0
    %2615 = vmatpush.msra.mxu0 0.0
    %2616 = vmatpush.msra.mxu0 0.0
    %2617 = vmatpush.msra.mxu0 0.0
    %2618 = vmatpush.msra.mxu0 0.0
    %2619 = vmatpush.msra.mxu0 0.0
    %2620 = vmatpush.msra.mxu0 0.0
    %2621 = vmatpush.msra.mxu0 0.0
    %2622 = vmatpush.msra.mxu0 0.0
    %2623 = vmatpush.msra.mxu0 0.0
    %2624 = vmatpush.msra.mxu0 0.0
    %2625 = vmatpush.msra.mxu0 0.0
    %2626 = vmatpush.msra.mxu0 0.0
    %v2627 = vand.u32 %v369, 4294901760
    %2628 = vmatpush.msra.mxu0 %v2627
    %v2629 = vand.u32 %v368, 4294901760
    %2630 = vmatpush.msra.mxu0 %v2629
    %v2631 = vand.u32 %v367, 4294901760
    %2632 = vmatpush.msra.mxu0 %v2631
    %v2633 = vand.u32 %v366, 4294901760
    %2634 = vmatpush.msra.mxu0 %v2633
    %v2635 = vand.u32 %v2453, 4294901760
    %2636 = vmatmul.f32.gmra.mxu0 %v2635
    %v2637 = vpop.f32.mrf.mxu0
    %v2638 = vadd.f32 %v2613, %v2637
    %2639 = vdwg.mxu0
    %v2640 = vadd.f32 %v2452, %v2638
    %v2641 = vxor.u32 %v2640, 2147483648
    %v2642 = vmul.f32 %v2641, 1.442695
    %v2643 = vpow.pop %v2642
    %v2644 = vadd.f32 %v2643, 1.0
    %v2645 = vrcp.pop %v2644
    %v2646 = vmul.f32 %v2644, %v2645
    %v2647 = vsub.f32 1.0, %v2646
    %v2648 = vmul.f32 %v2645, %v2647
    %v2649 = vadd.f32 %v2645, %v2648
    %vm2650 = vweird.f32 %v2644
    %vm2651 = vweird.f32 %v2645
    %vm2652 = vmor %vm2650, %vm2651
    %v2653 = vsel %vm2652, %v2645, %v2649
    %v2654 = vand.u32 2147483647, %v2644
    %vm2655 = vcmp.eq.f32.partialorder %v2654, 8.507059e+37
    %v2656 = vand.u32 %v2644, 2147483648
    %v2657 = vor.u32 1.1754944e-38, %v2656
    %v2658 = vsel %vm2655, %v2657, %v2653
    %v2659 = vmul.f32 1.0, %v2658
    %v2660 = vtanh.pop %v2640
    %v2661 = vmul.f32 %v2659, %v2440
    %2663 = vrot.lane.b32.xlu0 %v2660, 64
    %v2664 = vpop.permute.xlu0 %2663
    %v2666 = vmul.f32 %v2659, %v2664
    %2668 = vrot.lane.b32.xlu0 %v2666, 32
    %v2669 = vpop.permute.xlu0 %2668
    %v2671 = vadd.f32 %v2661, %v2669
    %v2672 = vtanh.pop %v2671
    %2674 = vrot.lane.b32.xlu0 %v2672, 64
    %v2675 = vpop.permute.xlu0 %2674
    %v2677 = vmul.f32 %v2659, %v2675
    %2679 = vrot.lane.b32.xlu0 %v2677, 32
    %v2680 = vpop.permute.xlu0 %2679
    %2682 = vst.msk [vmem:[#allocation3 + $0x9] sm:$0x1] %vm602, %v2680
    %v2683 = vld [vmem:[#allocation2 + $0xa] sm:$0x1]
    %v2684 = vsel %vm371, %v2680, 0
    %2686 = vmatpush.msra.mxu0 0.0
    %2687 = vmatpush.msra.mxu0 0.0
    %2688 = vmatpush.msra.mxu0 0.0
    %2689 = vmatpush.msra.mxu0 0.0
    %2690 = vmatpush.msra.mxu0 0.0
    %2691 = vmatpush.msra.mxu0 0.0
    %2692 = vmatpush.msra.mxu0 0.0
    %2693 = vmatpush.msra.mxu0 0.0
    %2694 = vmatpush.msra.mxu0 0.0
    %2695 = vmatpush.msra.mxu0 0.0
    %2696 = vmatpush.msra.mxu0 0.0
    %2697 = vmatpush.msra.mxu0 0.0
    %v2698 = vand.u32 %v369, 4294901760
    %2699 = vmatpush.msra.mxu0 %v2698
    %v2700 = vand.u32 %v368, 4294901760
    %2701 = vmatpush.msra.mxu0 %v2700
    %v2702 = vand.u32 %v367, 4294901760
    %2703 = vmatpush.msra.mxu0 %v2702
    %v2704 = vand.u32 %v366, 4294901760
    %2705 = vmatpush.msra.mxu0 %v2704
    %v2706 = vand.u32 %v2684, 4294901760
    %v2707 = vsub.f32 %v2684, %v2706
    %v2708 = vand.u32 %v2707, 4294901760
    %v2709 = vsub.f32 %v2707, %v2708
    %v2710 = vand.u32 %v2709, 4294901760
    %2711 = vmatmul.f32.gmra.mxu0 %v2710
    %v2712 = vpop.f32.mrf.mxu0
    %v2713 = vadd.f32 0.0, %v2712
    %2714 = vdwg.mxu0
    %2715 = vmatpush.msra.mxu0 0.0
    %2716 = vmatpush.msra.mxu0 0.0
    %2717 = vmatpush.msra.mxu0 0.0
    %2718 = vmatpush.msra.mxu0 0.0
    %2719 = vmatpush.msra.mxu0 0.0
    %2720 = vmatpush.msra.mxu0 0.0
    %2721 = vmatpush.msra.mxu0 0.0
    %2722 = vmatpush.msra.mxu0 0.0
    %2723 = vmatpush.msra.mxu0 0.0
    %2724 = vmatpush.msra.mxu0 0.0
    %2725 = vmatpush.msra.mxu0 0.0
    %2726 = vmatpush.msra.mxu0 0.0
    %v2727 = vand.u32 %v369, 4294901760
    %v2728 = vsub.f32 %v369, %v2727
    %v2729 = vand.u32 %v2728, 4294901760
    %v2730 = vsub.f32 %v2728, %v2729
    %v2731 = vand.u32 %v2730, 4294901760
    %2732 = vmatpush.msra.mxu0 %v2731
    %v2733 = vand.u32 %v368, 4294901760
    %v2734 = vsub.f32 %v368, %v2733
    %v2735 = vand.u32 %v2734, 4294901760
    %v2736 = vsub.f32 %v2734, %v2735
    %v2737 = vand.u32 %v2736, 4294901760
    %2738 = vmatpush.msra.mxu0 %v2737
    %v2739 = vand.u32 %v367, 4294901760
    %v2740 = vsub.f32 %v367, %v2739
    %v2741 = vand.u32 %v2740, 4294901760
    %v2742 = vsub.f32 %v2740, %v2741
    %v2743 = vand.u32 %v2742, 4294901760
    %2744 = vmatpush.msra.mxu0 %v2743
    %v2745 = vand.u32 %v366, 4294901760
    %v2746 = vsub.f32 %v366, %v2745
    %v2747 = vand.u32 %v2746, 4294901760
    %v2748 = vsub.f32 %v2746, %v2747
    %v2749 = vand.u32 %v2748, 4294901760
    %2750 = vmatpush.msra.mxu0 %v2749
    %v2751 = vand.u32 %v2684, 4294901760
    %2752 = vmatmul.f32.gmra.mxu0 %v2751
    %v2753 = vpop.f32.mrf.mxu0
    %v2754 = vadd.f32 %v2713, %v2753
    %2755 = vdwg.mxu0
    %2756 = vmatpush.msra.mxu0 0.0
    %2757 = vmatpush.msra.mxu0 0.0
    %2758 = vmatpush.msra.mxu0 0.0
    %2759 = vmatpush.msra.mxu0 0.0
    %2760 = vmatpush.msra.mxu0 0.0
    %2761 = vmatpush.msra.mxu0 0.0
    %2762 = vmatpush.msra.mxu0 0.0
    %2763 = vmatpush.msra.mxu0 0.0
    %2764 = vmatpush.msra.mxu0 0.0
    %2765 = vmatpush.msra.mxu0 0.0
    %2766 = vmatpush.msra.mxu0 0.0
    %2767 = vmatpush.msra.mxu0 0.0
    %v2768 = vand.u32 %v369, 4294901760
    %v2769 = vsub.f32 %v369, %v2768
    %2770 = vmatpush.msra.mxu0 %v2769
    %v2771 = vand.u32 %v368, 4294901760
    %v2772 = vsub.f32 %v368, %v2771
    %2773 = vmatpush.msra.mxu0 %v2772
    %v2774 = vand.u32 %v367, 4294901760
    %v2775 = vsub.f32 %v367, %v2774
    %2776 = vmatpush.msra.mxu0 %v2775
    %v2777 = vand.u32 %v366, 4294901760
    %v2778 = vsub.f32 %v366, %v2777
    %2779 = vmatpush.msra.mxu0 %v2778
    %v2780 = vand.u32 %v2684, 4294901760
    %v2781 = vsub.f32 %v2684, %v2780
    %2782 = vmatmul.f32.gmra.mxu0 %v2781
    %v2783 = vpop.f32.mrf.mxu0
    %v2784 = vadd.f32 %v2754, %v2783
    %2785 = vdwg.mxu0
    %2786 = vmatpush.msra.mxu0 0.0
    %2787 = vmatpush.msra.mxu0 0.0
    %2788 = vmatpush.msra.mxu0 0.0
    %2789 = vmatpush.msra.mxu0 0.0
    %2790 = vmatpush.msra.mxu0 0.0
    %2791 = vmatpush.msra.mxu0 0.0
    %2792 = vmatpush.msra.mxu0 0.0
    %2793 = vmatpush.msra.mxu0 0.0
    %2794 = vmatpush.msra.mxu0 0.0
    %2795 = vmatpush.msra.mxu0 0.0
    %2796 = vmatpush.msra.mxu0 0.0
    %2797 = vmatpush.msra.mxu0 0.0
    %v2798 = vand.u32 %v369, 4294901760
    %2799 = vmatpush.msra.mxu0 %v2798
    %v2800 = vand.u32 %v368, 4294901760
    %2801 = vmatpush.msra.mxu0 %v2800
    %v2802 = vand.u32 %v367, 4294901760
    %2803 = vmatpush.msra.mxu0 %v2802
    %v2804 = vand.u32 %v366, 4294901760
    %2805 = vmatpush.msra.mxu0 %v2804
    %v2806 = vand.u32 %v2684, 4294901760
    %v2807 = vsub.f32 %v2684, %v2806
    %v2808 = vand.u32 %v2807, 4294901760
    %2809 = vmatmul.f32.gmra.mxu0 %v2808
    %v2810 = vpop.f32.mrf.mxu0
    %v2811 = vadd.f32 %v2784, %v2810
    %2812 = vdwg.mxu0
    %2813 = vmatpush.msra.mxu0 0.0
    %2814 = vmatpush.msra.mxu0 0.0
    %2815 = vmatpush.msra.mxu0 0.0
    %2816 = vmatpush.msra.mxu0 0.0
    %2817 = vmatpush.msra.mxu0 0.0
    %2818 = vmatpush.msra.mxu0 0.0
    %2819 = vmatpush.msra.mxu0 0.0
    %2820 = vmatpush.msra.mxu0 0.0
    %2821 = vmatpush.msra.mxu0 0.0
    %2822 = vmatpush.msra.mxu0 0.0
    %2823 = vmatpush.msra.mxu0 0.0
    %2824 = vmatpush.msra.mxu0 0.0
    %v2825 = vand.u32 %v369, 4294901760
    %v2826 = vsub.f32 %v369, %v2825
    %v2827 = vand.u32 %v2826, 4294901760
    %2828 = vmatpush.msra.mxu0 %v2827
    %v2829 = vand.u32 %v368, 4294901760
    %v2830 = vsub.f32 %v368, %v2829
    %v2831 = vand.u32 %v2830, 4294901760
    %2832 = vmatpush.msra.mxu0 %v2831
    %v2833 = vand.u32 %v367, 4294901760
    %v2834 = vsub.f32 %v367, %v2833
    %v2835 = vand.u32 %v2834, 4294901760
    %2836 = vmatpush.msra.mxu0 %v2835
    %v2837 = vand.u32 %v366, 4294901760
    %v2838 = vsub.f32 %v366, %v2837
    %v2839 = vand.u32 %v2838, 4294901760
    %2840 = vmatpush.msra.mxu0 %v2839
    %v2841 = vand.u32 %v2684, 4294901760
    %2842 = vmatmul.f32.gmra.mxu0 %v2841
    %v2843 = vpop.f32.mrf.mxu0
    %v2844 = vadd.f32 %v2811, %v2843
    %2845 = vdwg.mxu0
    %2846 = vmatpush.msra.mxu0 0.0
    %2847 = vmatpush.msra.mxu0 0.0
    %2848 = vmatpush.msra.mxu0 0.0
    %2849 = vmatpush.msra.mxu0 0.0
    %2850 = vmatpush.msra.mxu0 0.0
    %2851 = vmatpush.msra.mxu0 0.0
    %2852 = vmatpush.msra.mxu0 0.0
    %2853 = vmatpush.msra.mxu0 0.0
    %2854 = vmatpush.msra.mxu0 0.0
    %2855 = vmatpush.msra.mxu0 0.0
    %2856 = vmatpush.msra.mxu0 0.0
    %2857 = vmatpush.msra.mxu0 0.0
    %v2858 = vand.u32 %v369, 4294901760
    %2859 = vmatpush.msra.mxu0 %v2858
    %v2860 = vand.u32 %v368, 4294901760
    %2861 = vmatpush.msra.mxu0 %v2860
    %v2862 = vand.u32 %v367, 4294901760
    %2863 = vmatpush.msra.mxu0 %v2862
    %v2864 = vand.u32 %v366, 4294901760
    %2865 = vmatpush.msra.mxu0 %v2864
    %v2866 = vand.u32 %v2684, 4294901760
    %2867 = vmatmul.f32.gmra.mxu0 %v2866
    %v2868 = vpop.f32.mrf.mxu0
    %v2869 = vadd.f32 %v2844, %v2868
    %2870 = vdwg.mxu0
    %v2871 = vadd.f32 %v2683, %v2869
    %v2872 = vxor.u32 %v2871, 2147483648
    %v2873 = vmul.f32 %v2872, 1.442695
    %v2874 = vpow.pop %v2873
    %v2875 = vadd.f32 %v2874, 1.0
    %v2876 = vrcp.pop %v2875
    %v2877 = vmul.f32 %v2875, %v2876
    %v2878 = vsub.f32 1.0, %v2877
    %v2879 = vmul.f32 %v2876, %v2878
    %v2880 = vadd.f32 %v2876, %v2879
    %vm2881 = vweird.f32 %v2875
    %vm2882 = vweird.f32 %v2876
    %vm2883 = vmor %vm2881, %vm2882
    %v2884 = vsel %vm2883, %v2876, %v2880
    %v2885 = vand.u32 2147483647, %v2875
    %vm2886 = vcmp.eq.f32.partialorder %v2885, 8.507059e+37
    %v2887 = vand.u32 %v2875, 2147483648
    %v2888 = vor.u32 1.1754944e-38, %v2887
    %v2889 = vsel %vm2886, %v2888, %v2884
    %v2890 = vmul.f32 1.0, %v2889
    %v2891 = vtanh.pop %v2871
    %v2892 = vmul.f32 %v2890, %v2671
    %2894 = vrot.lane.b32.xlu0 %v2891, 64
    %v2895 = vpop.permute.xlu0 %2894
    %v2897 = vmul.f32 %v2890, %v2895
    %2899 = vrot.lane.b32.xlu0 %v2897, 32
    %v2900 = vpop.permute.xlu0 %2899
    %v2902 = vadd.f32 %v2892, %v2900
    %v2903 = vtanh.pop %v2902
    %2905 = vrot.lane.b32.xlu0 %v2903, 64
    %v2906 = vpop.permute.xlu0 %2905
    %v2908 = vmul.f32 %v2890, %v2906
    %2910 = vrot.lane.b32.xlu0 %v2908, 32
    %v2911 = vpop.permute.xlu0 %2910
    %2913 = vst.msk [vmem:[#allocation3 + $0xa] sm:$0x1] %vm602, %v2911
    %v2914 = vld [vmem:[#allocation2 + $0xb] sm:$0x1]
    %v2915 = vsel %vm371, %v2911, 0
    %2917 = vmatpush.msra.mxu0 0.0
    %2918 = vmatpush.msra.mxu0 0.0
    %2919 = vmatpush.msra.mxu0 0.0
    %2920 = vmatpush.msra.mxu0 0.0
    %2921 = vmatpush.msra.mxu0 0.0
    %2922 = vmatpush.msra.mxu0 0.0
    %2923 = vmatpush.msra.mxu0 0.0
    %2924 = vmatpush.msra.mxu0 0.0
    %2925 = vmatpush.msra.mxu0 0.0
    %2926 = vmatpush.msra.mxu0 0.0
    %2927 = vmatpush.msra.mxu0 0.0
    %2928 = vmatpush.msra.mxu0 0.0
    %v2929 = vand.u32 %v369, 4294901760
    %2930 = vmatpush.msra.mxu0 %v2929
    %v2931 = vand.u32 %v368, 4294901760
    %2932 = vmatpush.msra.mxu0 %v2931
    %v2933 = vand.u32 %v367, 4294901760
    %2934 = vmatpush.msra.mxu0 %v2933
    %v2935 = vand.u32 %v366, 4294901760
    %2936 = vmatpush.msra.mxu0 %v2935
    %v2937 = vand.u32 %v2915, 4294901760
    %v2938 = vsub.f32 %v2915, %v2937
    %v2939 = vand.u32 %v2938, 4294901760
    %v2940 = vsub.f32 %v2938, %v2939
    %v2941 = vand.u32 %v2940, 4294901760
    %2942 = vmatmul.f32.gmra.mxu0 %v2941
    %v2943 = vpop.f32.mrf.mxu0
    %v2944 = vadd.f32 0.0, %v2943
    %2945 = vdwg.mxu0
    %2946 = vmatpush.msra.mxu0 0.0
    %2947 = vmatpush.msra.mxu0 0.0
    %2948 = vmatpush.msra.mxu0 0.0
    %2949 = vmatpush.msra.mxu0 0.0
    %2950 = vmatpush.msra.mxu0 0.0
    %2951 = vmatpush.msra.mxu0 0.0
    %2952 = vmatpush.msra.mxu0 0.0
    %2953 = vmatpush.msra.mxu0 0.0
    %2954 = vmatpush.msra.mxu0 0.0
    %2955 = vmatpush.msra.mxu0 0.0
    %2956 = vmatpush.msra.mxu0 0.0
    %2957 = vmatpush.msra.mxu0 0.0
    %v2958 = vand.u32 %v369, 4294901760
    %v2959 = vsub.f32 %v369, %v2958
    %v2960 = vand.u32 %v2959, 4294901760
    %v2961 = vsub.f32 %v2959, %v2960
    %v2962 = vand.u32 %v2961, 4294901760
    %2963 = vmatpush.msra.mxu0 %v2962
    %v2964 = vand.u32 %v368, 4294901760
    %v2965 = vsub.f32 %v368, %v2964
    %v2966 = vand.u32 %v2965, 4294901760
    %v2967 = vsub.f32 %v2965, %v2966
    %v2968 = vand.u32 %v2967, 4294901760
    %2969 = vmatpush.msra.mxu0 %v2968
    %v2970 = vand.u32 %v367, 4294901760
    %v2971 = vsub.f32 %v367, %v2970
    %v2972 = vand.u32 %v2971, 4294901760
    %v2973 = vsub.f32 %v2971, %v2972
    %v2974 = vand.u32 %v2973, 4294901760
    %2975 = vmatpush.msra.mxu0 %v2974
    %v2976 = vand.u32 %v366, 4294901760
    %v2977 = vsub.f32 %v366, %v2976
    %v2978 = vand.u32 %v2977, 4294901760
    %v2979 = vsub.f32 %v2977, %v2978
    %v2980 = vand.u32 %v2979, 4294901760
    %2981 = vmatpush.msra.mxu0 %v2980
    %v2982 = vand.u32 %v2915, 4294901760
    %2983 = vmatmul.f32.gmra.mxu0 %v2982
    %v2984 = vpop.f32.mrf.mxu0
    %v2985 = vadd.f32 %v2944, %v2984
    %2986 = vdwg.mxu0
    %2987 = vmatpush.msra.mxu0 0.0
    %2988 = vmatpush.msra.mxu0 0.0
    %2989 = vmatpush.msra.mxu0 0.0
    %2990 = vmatpush.msra.mxu0 0.0
    %2991 = vmatpush.msra.mxu0 0.0
    %2992 = vmatpush.msra.mxu0 0.0
    %2993 = vmatpush.msra.mxu0 0.0
    %2994 = vmatpush.msra.mxu0 0.0
    %2995 = vmatpush.msra.mxu0 0.0
    %2996 = vmatpush.msra.mxu0 0.0
    %2997 = vmatpush.msra.mxu0 0.0
    %2998 = vmatpush.msra.mxu0 0.0
    %v2999 = vand.u32 %v369, 4294901760
    %v3000 = vsub.f32 %v369, %v2999
    %3001 = vmatpush.msra.mxu0 %v3000
    %v3002 = vand.u32 %v368, 4294901760
    %v3003 = vsub.f32 %v368, %v3002
    %3004 = vmatpush.msra.mxu0 %v3003
    %v3005 = vand.u32 %v367, 4294901760
    %v3006 = vsub.f32 %v367, %v3005
    %3007 = vmatpush.msra.mxu0 %v3006
    %v3008 = vand.u32 %v366, 4294901760
    %v3009 = vsub.f32 %v366, %v3008
    %3010 = vmatpush.msra.mxu0 %v3009
    %v3011 = vand.u32 %v2915, 4294901760
    %v3012 = vsub.f32 %v2915, %v3011
    %3013 = vmatmul.f32.gmra.mxu0 %v3012
    %v3014 = vpop.f32.mrf.mxu0
    %v3015 = vadd.f32 %v2985, %v3014
    %3016 = vdwg.mxu0
    %3017 = vmatpush.msra.mxu0 0.0
    %3018 = vmatpush.msra.mxu0 0.0
    %3019 = vmatpush.msra.mxu0 0.0
    %3020 = vmatpush.msra.mxu0 0.0
    %3021 = vmatpush.msra.mxu0 0.0
    %3022 = vmatpush.msra.mxu0 0.0
    %3023 = vmatpush.msra.mxu0 0.0
    %3024 = vmatpush.msra.mxu0 0.0
    %3025 = vmatpush.msra.mxu0 0.0
    %3026 = vmatpush.msra.mxu0 0.0
    %3027 = vmatpush.msra.mxu0 0.0
    %3028 = vmatpush.msra.mxu0 0.0
    %v3029 = vand.u32 %v369, 4294901760
    %3030 = vmatpush.msra.mxu0 %v3029
    %v3031 = vand.u32 %v368, 4294901760
    %3032 = vmatpush.msra.mxu0 %v3031
    %v3033 = vand.u32 %v367, 4294901760
    %3034 = vmatpush.msra.mxu0 %v3033
    %v3035 = vand.u32 %v366, 4294901760
    %3036 = vmatpush.msra.mxu0 %v3035
    %v3037 = vand.u32 %v2915, 4294901760
    %v3038 = vsub.f32 %v2915, %v3037
    %v3039 = vand.u32 %v3038, 4294901760
    %3040 = vmatmul.f32.gmra.mxu0 %v3039
    %v3041 = vpop.f32.mrf.mxu0
    %v3042 = vadd.f32 %v3015, %v3041
    %3043 = vdwg.mxu0
    %3044 = vmatpush.msra.mxu0 0.0
    %3045 = vmatpush.msra.mxu0 0.0
    %3046 = vmatpush.msra.mxu0 0.0
    %3047 = vmatpush.msra.mxu0 0.0
    %3048 = vmatpush.msra.mxu0 0.0
    %3049 = vmatpush.msra.mxu0 0.0
    %3050 = vmatpush.msra.mxu0 0.0
    %3051 = vmatpush.msra.mxu0 0.0
    %3052 = vmatpush.msra.mxu0 0.0
    %3053 = vmatpush.msra.mxu0 0.0
    %3054 = vmatpush.msra.mxu0 0.0
    %3055 = vmatpush.msra.mxu0 0.0
    %v3056 = vand.u32 %v369, 4294901760
    %v3057 = vsub.f32 %v369, %v3056
    %v3058 = vand.u32 %v3057, 4294901760
    %3059 = vmatpush.msra.mxu0 %v3058
    %v3060 = vand.u32 %v368, 4294901760
    %v3061 = vsub.f32 %v368, %v3060
    %v3062 = vand.u32 %v3061, 4294901760
    %3063 = vmatpush.msra.mxu0 %v3062
    %v3064 = vand.u32 %v367, 4294901760
    %v3065 = vsub.f32 %v367, %v3064
    %v3066 = vand.u32 %v3065, 4294901760
    %3067 = vmatpush.msra.mxu0 %v3066
    %v3068 = vand.u32 %v366, 4294901760
    %v3069 = vsub.f32 %v366, %v3068
    %v3070 = vand.u32 %v3069, 4294901760
    %3071 = vmatpush.msra.mxu0 %v3070
    %v3072 = vand.u32 %v2915, 4294901760
    %3073 = vmatmul.f32.gmra.mxu0 %v3072
    %v3074 = vpop.f32.mrf.mxu0
    %v3075 = vadd.f32 %v3042, %v3074
    %3076 = vdwg.mxu0
    %3077 = vmatpush.msra.mxu0 0.0
    %3078 = vmatpush.msra.mxu0 0.0
    %3079 = vmatpush.msra.mxu0 0.0
    %3080 = vmatpush.msra.mxu0 0.0
    %3081 = vmatpush.msra.mxu0 0.0
    %3082 = vmatpush.msra.mxu0 0.0
    %3083 = vmatpush.msra.mxu0 0.0
    %3084 = vmatpush.msra.mxu0 0.0
    %3085 = vmatpush.msra.mxu0 0.0
    %3086 = vmatpush.msra.mxu0 0.0
    %3087 = vmatpush.msra.mxu0 0.0
    %3088 = vmatpush.msra.mxu0 0.0
    %v3089 = vand.u32 %v369, 4294901760
    %3090 = vmatpush.msra.mxu0 %v3089
    %v3091 = vand.u32 %v368, 4294901760
    %3092 = vmatpush.msra.mxu0 %v3091
    %v3093 = vand.u32 %v367, 4294901760
    %3094 = vmatpush.msra.mxu0 %v3093
    %v3095 = vand.u32 %v366, 4294901760
    %3096 = vmatpush.msra.mxu0 %v3095
    %v3097 = vand.u32 %v2915, 4294901760
    %3098 = vmatmul.f32.gmra.mxu0 %v3097
    %v3099 = vpop.f32.mrf.mxu0
    %v3100 = vadd.f32 %v3075, %v3099
    %3101 = vdwg.mxu0
    %v3102 = vadd.f32 %v2914, %v3100
    %v3103 = vxor.u32 %v3102, 2147483648
    %v3104 = vmul.f32 %v3103, 1.442695
    %v3105 = vpow.pop %v3104
    %v3106 = vadd.f32 %v3105, 1.0
    %v3107 = vrcp.pop %v3106
    %v3108 = vmul.f32 %v3106, %v3107
    %v3109 = vsub.f32 1.0, %v3108
    %v3110 = vmul.f32 %v3107, %v3109
    %v3111 = vadd.f32 %v3107, %v3110
    %vm3112 = vweird.f32 %v3106
    %vm3113 = vweird.f32 %v3107
    %vm3114 = vmor %vm3112, %vm3113
    %v3115 = vsel %vm3114, %v3107, %v3111
    %v3116 = vand.u32 2147483647, %v3106
    %vm3117 = vcmp.eq.f32.partialorder %v3116, 8.507059e+37
    %v3118 = vand.u32 %v3106, 2147483648
    %v3119 = vor.u32 1.1754944e-38, %v3118
    %v3120 = vsel %vm3117, %v3119, %v3115
    %v3121 = vmul.f32 1.0, %v3120
    %v3122 = vtanh.pop %v3102
    %v3123 = vmul.f32 %v3121, %v2902
    %3125 = vrot.lane.b32.xlu0 %v3122, 64
    %v3126 = vpop.permute.xlu0 %3125
    %v3128 = vmul.f32 %v3121, %v3126
    %3130 = vrot.lane.b32.xlu0 %v3128, 32
    %v3131 = vpop.permute.xlu0 %3130
    %v3133 = vadd.f32 %v3123, %v3131
    %v3134 = vtanh.pop %v3133
    %3136 = vrot.lane.b32.xlu0 %v3134, 64
    %v3137 = vpop.permute.xlu0 %3136
    %v3139 = vmul.f32 %v3121, %v3137
    %3141 = vrot.lane.b32.xlu0 %v3139, 32
    %v3142 = vpop.permute.xlu0 %3141
    %3144 = vst.msk [vmem:[#allocation3 + $0xb] sm:$0x1] %vm602, %v3142
    %v3145 = vld [vmem:[#allocation2 + $0xc] sm:$0x1]
    %v3146 = vsel %vm371, %v3142, 0
    %3148 = vmatpush.msra.mxu0 0.0
    %3149 = vmatpush.msra.mxu0 0.0
    %3150 = vmatpush.msra.mxu0 0.0
    %3151 = vmatpush.msra.mxu0 0.0
    %3152 = vmatpush.msra.mxu0 0.0
    %3153 = vmatpush.msra.mxu0 0.0
    %3154 = vmatpush.msra.mxu0 0.0
    %3155 = vmatpush.msra.mxu0 0.0
    %3156 = vmatpush.msra.mxu0 0.0
    %3157 = vmatpush.msra.mxu0 0.0
    %3158 = vmatpush.msra.mxu0 0.0
    %3159 = vmatpush.msra.mxu0 0.0
    %v3160 = vand.u32 %v369, 4294901760
    %3161 = vmatpush.msra.mxu0 %v3160
    %v3162 = vand.u32 %v368, 4294901760
    %3163 = vmatpush.msra.mxu0 %v3162
    %v3164 = vand.u32 %v367, 4294901760
    %3165 = vmatpush.msra.mxu0 %v3164
    %v3166 = vand.u32 %v366, 4294901760
    %3167 = vmatpush.msra.mxu0 %v3166
    %v3168 = vand.u32 %v3146, 4294901760
    %v3169 = vsub.f32 %v3146, %v3168
    %v3170 = vand.u32 %v3169, 4294901760
    %v3171 = vsub.f32 %v3169, %v3170
    %v3172 = vand.u32 %v3171, 4294901760
    %3173 = vmatmul.f32.gmra.mxu0 %v3172
    %v3174 = vpop.f32.mrf.mxu0
    %v3175 = vadd.f32 0.0, %v3174
    %3176 = vdwg.mxu0
    %3177 = vmatpush.msra.mxu0 0.0
    %3178 = vmatpush.msra.mxu0 0.0
    %3179 = vmatpush.msra.mxu0 0.0
    %3180 = vmatpush.msra.mxu0 0.0
    %3181 = vmatpush.msra.mxu0 0.0
    %3182 = vmatpush.msra.mxu0 0.0
    %3183 = vmatpush.msra.mxu0 0.0
    %3184 = vmatpush.msra.mxu0 0.0
    %3185 = vmatpush.msra.mxu0 0.0
    %3186 = vmatpush.msra.mxu0 0.0
    %3187 = vmatpush.msra.mxu0 0.0
    %3188 = vmatpush.msra.mxu0 0.0
    %v3189 = vand.u32 %v369, 4294901760
    %v3190 = vsub.f32 %v369, %v3189
    %v3191 = vand.u32 %v3190, 4294901760
    %v3192 = vsub.f32 %v3190, %v3191
    %v3193 = vand.u32 %v3192, 4294901760
    %3194 = vmatpush.msra.mxu0 %v3193
    %v3195 = vand.u32 %v368, 4294901760
    %v3196 = vsub.f32 %v368, %v3195
    %v3197 = vand.u32 %v3196, 4294901760
    %v3198 = vsub.f32 %v3196, %v3197
    %v3199 = vand.u32 %v3198, 4294901760
    %3200 = vmatpush.msra.mxu0 %v3199
    %v3201 = vand.u32 %v367, 4294901760
    %v3202 = vsub.f32 %v367, %v3201
    %v3203 = vand.u32 %v3202, 4294901760
    %v3204 = vsub.f32 %v3202, %v3203
    %v3205 = vand.u32 %v3204, 4294901760
    %3206 = vmatpush.msra.mxu0 %v3205
    %v3207 = vand.u32 %v366, 4294901760
    %v3208 = vsub.f32 %v366, %v3207
    %v3209 = vand.u32 %v3208, 4294901760
    %v3210 = vsub.f32 %v3208, %v3209
    %v3211 = vand.u32 %v3210, 4294901760
    %3212 = vmatpush.msra.mxu0 %v3211
    %v3213 = vand.u32 %v3146, 4294901760
    %3214 = vmatmul.f32.gmra.mxu0 %v3213
    %v3215 = vpop.f32.mrf.mxu0
    %v3216 = vadd.f32 %v3175, %v3215
    %3217 = vdwg.mxu0
    %3218 = vmatpush.msra.mxu0 0.0
    %3219 = vmatpush.msra.mxu0 0.0
    %3220 = vmatpush.msra.mxu0 0.0
    %3221 = vmatpush.msra.mxu0 0.0
    %3222 = vmatpush.msra.mxu0 0.0
    %3223 = vmatpush.msra.mxu0 0.0
    %3224 = vmatpush.msra.mxu0 0.0
    %3225 = vmatpush.msra.mxu0 0.0
    %3226 = vmatpush.msra.mxu0 0.0
    %3227 = vmatpush.msra.mxu0 0.0
    %3228 = vmatpush.msra.mxu0 0.0
    %3229 = vmatpush.msra.mxu0 0.0
    %v3230 = vand.u32 %v369, 4294901760
    %v3231 = vsub.f32 %v369, %v3230
    %3232 = vmatpush.msra.mxu0 %v3231
    %v3233 = vand.u32 %v368, 4294901760
    %v3234 = vsub.f32 %v368, %v3233
    %3235 = vmatpush.msra.mxu0 %v3234
    %v3236 = vand.u32 %v367, 4294901760
    %v3237 = vsub.f32 %v367, %v3236
    %3238 = vmatpush.msra.mxu0 %v3237
    %v3239 = vand.u32 %v366, 4294901760
    %v3240 = vsub.f32 %v366, %v3239
    %3241 = vmatpush.msra.mxu0 %v3240
    %v3242 = vand.u32 %v3146, 4294901760
    %v3243 = vsub.f32 %v3146, %v3242
    %3244 = vmatmul.f32.gmra.mxu0 %v3243
    %v3245 = vpop.f32.mrf.mxu0
    %v3246 = vadd.f32 %v3216, %v3245
    %3247 = vdwg.mxu0
    %3248 = vmatpush.msra.mxu0 0.0
    %3249 = vmatpush.msra.mxu0 0.0
    %3250 = vmatpush.msra.mxu0 0.0
    %3251 = vmatpush.msra.mxu0 0.0
    %3252 = vmatpush.msra.mxu0 0.0
    %3253 = vmatpush.msra.mxu0 0.0
    %3254 = vmatpush.msra.mxu0 0.0
    %3255 = vmatpush.msra.mxu0 0.0
    %3256 = vmatpush.msra.mxu0 0.0
    %3257 = vmatpush.msra.mxu0 0.0
    %3258 = vmatpush.msra.mxu0 0.0
    %3259 = vmatpush.msra.mxu0 0.0
    %v3260 = vand.u32 %v369, 4294901760
    %3261 = vmatpush.msra.mxu0 %v3260
    %v3262 = vand.u32 %v368, 4294901760
    %3263 = vmatpush.msra.mxu0 %v3262
    %v3264 = vand.u32 %v367, 4294901760
    %3265 = vmatpush.msra.mxu0 %v3264
    %v3266 = vand.u32 %v366, 4294901760
    %3267 = vmatpush.msra.mxu0 %v3266
    %v3268 = vand.u32 %v3146, 4294901760
    %v3269 = vsub.f32 %v3146, %v3268
    %v3270 = vand.u32 %v3269, 4294901760
    %3271 = vmatmul.f32.gmra.mxu0 %v3270
    %v3272 = vpop.f32.mrf.mxu0
    %v3273 = vadd.f32 %v3246, %v3272
    %3274 = vdwg.mxu0
    %3275 = vmatpush.msra.mxu0 0.0
    %3276 = vmatpush.msra.mxu0 0.0
    %3277 = vmatpush.msra.mxu0 0.0
    %3278 = vmatpush.msra.mxu0 0.0
    %3279 = vmatpush.msra.mxu0 0.0
    %3280 = vmatpush.msra.mxu0 0.0
    %3281 = vmatpush.msra.mxu0 0.0
    %3282 = vmatpush.msra.mxu0 0.0
    %3283 = vmatpush.msra.mxu0 0.0
    %3284 = vmatpush.msra.mxu0 0.0
    %3285 = vmatpush.msra.mxu0 0.0
    %3286 = vmatpush.msra.mxu0 0.0
    %v3287 = vand.u32 %v369, 4294901760
    %v3288 = vsub.f32 %v369, %v3287
    %v3289 = vand.u32 %v3288, 4294901760
    %3290 = vmatpush.msra.mxu0 %v3289
    %v3291 = vand.u32 %v368, 4294901760
    %v3292 = vsub.f32 %v368, %v3291
    %v3293 = vand.u32 %v3292, 4294901760
    %3294 = vmatpush.msra.mxu0 %v3293
    %v3295 = vand.u32 %v367, 4294901760
    %v3296 = vsub.f32 %v367, %v3295
    %v3297 = vand.u32 %v3296, 4294901760
    %3298 = vmatpush.msra.mxu0 %v3297
    %v3299 = vand.u32 %v366, 4294901760
    %v3300 = vsub.f32 %v366, %v3299
    %v3301 = vand.u32 %v3300, 4294901760
    %3302 = vmatpush.msra.mxu0 %v3301
    %v3303 = vand.u32 %v3146, 4294901760
    %3304 = vmatmul.f32.gmra.mxu0 %v3303
    %v3305 = vpop.f32.mrf.mxu0
    %v3306 = vadd.f32 %v3273, %v3305
    %3307 = vdwg.mxu0
    %3308 = vmatpush.msra.mxu0 0.0
    %3309 = vmatpush.msra.mxu0 0.0
    %3310 = vmatpush.msra.mxu0 0.0
    %3311 = vmatpush.msra.mxu0 0.0
    %3312 = vmatpush.msra.mxu0 0.0
    %3313 = vmatpush.msra.mxu0 0.0
    %3314 = vmatpush.msra.mxu0 0.0
    %3315 = vmatpush.msra.mxu0 0.0
    %3316 = vmatpush.msra.mxu0 0.0
    %3317 = vmatpush.msra.mxu0 0.0
    %3318 = vmatpush.msra.mxu0 0.0
    %3319 = vmatpush.msra.mxu0 0.0
    %v3320 = vand.u32 %v369, 4294901760
    %3321 = vmatpush.msra.mxu0 %v3320
    %v3322 = vand.u32 %v368, 4294901760
    %3323 = vmatpush.msra.mxu0 %v3322
    %v3324 = vand.u32 %v367, 4294901760
    %3325 = vmatpush.msra.mxu0 %v3324
    %v3326 = vand.u32 %v366, 4294901760
    %3327 = vmatpush.msra.mxu0 %v3326
    %v3328 = vand.u32 %v3146, 4294901760
    %3329 = vmatmul.f32.gmra.mxu0 %v3328
    %v3330 = vpop.f32.mrf.mxu0
    %v3331 = vadd.f32 %v3306, %v3330
    %3332 = vdwg.mxu0
    %v3333 = vadd.f32 %v3145, %v3331
    %v3334 = vxor.u32 %v3333, 2147483648
    %v3335 = vmul.f32 %v3334, 1.442695
    %v3336 = vpow.pop %v3335
    %v3337 = vadd.f32 %v3336, 1.0
    %v3338 = vrcp.pop %v3337
    %v3339 = vmul.f32 %v3337, %v3338
    %v3340 = vsub.f32 1.0, %v3339
    %v3341 = vmul.f32 %v3338, %v3340
    %v3342 = vadd.f32 %v3338, %v3341
    %vm3343 = vweird.f32 %v3337
    %vm3344 = vweird.f32 %v3338
    %vm3345 = vmor %vm3343, %vm3344
    %v3346 = vsel %vm3345, %v3338, %v3342
    %v3347 = vand.u32 2147483647, %v3337
    %vm3348 = vcmp.eq.f32.partialorder %v3347, 8.507059e+37
    %v3349 = vand.u32 %v3337, 2147483648
    %v3350 = vor.u32 1.1754944e-38, %v3349
    %v3351 = vsel %vm3348, %v3350, %v3346
    %v3352 = vmul.f32 1.0, %v3351
    %v3353 = vtanh.pop %v3333
    %v3354 = vmul.f32 %v3352, %v3133
    %3356 = vrot.lane.b32.xlu0 %v3353, 64
    %v3357 = vpop.permute.xlu0 %3356
    %v3359 = vmul.f32 %v3352, %v3357
    %3361 = vrot.lane.b32.xlu0 %v3359, 32
    %v3362 = vpop.permute.xlu0 %3361
    %v3364 = vadd.f32 %v3354, %v3362
    %v3365 = vtanh.pop %v3364
    %3367 = vrot.lane.b32.xlu0 %v3365, 64
    %v3368 = vpop.permute.xlu0 %3367
    %v3370 = vmul.f32 %v3352, %v3368
    %3372 = vrot.lane.b32.xlu0 %v3370, 32
    %v3373 = vpop.permute.xlu0 %3372
    %3375 = vst.msk [vmem:[#allocation3 + $0xc] sm:$0x1] %vm602, %v3373
    %v3376 = vld [vmem:[#allocation2 + $0xd] sm:$0x1]
    %v3377 = vsel %vm371, %v3373, 0
    %3379 = vmatpush.msra.mxu0 0.0
    %3380 = vmatpush.msra.mxu0 0.0
    %3381 = vmatpush.msra.mxu0 0.0
    %3382 = vmatpush.msra.mxu0 0.0
    %3383 = vmatpush.msra.mxu0 0.0
    %3384 = vmatpush.msra.mxu0 0.0
    %3385 = vmatpush.msra.mxu0 0.0
    %3386 = vmatpush.msra.mxu0 0.0
    %3387 = vmatpush.msra.mxu0 0.0
    %3388 = vmatpush.msra.mxu0 0.0
    %3389 = vmatpush.msra.mxu0 0.0
    %3390 = vmatpush.msra.mxu0 0.0
    %v3391 = vand.u32 %v369, 4294901760
    %3392 = vmatpush.msra.mxu0 %v3391
    %v3393 = vand.u32 %v368, 4294901760
    %3394 = vmatpush.msra.mxu0 %v3393
    %v3395 = vand.u32 %v367, 4294901760
    %3396 = vmatpush.msra.mxu0 %v3395
    %v3397 = vand.u32 %v366, 4294901760
    %3398 = vmatpush.msra.mxu0 %v3397
    %v3399 = vand.u32 %v3377, 4294901760
    %v3400 = vsub.f32 %v3377, %v3399
    %v3401 = vand.u32 %v3400, 4294901760
    %v3402 = vsub.f32 %v3400, %v3401
    %v3403 = vand.u32 %v3402, 4294901760
    %3404 = vmatmul.f32.gmra.mxu0 %v3403
    %v3405 = vpop.f32.mrf.mxu0
    %v3406 = vadd.f32 0.0, %v3405
    %3407 = vdwg.mxu0
    %3408 = vmatpush.msra.mxu0 0.0
    %3409 = vmatpush.msra.mxu0 0.0
    %3410 = vmatpush.msra.mxu0 0.0
    %3411 = vmatpush.msra.mxu0 0.0
    %3412 = vmatpush.msra.mxu0 0.0
    %3413 = vmatpush.msra.mxu0 0.0
    %3414 = vmatpush.msra.mxu0 0.0
    %3415 = vmatpush.msra.mxu0 0.0
    %3416 = vmatpush.msra.mxu0 0.0
    %3417 = vmatpush.msra.mxu0 0.0
    %3418 = vmatpush.msra.mxu0 0.0
    %3419 = vmatpush.msra.mxu0 0.0
    %v3420 = vand.u32 %v369, 4294901760
    %v3421 = vsub.f32 %v369, %v3420
    %v3422 = vand.u32 %v3421, 4294901760
    %v3423 = vsub.f32 %v3421, %v3422
    %v3424 = vand.u32 %v3423, 4294901760
    %3425 = vmatpush.msra.mxu0 %v3424
    %v3426 = vand.u32 %v368, 4294901760
    %v3427 = vsub.f32 %v368, %v3426
    %v3428 = vand.u32 %v3427, 4294901760
    %v3429 = vsub.f32 %v3427, %v3428
    %v3430 = vand.u32 %v3429, 4294901760
    %3431 = vmatpush.msra.mxu0 %v3430
    %v3432 = vand.u32 %v367, 4294901760
    %v3433 = vsub.f32 %v367, %v3432
    %v3434 = vand.u32 %v3433, 4294901760
    %v3435 = vsub.f32 %v3433, %v3434
    %v3436 = vand.u32 %v3435, 4294901760
    %3437 = vmatpush.msra.mxu0 %v3436
    %v3438 = vand.u32 %v366, 4294901760
    %v3439 = vsub.f32 %v366, %v3438
    %v3440 = vand.u32 %v3439, 4294901760
    %v3441 = vsub.f32 %v3439, %v3440
    %v3442 = vand.u32 %v3441, 4294901760
    %3443 = vmatpush.msra.mxu0 %v3442
    %v3444 = vand.u32 %v3377, 4294901760
    %3445 = vmatmul.f32.gmra.mxu0 %v3444
    %v3446 = vpop.f32.mrf.mxu0
    %v3447 = vadd.f32 %v3406, %v3446
    %3448 = vdwg.mxu0
    %3449 = vmatpush.msra.mxu0 0.0
    %3450 = vmatpush.msra.mxu0 0.0
    %3451 = vmatpush.msra.mxu0 0.0
    %3452 = vmatpush.msra.mxu0 0.0
    %3453 = vmatpush.msra.mxu0 0.0
    %3454 = vmatpush.msra.mxu0 0.0
    %3455 = vmatpush.msra.mxu0 0.0
    %3456 = vmatpush.msra.mxu0 0.0
    %3457 = vmatpush.msra.mxu0 0.0
    %3458 = vmatpush.msra.mxu0 0.0
    %3459 = vmatpush.msra.mxu0 0.0
    %3460 = vmatpush.msra.mxu0 0.0
    %v3461 = vand.u32 %v369, 4294901760
    %v3462 = vsub.f32 %v369, %v3461
    %3463 = vmatpush.msra.mxu0 %v3462
    %v3464 = vand.u32 %v368, 4294901760
    %v3465 = vsub.f32 %v368, %v3464
    %3466 = vmatpush.msra.mxu0 %v3465
    %v3467 = vand.u32 %v367, 4294901760
    %v3468 = vsub.f32 %v367, %v3467
    %3469 = vmatpush.msra.mxu0 %v3468
    %v3470 = vand.u32 %v366, 4294901760
    %v3471 = vsub.f32 %v366, %v3470
    %3472 = vmatpush.msra.mxu0 %v3471
    %v3473 = vand.u32 %v3377, 4294901760
    %v3474 = vsub.f32 %v3377, %v3473
    %3475 = vmatmul.f32.gmra.mxu0 %v3474
    %v3476 = vpop.f32.mrf.mxu0
    %v3477 = vadd.f32 %v3447, %v3476
    %3478 = vdwg.mxu0
    %3479 = vmatpush.msra.mxu0 0.0
    %3480 = vmatpush.msra.mxu0 0.0
    %3481 = vmatpush.msra.mxu0 0.0
    %3482 = vmatpush.msra.mxu0 0.0
    %3483 = vmatpush.msra.mxu0 0.0
    %3484 = vmatpush.msra.mxu0 0.0
    %3485 = vmatpush.msra.mxu0 0.0
    %3486 = vmatpush.msra.mxu0 0.0
    %3487 = vmatpush.msra.mxu0 0.0
    %3488 = vmatpush.msra.mxu0 0.0
    %3489 = vmatpush.msra.mxu0 0.0
    %3490 = vmatpush.msra.mxu0 0.0
    %v3491 = vand.u32 %v369, 4294901760
    %3492 = vmatpush.msra.mxu0 %v3491
    %v3493 = vand.u32 %v368, 4294901760
    %3494 = vmatpush.msra.mxu0 %v3493
    %v3495 = vand.u32 %v367, 4294901760
    %3496 = vmatpush.msra.mxu0 %v3495
    %v3497 = vand.u32 %v366, 4294901760
    %3498 = vmatpush.msra.mxu0 %v3497
    %v3499 = vand.u32 %v3377, 4294901760
    %v3500 = vsub.f32 %v3377, %v3499
    %v3501 = vand.u32 %v3500, 4294901760
    %3502 = vmatmul.f32.gmra.mxu0 %v3501
    %v3503 = vpop.f32.mrf.mxu0
    %v3504 = vadd.f32 %v3477, %v3503
    %3505 = vdwg.mxu0
    %3506 = vmatpush.msra.mxu0 0.0
    %3507 = vmatpush.msra.mxu0 0.0
    %3508 = vmatpush.msra.mxu0 0.0
    %3509 = vmatpush.msra.mxu0 0.0
    %3510 = vmatpush.msra.mxu0 0.0
    %3511 = vmatpush.msra.mxu0 0.0
    %3512 = vmatpush.msra.mxu0 0.0
    %3513 = vmatpush.msra.mxu0 0.0
    %3514 = vmatpush.msra.mxu0 0.0
    %3515 = vmatpush.msra.mxu0 0.0
    %3516 = vmatpush.msra.mxu0 0.0
    %3517 = vmatpush.msra.mxu0 0.0
    %v3518 = vand.u32 %v369, 4294901760
    %v3519 = vsub.f32 %v369, %v3518
    %v3520 = vand.u32 %v3519, 4294901760
    %3521 = vmatpush.msra.mxu0 %v3520
    %v3522 = vand.u32 %v368, 4294901760
    %v3523 = vsub.f32 %v368, %v3522
    %v3524 = vand.u32 %v3523, 4294901760
    %3525 = vmatpush.msra.mxu0 %v3524
    %v3526 = vand.u32 %v367, 4294901760
    %v3527 = vsub.f32 %v367, %v3526
    %v3528 = vand.u32 %v3527, 4294901760
    %3529 = vmatpush.msra.mxu0 %v3528
    %v3530 = vand.u32 %v366, 4294901760
    %v3531 = vsub.f32 %v366, %v3530
    %v3532 = vand.u32 %v3531, 4294901760
    %3533 = vmatpush.msra.mxu0 %v3532
    %v3534 = vand.u32 %v3377, 4294901760
    %3535 = vmatmul.f32.gmra.mxu0 %v3534
    %v3536 = vpop.f32.mrf.mxu0
    %v3537 = vadd.f32 %v3504, %v3536
    %3538 = vdwg.mxu0
    %3539 = vmatpush.msra.mxu0 0.0
    %3540 = vmatpush.msra.mxu0 0.0
    %3541 = vmatpush.msra.mxu0 0.0
    %3542 = vmatpush.msra.mxu0 0.0
    %3543 = vmatpush.msra.mxu0 0.0
    %3544 = vmatpush.msra.mxu0 0.0
    %3545 = vmatpush.msra.mxu0 0.0
    %3546 = vmatpush.msra.mxu0 0.0
    %3547 = vmatpush.msra.mxu0 0.0
    %3548 = vmatpush.msra.mxu0 0.0
    %3549 = vmatpush.msra.mxu0 0.0
    %3550 = vmatpush.msra.mxu0 0.0
    %v3551 = vand.u32 %v369, 4294901760
    %3552 = vmatpush.msra.mxu0 %v3551
    %v3553 = vand.u32 %v368, 4294901760
    %3554 = vmatpush.msra.mxu0 %v3553
    %v3555 = vand.u32 %v367, 4294901760
    %3556 = vmatpush.msra.mxu0 %v3555
    %v3557 = vand.u32 %v366, 4294901760
    %3558 = vmatpush.msra.mxu0 %v3557
    %v3559 = vand.u32 %v3377, 4294901760
    %3560 = vmatmul.f32.gmra.mxu0 %v3559
    %v3561 = vpop.f32.mrf.mxu0
    %v3562 = vadd.f32 %v3537, %v3561
    %3563 = vdwg.mxu0
    %v3564 = vadd.f32 %v3376, %v3562
    %v3565 = vxor.u32 %v3564, 2147483648
    %v3566 = vmul.f32 %v3565, 1.442695
    %v3567 = vpow.pop %v3566
    %v3568 = vadd.f32 %v3567, 1.0
    %v3569 = vrcp.pop %v3568
    %v3570 = vmul.f32 %v3568, %v3569
    %v3571 = vsub.f32 1.0, %v3570
    %v3572 = vmul.f32 %v3569, %v3571
    %v3573 = vadd.f32 %v3569, %v3572
    %vm3574 = vweird.f32 %v3568
    %vm3575 = vweird.f32 %v3569
    %vm3576 = vmor %vm3574, %vm3575
    %v3577 = vsel %vm3576, %v3569, %v3573
    %v3578 = vand.u32 2147483647, %v3568
    %vm3579 = vcmp.eq.f32.partialorder %v3578, 8.507059e+37
    %v3580 = vand.u32 %v3568, 2147483648
    %v3581 = vor.u32 1.1754944e-38, %v3580
    %v3582 = vsel %vm3579, %v3581, %v3577
    %v3583 = vmul.f32 1.0, %v3582
    %v3584 = vtanh.pop %v3564
    %v3585 = vmul.f32 %v3583, %v3364
    %3587 = vrot.lane.b32.xlu0 %v3584, 64
    %v3588 = vpop.permute.xlu0 %3587
    %v3590 = vmul.f32 %v3583, %v3588
    %3592 = vrot.lane.b32.xlu0 %v3590, 32
    %v3593 = vpop.permute.xlu0 %3592
    %v3595 = vadd.f32 %v3585, %v3593
    %v3596 = vtanh.pop %v3595
    %3598 = vrot.lane.b32.xlu0 %v3596, 64
    %v3599 = vpop.permute.xlu0 %3598
    %v3601 = vmul.f32 %v3583, %v3599
    %3603 = vrot.lane.b32.xlu0 %v3601, 32
    %v3604 = vpop.permute.xlu0 %3603
    %3606 = vst.msk [vmem:[#allocation3 + $0xd] sm:$0x1] %vm602, %v3604
    %v3607 = vld [vmem:[#allocation2 + $0xe] sm:$0x1]
    %v3608 = vsel %vm371, %v3604, 0
    %3610 = vmatpush.msra.mxu0 0.0
    %3611 = vmatpush.msra.mxu0 0.0
    %3612 = vmatpush.msra.mxu0 0.0
    %3613 = vmatpush.msra.mxu0 0.0
    %3614 = vmatpush.msra.mxu0 0.0
    %3615 = vmatpush.msra.mxu0 0.0
    %3616 = vmatpush.msra.mxu0 0.0
    %3617 = vmatpush.msra.mxu0 0.0
    %3618 = vmatpush.msra.mxu0 0.0
    %3619 = vmatpush.msra.mxu0 0.0
    %3620 = vmatpush.msra.mxu0 0.0
    %3621 = vmatpush.msra.mxu0 0.0
    %v3622 = vand.u32 %v369, 4294901760
    %3623 = vmatpush.msra.mxu0 %v3622
    %v3624 = vand.u32 %v368, 4294901760
    %3625 = vmatpush.msra.mxu0 %v3624
    %v3626 = vand.u32 %v367, 4294901760
    %3627 = vmatpush.msra.mxu0 %v3626
    %v3628 = vand.u32 %v366, 4294901760
    %3629 = vmatpush.msra.mxu0 %v3628
    %v3630 = vand.u32 %v3608, 4294901760
    %v3631 = vsub.f32 %v3608, %v3630
    %v3632 = vand.u32 %v3631, 4294901760
    %v3633 = vsub.f32 %v3631, %v3632
    %v3634 = vand.u32 %v3633, 4294901760
    %3635 = vmatmul.f32.gmra.mxu0 %v3634
    %v3636 = vpop.f32.mrf.mxu0
    %v3637 = vadd.f32 0.0, %v3636
    %3638 = vdwg.mxu0
    %3639 = vmatpush.msra.mxu0 0.0
    %3640 = vmatpush.msra.mxu0 0.0
    %3641 = vmatpush.msra.mxu0 0.0
    %3642 = vmatpush.msra.mxu0 0.0
    %3643 = vmatpush.msra.mxu0 0.0
    %3644 = vmatpush.msra.mxu0 0.0
    %3645 = vmatpush.msra.mxu0 0.0
    %3646 = vmatpush.msra.mxu0 0.0
    %3647 = vmatpush.msra.mxu0 0.0
    %3648 = vmatpush.msra.mxu0 0.0
    %3649 = vmatpush.msra.mxu0 0.0
    %3650 = vmatpush.msra.mxu0 0.0
    %v3651 = vand.u32 %v369, 4294901760
    %v3652 = vsub.f32 %v369, %v3651
    %v3653 = vand.u32 %v3652, 4294901760
    %v3654 = vsub.f32 %v3652, %v3653
    %v3655 = vand.u32 %v3654, 4294901760
    %3656 = vmatpush.msra.mxu0 %v3655
    %v3657 = vand.u32 %v368, 4294901760
    %v3658 = vsub.f32 %v368, %v3657
    %v3659 = vand.u32 %v3658, 4294901760
    %v3660 = vsub.f32 %v3658, %v3659
    %v3661 = vand.u32 %v3660, 4294901760
    %3662 = vmatpush.msra.mxu0 %v3661
    %v3663 = vand.u32 %v367, 4294901760
    %v3664 = vsub.f32 %v367, %v3663
    %v3665 = vand.u32 %v3664, 4294901760
    %v3666 = vsub.f32 %v3664, %v3665
    %v3667 = vand.u32 %v3666, 4294901760
    %3668 = vmatpush.msra.mxu0 %v3667
    %v3669 = vand.u32 %v366, 4294901760
    %v3670 = vsub.f32 %v366, %v3669
    %v3671 = vand.u32 %v3670, 4294901760
    %v3672 = vsub.f32 %v3670, %v3671
    %v3673 = vand.u32 %v3672, 4294901760
    %3674 = vmatpush.msra.mxu0 %v3673
    %v3675 = vand.u32 %v3608, 4294901760
    %3676 = vmatmul.f32.gmra.mxu0 %v3675
    %v3677 = vpop.f32.mrf.mxu0
    %v3678 = vadd.f32 %v3637, %v3677
    %3679 = vdwg.mxu0
    %3680 = vmatpush.msra.mxu0 0.0
    %3681 = vmatpush.msra.mxu0 0.0
    %3682 = vmatpush.msra.mxu0 0.0
    %3683 = vmatpush.msra.mxu0 0.0
    %3684 = vmatpush.msra.mxu0 0.0
    %3685 = vmatpush.msra.mxu0 0.0
    %3686 = vmatpush.msra.mxu0 0.0
    %3687 = vmatpush.msra.mxu0 0.0
    %3688 = vmatpush.msra.mxu0 0.0
    %3689 = vmatpush.msra.mxu0 0.0
    %3690 = vmatpush.msra.mxu0 0.0
    %3691 = vmatpush.msra.mxu0 0.0
    %v3692 = vand.u32 %v369, 4294901760
    %v3693 = vsub.f32 %v369, %v3692
    %3694 = vmatpush.msra.mxu0 %v3693
    %v3695 = vand.u32 %v368, 4294901760
    %v3696 = vsub.f32 %v368, %v3695
    %3697 = vmatpush.msra.mxu0 %v3696
    %v3698 = vand.u32 %v367, 4294901760
    %v3699 = vsub.f32 %v367, %v3698
    %3700 = vmatpush.msra.mxu0 %v3699
    %v3701 = vand.u32 %v366, 4294901760
    %v3702 = vsub.f32 %v366, %v3701
    %3703 = vmatpush.msra.mxu0 %v3702
    %v3704 = vand.u32 %v3608, 4294901760
    %v3705 = vsub.f32 %v3608, %v3704
    %3706 = vmatmul.f32.gmra.mxu0 %v3705
    %v3707 = vpop.f32.mrf.mxu0
    %v3708 = vadd.f32 %v3678, %v3707
    %3709 = vdwg.mxu0
    %3710 = vmatpush.msra.mxu0 0.0
    %3711 = vmatpush.msra.mxu0 0.0
    %3712 = vmatpush.msra.mxu0 0.0
    %3713 = vmatpush.msra.mxu0 0.0
    %3714 = vmatpush.msra.mxu0 0.0
    %3715 = vmatpush.msra.mxu0 0.0
    %3716 = vmatpush.msra.mxu0 0.0
    %3717 = vmatpush.msra.mxu0 0.0
    %3718 = vmatpush.msra.mxu0 0.0
    %3719 = vmatpush.msra.mxu0 0.0
    %3720 = vmatpush.msra.mxu0 0.0
    %3721 = vmatpush.msra.mxu0 0.0
    %v3722 = vand.u32 %v369, 4294901760
    %3723 = vmatpush.msra.mxu0 %v3722
    %v3724 = vand.u32 %v368, 4294901760
    %3725 = vmatpush.msra.mxu0 %v3724
    %v3726 = vand.u32 %v367, 4294901760
    %3727 = vmatpush.msra.mxu0 %v3726
    %v3728 = vand.u32 %v366, 4294901760
    %3729 = vmatpush.msra.mxu0 %v3728
    %v3730 = vand.u32 %v3608, 4294901760
    %v3731 = vsub.f32 %v3608, %v3730
    %v3732 = vand.u32 %v3731, 4294901760
    %3733 = vmatmul.f32.gmra.mxu0 %v3732
    %v3734 = vpop.f32.mrf.mxu0
    %v3735 = vadd.f32 %v3708, %v3734
    %3736 = vdwg.mxu0
    %3737 = vmatpush.msra.mxu0 0.0
    %3738 = vmatpush.msra.mxu0 0.0
    %3739 = vmatpush.msra.mxu0 0.0
    %3740 = vmatpush.msra.mxu0 0.0
    %3741 = vmatpush.msra.mxu0 0.0
    %3742 = vmatpush.msra.mxu0 0.0
    %3743 = vmatpush.msra.mxu0 0.0
    %3744 = vmatpush.msra.mxu0 0.0
    %3745 = vmatpush.msra.mxu0 0.0
    %3746 = vmatpush.msra.mxu0 0.0
    %3747 = vmatpush.msra.mxu0 0.0
    %3748 = vmatpush.msra.mxu0 0.0
    %v3749 = vand.u32 %v369, 4294901760
    %v3750 = vsub.f32 %v369, %v3749
    %v3751 = vand.u32 %v3750, 4294901760
    %3752 = vmatpush.msra.mxu0 %v3751
    %v3753 = vand.u32 %v368, 4294901760
    %v3754 = vsub.f32 %v368, %v3753
    %v3755 = vand.u32 %v3754, 4294901760
    %3756 = vmatpush.msra.mxu0 %v3755
    %v3757 = vand.u32 %v367, 4294901760
    %v3758 = vsub.f32 %v367, %v3757
    %v3759 = vand.u32 %v3758, 4294901760
    %3760 = vmatpush.msra.mxu0 %v3759
    %v3761 = vand.u32 %v366, 4294901760
    %v3762 = vsub.f32 %v366, %v3761
    %v3763 = vand.u32 %v3762, 4294901760
    %3764 = vmatpush.msra.mxu0 %v3763
    %v3765 = vand.u32 %v3608, 4294901760
    %3766 = vmatmul.f32.gmra.mxu0 %v3765
    %v3767 = vpop.f32.mrf.mxu0
    %v3768 = vadd.f32 %v3735, %v3767
    %3769 = vdwg.mxu0
    %3770 = vmatpush.msra.mxu0 0.0
    %3771 = vmatpush.msra.mxu0 0.0
    %3772 = vmatpush.msra.mxu0 0.0
    %3773 = vmatpush.msra.mxu0 0.0
    %3774 = vmatpush.msra.mxu0 0.0
    %3775 = vmatpush.msra.mxu0 0.0
    %3776 = vmatpush.msra.mxu0 0.0
    %3777 = vmatpush.msra.mxu0 0.0
    %3778 = vmatpush.msra.mxu0 0.0
    %3779 = vmatpush.msra.mxu0 0.0
    %3780 = vmatpush.msra.mxu0 0.0
    %3781 = vmatpush.msra.mxu0 0.0
    %v3782 = vand.u32 %v369, 4294901760
    %3783 = vmatpush.msra.mxu0 %v3782
    %v3784 = vand.u32 %v368, 4294901760
    %3785 = vmatpush.msra.mxu0 %v3784
    %v3786 = vand.u32 %v367, 4294901760
    %3787 = vmatpush.msra.mxu0 %v3786
    %v3788 = vand.u32 %v366, 4294901760
    %3789 = vmatpush.msra.mxu0 %v3788
    %v3790 = vand.u32 %v3608, 4294901760
    %3791 = vmatmul.f32.gmra.mxu0 %v3790
    %v3792 = vpop.f32.mrf.mxu0
    %v3793 = vadd.f32 %v3768, %v3792
    %3794 = vdwg.mxu0
    %v3795 = vadd.f32 %v3607, %v3793
    %v3796 = vxor.u32 %v3795, 2147483648
    %v3797 = vmul.f32 %v3796, 1.442695
    %v3798 = vpow.pop %v3797
    %v3799 = vadd.f32 %v3798, 1.0
    %v3800 = vrcp.pop %v3799
    %v3801 = vmul.f32 %v3799, %v3800
    %v3802 = vsub.f32 1.0, %v3801
    %v3803 = vmul.f32 %v3800, %v3802
    %v3804 = vadd.f32 %v3800, %v3803
    %vm3805 = vweird.f32 %v3799
    %vm3806 = vweird.f32 %v3800
    %vm3807 = vmor %vm3805, %vm3806
    %v3808 = vsel %vm3807, %v3800, %v3804
    %v3809 = vand.u32 2147483647, %v3799
    %vm3810 = vcmp.eq.f32.partialorder %v3809, 8.507059e+37
    %v3811 = vand.u32 %v3799, 2147483648
    %v3812 = vor.u32 1.1754944e-38, %v3811
    %v3813 = vsel %vm3810, %v3812, %v3808
    %v3814 = vmul.f32 1.0, %v3813
    %v3815 = vtanh.pop %v3795
    %v3816 = vmul.f32 %v3814, %v3595
    %3818 = vrot.lane.b32.xlu0 %v3815, 64
    %v3819 = vpop.permute.xlu0 %3818
    %v3821 = vmul.f32 %v3814, %v3819
    %3823 = vrot.lane.b32.xlu0 %v3821, 32
    %v3824 = vpop.permute.xlu0 %3823
    %v3826 = vadd.f32 %v3816, %v3824
    %v3827 = vtanh.pop %v3826
    %3829 = vrot.lane.b32.xlu0 %v3827, 64
    %v3830 = vpop.permute.xlu0 %3829
    %v3832 = vmul.f32 %v3814, %v3830
    %3834 = vrot.lane.b32.xlu0 %v3832, 32
    %v3835 = vpop.permute.xlu0 %3834
    %3837 = vst.msk [vmem:[#allocation3 + $0xe] sm:$0x1] %vm602, %v3835
    %v3838 = vld [vmem:[#allocation2 + $0xf] sm:$0x1]
    %v3839 = vsel %vm371, %v3835, 0
    %3841 = vmatpush.msra.mxu0 0.0
    %3842 = vmatpush.msra.mxu0 0.0
    %3843 = vmatpush.msra.mxu0 0.0
    %3844 = vmatpush.msra.mxu0 0.0
    %3845 = vmatpush.msra.mxu0 0.0
    %3846 = vmatpush.msra.mxu0 0.0
    %3847 = vmatpush.msra.mxu0 0.0
    %3848 = vmatpush.msra.mxu0 0.0
    %3849 = vmatpush.msra.mxu0 0.0
    %3850 = vmatpush.msra.mxu0 0.0
    %3851 = vmatpush.msra.mxu0 0.0
    %3852 = vmatpush.msra.mxu0 0.0
    %v3853 = vand.u32 %v369, 4294901760
    %3854 = vmatpush.msra.mxu0 %v3853
    %v3855 = vand.u32 %v368, 4294901760
    %3856 = vmatpush.msra.mxu0 %v3855
    %v3857 = vand.u32 %v367, 4294901760
    %3858 = vmatpush.msra.mxu0 %v3857
    %v3859 = vand.u32 %v366, 4294901760
    %3860 = vmatpush.msra.mxu0 %v3859
    %v3861 = vand.u32 %v3839, 4294901760
    %v3862 = vsub.f32 %v3839, %v3861
    %v3863 = vand.u32 %v3862, 4294901760
    %v3864 = vsub.f32 %v3862, %v3863
    %v3865 = vand.u32 %v3864, 4294901760
    %3866 = vmatmul.f32.gmra.mxu0 %v3865
    %v3867 = vpop.f32.mrf.mxu0
    %v3868 = vadd.f32 0.0, %v3867
    %3869 = vdwg.mxu0
    %3870 = vmatpush.msra.mxu0 0.0
    %3871 = vmatpush.msra.mxu0 0.0
    %3872 = vmatpush.msra.mxu0 0.0
    %3873 = vmatpush.msra.mxu0 0.0
    %3874 = vmatpush.msra.mxu0 0.0
    %3875 = vmatpush.msra.mxu0 0.0
    %3876 = vmatpush.msra.mxu0 0.0
    %3877 = vmatpush.msra.mxu0 0.0
    %3878 = vmatpush.msra.mxu0 0.0
    %3879 = vmatpush.msra.mxu0 0.0
    %3880 = vmatpush.msra.mxu0 0.0
    %3881 = vmatpush.msra.mxu0 0.0
    %v3882 = vand.u32 %v369, 4294901760
    %v3883 = vsub.f32 %v369, %v3882
    %v3884 = vand.u32 %v3883, 4294901760
    %v3885 = vsub.f32 %v3883, %v3884
    %v3886 = vand.u32 %v3885, 4294901760
    %3887 = vmatpush.msra.mxu0 %v3886
    %v3888 = vand.u32 %v368, 4294901760
    %v3889 = vsub.f32 %v368, %v3888
    %v3890 = vand.u32 %v3889, 4294901760
    %v3891 = vsub.f32 %v3889, %v3890
    %v3892 = vand.u32 %v3891, 4294901760
    %3893 = vmatpush.msra.mxu0 %v3892
    %v3894 = vand.u32 %v367, 4294901760
    %v3895 = vsub.f32 %v367, %v3894
    %v3896 = vand.u32 %v3895, 4294901760
    %v3897 = vsub.f32 %v3895, %v3896
    %v3898 = vand.u32 %v3897, 4294901760
    %3899 = vmatpush.msra.mxu0 %v3898
    %v3900 = vand.u32 %v366, 4294901760
    %v3901 = vsub.f32 %v366, %v3900
    %v3902 = vand.u32 %v3901, 4294901760
    %v3903 = vsub.f32 %v3901, %v3902
    %v3904 = vand.u32 %v3903, 4294901760
    %3905 = vmatpush.msra.mxu0 %v3904
    %v3906 = vand.u32 %v3839, 4294901760
    %3907 = vmatmul.f32.gmra.mxu0 %v3906
    %v3908 = vpop.f32.mrf.mxu0
    %v3909 = vadd.f32 %v3868, %v3908
    %3910 = vdwg.mxu0
    %3911 = vmatpush.msra.mxu0 0.0
    %3912 = vmatpush.msra.mxu0 0.0
    %3913 = vmatpush.msra.mxu0 0.0
    %3914 = vmatpush.msra.mxu0 0.0
    %3915 = vmatpush.msra.mxu0 0.0
    %3916 = vmatpush.msra.mxu0 0.0
    %3917 = vmatpush.msra.mxu0 0.0
    %3918 = vmatpush.msra.mxu0 0.0
    %3919 = vmatpush.msra.mxu0 0.0
    %3920 = vmatpush.msra.mxu0 0.0
    %3921 = vmatpush.msra.mxu0 0.0
    %3922 = vmatpush.msra.mxu0 0.0
    %v3923 = vand.u32 %v369, 4294901760
    %v3924 = vsub.f32 %v369, %v3923
    %3925 = vmatpush.msra.mxu0 %v3924
    %v3926 = vand.u32 %v368, 4294901760
    %v3927 = vsub.f32 %v368, %v3926
    %3928 = vmatpush.msra.mxu0 %v3927
    %v3929 = vand.u32 %v367, 4294901760
    %v3930 = vsub.f32 %v367, %v3929
    %3931 = vmatpush.msra.mxu0 %v3930
    %v3932 = vand.u32 %v366, 4294901760
    %v3933 = vsub.f32 %v366, %v3932
    %3934 = vmatpush.msra.mxu0 %v3933
    %v3935 = vand.u32 %v3839, 4294901760
    %v3936 = vsub.f32 %v3839, %v3935
    %3937 = vmatmul.f32.gmra.mxu0 %v3936
    %v3938 = vpop.f32.mrf.mxu0
    %v3939 = vadd.f32 %v3909, %v3938
    %3940 = vdwg.mxu0
    %3941 = vmatpush.msra.mxu0 0.0
    %3942 = vmatpush.msra.mxu0 0.0
    %3943 = vmatpush.msra.mxu0 0.0
    %3944 = vmatpush.msra.mxu0 0.0
    %3945 = vmatpush.msra.mxu0 0.0
    %3946 = vmatpush.msra.mxu0 0.0
    %3947 = vmatpush.msra.mxu0 0.0
    %3948 = vmatpush.msra.mxu0 0.0
    %3949 = vmatpush.msra.mxu0 0.0
    %3950 = vmatpush.msra.mxu0 0.0
    %3951 = vmatpush.msra.mxu0 0.0
    %3952 = vmatpush.msra.mxu0 0.0
    %v3953 = vand.u32 %v369, 4294901760
    %3954 = vmatpush.msra.mxu0 %v3953
    %v3955 = vand.u32 %v368, 4294901760
    %3956 = vmatpush.msra.mxu0 %v3955
    %v3957 = vand.u32 %v367, 4294901760
    %3958 = vmatpush.msra.mxu0 %v3957
    %v3959 = vand.u32 %v366, 4294901760
    %3960 = vmatpush.msra.mxu0 %v3959
    %v3961 = vand.u32 %v3839, 4294901760
    %v3962 = vsub.f32 %v3839, %v3961
    %v3963 = vand.u32 %v3962, 4294901760
    %3964 = vmatmul.f32.gmra.mxu0 %v3963
    %v3965 = vpop.f32.mrf.mxu0
    %v3966 = vadd.f32 %v3939, %v3965
    %3967 = vdwg.mxu0
    %3968 = vmatpush.msra.mxu0 0.0
    %3969 = vmatpush.msra.mxu0 0.0
    %3970 = vmatpush.msra.mxu0 0.0
    %3971 = vmatpush.msra.mxu0 0.0
    %3972 = vmatpush.msra.mxu0 0.0
    %3973 = vmatpush.msra.mxu0 0.0
    %3974 = vmatpush.msra.mxu0 0.0
    %3975 = vmatpush.msra.mxu0 0.0
    %3976 = vmatpush.msra.mxu0 0.0
    %3977 = vmatpush.msra.mxu0 0.0
    %3978 = vmatpush.msra.mxu0 0.0
    %3979 = vmatpush.msra.mxu0 0.0
    %v3980 = vand.u32 %v369, 4294901760
    %v3981 = vsub.f32 %v369, %v3980
    %v3982 = vand.u32 %v3981, 4294901760
    %3983 = vmatpush.msra.mxu0 %v3982
    %v3984 = vand.u32 %v368, 4294901760
    %v3985 = vsub.f32 %v368, %v3984
    %v3986 = vand.u32 %v3985, 4294901760
    %3987 = vmatpush.msra.mxu0 %v3986
    %v3988 = vand.u32 %v367, 4294901760
    %v3989 = vsub.f32 %v367, %v3988
    %v3990 = vand.u32 %v3989, 4294901760
    %3991 = vmatpush.msra.mxu0 %v3990
    %v3992 = vand.u32 %v366, 4294901760
    %v3993 = vsub.f32 %v366, %v3992
    %v3994 = vand.u32 %v3993, 4294901760
    %3995 = vmatpush.msra.mxu0 %v3994
    %v3996 = vand.u32 %v3839, 4294901760
    %3997 = vmatmul.f32.gmra.mxu0 %v3996
    %v3998 = vpop.f32.mrf.mxu0
    %v3999 = vadd.f32 %v3966, %v3998
    %4000 = vdwg.mxu0
    %4001 = vmatpush.msra.mxu0 0.0
    %4002 = vmatpush.msra.mxu0 0.0
    %4003 = vmatpush.msra.mxu0 0.0
    %4004 = vmatpush.msra.mxu0 0.0
    %4005 = vmatpush.msra.mxu0 0.0
    %4006 = vmatpush.msra.mxu0 0.0
    %4007 = vmatpush.msra.mxu0 0.0
    %4008 = vmatpush.msra.mxu0 0.0
    %4009 = vmatpush.msra.mxu0 0.0
    %4010 = vmatpush.msra.mxu0 0.0
    %4011 = vmatpush.msra.mxu0 0.0
    %4012 = vmatpush.msra.mxu0 0.0
    %v4013 = vand.u32 %v369, 4294901760
    %4014 = vmatpush.msra.mxu0 %v4013
    %v4015 = vand.u32 %v368, 4294901760
    %4016 = vmatpush.msra.mxu0 %v4015
    %v4017 = vand.u32 %v367, 4294901760
    %4018 = vmatpush.msra.mxu0 %v4017
    %v4019 = vand.u32 %v366, 4294901760
    %4020 = vmatpush.msra.mxu0 %v4019
    %v4021 = vand.u32 %v3839, 4294901760
    %4022 = vmatmul.f32.gmra.mxu0 %v4021
    %v4023 = vpop.f32.mrf.mxu0
    %v4024 = vadd.f32 %v3999, %v4023
    %4025 = vdwg.mxu0
    %v4026 = vadd.f32 %v3838, %v4024
    %v4027 = vxor.u32 %v4026, 2147483648
    %v4028 = vmul.f32 %v4027, 1.442695
    %v4029 = vpow.pop %v4028
    %v4030 = vadd.f32 %v4029, 1.0
    %v4031 = vrcp.pop %v4030
    %v4032 = vmul.f32 %v4030, %v4031
    %v4033 = vsub.f32 1.0, %v4032
    %v4034 = vmul.f32 %v4031, %v4033
    %v4035 = vadd.f32 %v4031, %v4034
    %vm4036 = vweird.f32 %v4030
    %vm4037 = vweird.f32 %v4031
    %vm4038 = vmor %vm4036, %vm4037
    %v4039 = vsel %vm4038, %v4031, %v4035
    %v4040 = vand.u32 2147483647, %v4030
    %vm4041 = vcmp.eq.f32.partialorder %v4040, 8.507059e+37
    %v4042 = vand.u32 %v4030, 2147483648
    %v4043 = vor.u32 1.1754944e-38, %v4042
    %v4044 = vsel %vm4041, %v4043, %v4039
    %v4045 = vmul.f32 1.0, %v4044
    %v4046 = vtanh.pop %v4026
    %v4047 = vmul.f32 %v4045, %v3826
    %4049 = vrot.lane.b32.xlu0 %v4046, 64
    %v4050 = vpop.permute.xlu0 %4049
    %v4052 = vmul.f32 %v4045, %v4050
    %4054 = vrot.lane.b32.xlu0 %v4052, 32
    %v4055 = vpop.permute.xlu0 %4054
    %v4057 = vadd.f32 %v4047, %v4055
    %v4058 = vtanh.pop %v4057
    %4060 = vrot.lane.b32.xlu0 %v4058, 64
    %v4061 = vpop.permute.xlu0 %4060
    %v4063 = vmul.f32 %v4045, %v4061
    %4065 = vrot.lane.b32.xlu0 %v4063, 32
    %v4066 = vpop.permute.xlu0 %4065
    %4068 = vst.msk [vmem:[#allocation3 + $0xf] sm:$0x1] %vm602, %v4066
    %v4069 = vlaneseq
    %v4070 = vand.u32 %v4069, 127
    %s4071 = sld [smem:[#allocation5]]
    %s4072 = ssub.s32 %s4071, 1
    %s4073 = scalar_lea.vmem [#allocation3], %s4072
    %v4074 = vld [vmem:[%s4073] sm:$0x1]
    %s4075 = ssub.s32 16, %s4071
    %s4076 = scalar_lea.vmem [#allocation3], %s4075
    %v4077 = vld [vmem:[%s4076] sm:$0x1]
    %vm4078 = vcmp.lt.s32.totalorder %v4070, 16
    %v4079 = vsel %vm4078, %v4074, %v4077
    %4080 = vst.msk [vmem:[#allocation4] sm:$0x1] %vm602, %v4079
    %s4081 = sld [smem:[#allocation5 + $0x1]]
    %s4082 = ssub.s32 %s4081, 1
    %s4083 = scalar_lea.vmem [#allocation3], %s4082
    %v4084 = vld [vmem:[%s4083] sm:$0x1]
    %s4085 = ssub.s32 16, %s4081
    %s4086 = scalar_lea.vmem [#allocation3], %s4085
    %v4087 = vld [vmem:[%s4086] sm:$0x1]
    %v4088 = vsel %vm4078, %v4084, %v4087
    %4089 = vst.msk [vmem:[#allocation4 + $0x1] sm:$0x1] %vm602, %v4088
    %s4090 = sld [smem:[#allocation5 + $0x2]]
    %s4091 = ssub.s32 %s4090, 1
    %s4092 = scalar_lea.vmem [#allocation3], %s4091
    %v4093 = vld [vmem:[%s4092] sm:$0x1]
    %s4094 = ssub.s32 16, %s4090
    %s4095 = scalar_lea.vmem [#allocation3], %s4094
    %v4096 = vld [vmem:[%s4095] sm:$0x1]
    %v4097 = vsel %vm4078, %v4093, %v4096
    %4098 = vst.msk [vmem:[#allocation4 + $0x2] sm:$0x1] %vm602, %v4097
    %s4099 = sld [smem:[#allocation5 + $0x3]]
    %s4100 = ssub.s32 %s4099, 1
    %s4101 = scalar_lea.vmem [#allocation3], %s4100
    %v4102 = vld [vmem:[%s4101] sm:$0x1]
    %s4103 = ssub.s32 16, %s4099
    %s4104 = scalar_lea.vmem [#allocation3], %s4103
    %v4105 = vld [vmem:[%s4104] sm:$0x1]
    %v4106 = vsel %vm4078, %v4102, %v4105
    %4107 = vst.msk [vmem:[#allocation4 + $0x3] sm:$0x1] %vm602, %v4106
    %v4108 = vld [vmem:[#allocation4] sm:$0x7]
    %v4109 = vld [vmem:[#allocation4 + $0x1] sm:$0x7]
    %v4110 = vld [vmem:[%s5] sm:$0xff]
    %v4111 = vld [vmem:[%s5 + $0x8] sm:$0xff]
    %v4112 = vld [vmem:[%s5 + $0x10] sm:$0xff]
    %v4113 = vld [vmem:[%s5 + $0x18] sm:$0xff]
    %v4114 = vld [vmem:[%s6] sm:$0xff]
    %v4115 = vld [vmem:[%s6 + $0x8] sm:$0xff]
    %v4116 = vld [vmem:[%s6 + $0x10] sm:$0xff]
    %v4117 = vld [vmem:[%s6 + $0x18] sm:$0xff]
    %v4119 = vsel %vm371, %v4109, 0
    %4121 = vmatpush.msra.mxu0 0.0
    %4122 = vmatpush.msra.mxu0 0.0
    %4123 = vmatpush.msra.mxu0 0.0
    %4124 = vmatpush.msra.mxu0 0.0
    %4125 = vmatpush.msra.mxu0 0.0
    %4126 = vmatpush.msra.mxu0 0.0
    %4127 = vmatpush.msra.mxu0 0.0
    %4128 = vmatpush.msra.mxu0 0.0
    %4129 = vmatpush.msra.mxu0 0.0
    %4130 = vmatpush.msra.mxu0 0.0
    %4131 = vmatpush.msra.mxu0 0.0
    %4132 = vmatpush.msra.mxu0 0.0
    %v4133 = vand.u32 %v4117, 4294901760
    %4134 = vmatpush.msra.mxu0 %v4133
    %v4135 = vand.u32 %v4116, 4294901760
    %4136 = vmatpush.msra.mxu0 %v4135
    %v4137 = vand.u32 %v4115, 4294901760
    %4138 = vmatpush.msra.mxu0 %v4137
    %v4139 = vand.u32 %v4114, 4294901760
    %4140 = vmatpush.msra.mxu0 %v4139
    %v4141 = vand.u32 %v4119, 4294901760
    %v4142 = vsub.f32 %v4119, %v4141
    %v4143 = vand.u32 %v4142, 4294901760
    %v4144 = vsub.f32 %v4142, %v4143
    %v4145 = vand.u32 %v4144, 4294901760
    %4146 = vmatmul.f32.gmra.mxu0 %v4145
    %v4147 = vpop.f32.mrf.mxu0
    %v4148 = vadd.f32 0.0, %v4147
    %4149 = vdwg.mxu0
    %4150 = vmatpush.msra.mxu0 0.0
    %4151 = vmatpush.msra.mxu0 0.0
    %4152 = vmatpush.msra.mxu0 0.0
    %4153 = vmatpush.msra.mxu0 0.0
    %4154 = vmatpush.msra.mxu0 0.0
    %4155 = vmatpush.msra.mxu0 0.0
    %4156 = vmatpush.msra.mxu0 0.0
    %4157 = vmatpush.msra.mxu0 0.0
    %4158 = vmatpush.msra.mxu0 0.0
    %4159 = vmatpush.msra.mxu0 0.0
    %4160 = vmatpush.msra.mxu0 0.0
    %4161 = vmatpush.msra.mxu0 0.0
    %v4162 = vand.u32 %v4117, 4294901760
    %v4163 = vsub.f32 %v4117, %v4162
    %v4164 = vand.u32 %v4163, 4294901760
    %v4165 = vsub.f32 %v4163, %v4164
    %v4166 = vand.u32 %v4165, 4294901760
    %4167 = vmatpush.msra.mxu0 %v4166
    %v4168 = vand.u32 %v4116, 4294901760
    %v4169 = vsub.f32 %v4116, %v4168
    %v4170 = vand.u32 %v4169, 4294901760
    %v4171 = vsub.f32 %v4169, %v4170
    %v4172 = vand.u32 %v4171, 4294901760
    %4173 = vmatpush.msra.mxu0 %v4172
    %v4174 = vand.u32 %v4115, 4294901760
    %v4175 = vsub.f32 %v4115, %v4174
    %v4176 = vand.u32 %v4175, 4294901760
    %v4177 = vsub.f32 %v4175, %v4176
    %v4178 = vand.u32 %v4177, 4294901760
    %4179 = vmatpush.msra.mxu0 %v4178
    %v4180 = vand.u32 %v4114, 4294901760
    %v4181 = vsub.f32 %v4114, %v4180
    %v4182 = vand.u32 %v4181, 4294901760
    %v4183 = vsub.f32 %v4181, %v4182
    %v4184 = vand.u32 %v4183, 4294901760
    %4185 = vmatpush.msra.mxu0 %v4184
    %v4186 = vand.u32 %v4119, 4294901760
    %4187 = vmatmul.f32.gmra.mxu0 %v4186
    %v4188 = vpop.f32.mrf.mxu0
    %v4189 = vadd.f32 %v4148, %v4188
    %4190 = vdwg.mxu0
    %4191 = vmatpush.msra.mxu0 0.0
    %4192 = vmatpush.msra.mxu0 0.0
    %4193 = vmatpush.msra.mxu0 0.0
    %4194 = vmatpush.msra.mxu0 0.0
    %4195 = vmatpush.msra.mxu0 0.0
    %4196 = vmatpush.msra.mxu0 0.0
    %4197 = vmatpush.msra.mxu0 0.0
    %4198 = vmatpush.msra.mxu0 0.0
    %4199 = vmatpush.msra.mxu0 0.0
    %4200 = vmatpush.msra.mxu0 0.0
    %4201 = vmatpush.msra.mxu0 0.0
    %4202 = vmatpush.msra.mxu0 0.0
    %v4203 = vand.u32 %v4117, 4294901760
    %v4204 = vsub.f32 %v4117, %v4203
    %4205 = vmatpush.msra.mxu0 %v4204
    %v4206 = vand.u32 %v4116, 4294901760
    %v4207 = vsub.f32 %v4116, %v4206
    %4208 = vmatpush.msra.mxu0 %v4207
    %v4209 = vand.u32 %v4115, 4294901760
    %v4210 = vsub.f32 %v4115, %v4209
    %4211 = vmatpush.msra.mxu0 %v4210
    %v4212 = vand.u32 %v4114, 4294901760
    %v4213 = vsub.f32 %v4114, %v4212
    %4214 = vmatpush.msra.mxu0 %v4213
    %v4215 = vand.u32 %v4119, 4294901760
    %v4216 = vsub.f32 %v4119, %v4215
    %4217 = vmatmul.f32.gmra.mxu0 %v4216
    %v4218 = vpop.f32.mrf.mxu0
    %v4219 = vadd.f32 %v4189, %v4218
    %4220 = vdwg.mxu0
    %4221 = vmatpush.msra.mxu0 0.0
    %4222 = vmatpush.msra.mxu0 0.0
    %4223 = vmatpush.msra.mxu0 0.0
    %4224 = vmatpush.msra.mxu0 0.0
    %4225 = vmatpush.msra.mxu0 0.0
    %4226 = vmatpush.msra.mxu0 0.0
    %4227 = vmatpush.msra.mxu0 0.0
    %4228 = vmatpush.msra.mxu0 0.0
    %4229 = vmatpush.msra.mxu0 0.0
    %4230 = vmatpush.msra.mxu0 0.0
    %4231 = vmatpush.msra.mxu0 0.0
    %4232 = vmatpush.msra.mxu0 0.0
    %v4233 = vand.u32 %v4117, 4294901760
    %4234 = vmatpush.msra.mxu0 %v4233
    %v4235 = vand.u32 %v4116, 4294901760
    %4236 = vmatpush.msra.mxu0 %v4235
    %v4237 = vand.u32 %v4115, 4294901760
    %4238 = vmatpush.msra.mxu0 %v4237
    %v4239 = vand.u32 %v4114, 4294901760
    %4240 = vmatpush.msra.mxu0 %v4239
    %v4241 = vand.u32 %v4119, 4294901760
    %v4242 = vsub.f32 %v4119, %v4241
    %v4243 = vand.u32 %v4242, 4294901760
    %4244 = vmatmul.f32.gmra.mxu0 %v4243
    %v4245 = vpop.f32.mrf.mxu0
    %v4246 = vadd.f32 %v4219, %v4245
    %4247 = vdwg.mxu0
    %4248 = vmatpush.msra.mxu0 0.0
    %4249 = vmatpush.msra.mxu0 0.0
    %4250 = vmatpush.msra.mxu0 0.0
    %4251 = vmatpush.msra.mxu0 0.0
    %4252 = vmatpush.msra.mxu0 0.0
    %4253 = vmatpush.msra.mxu0 0.0
    %4254 = vmatpush.msra.mxu0 0.0
    %4255 = vmatpush.msra.mxu0 0.0
    %4256 = vmatpush.msra.mxu0 0.0
    %4257 = vmatpush.msra.mxu0 0.0
    %4258 = vmatpush.msra.mxu0 0.0
    %4259 = vmatpush.msra.mxu0 0.0
    %v4260 = vand.u32 %v4117, 4294901760
    %v4261 = vsub.f32 %v4117, %v4260
    %v4262 = vand.u32 %v4261, 4294901760
    %4263 = vmatpush.msra.mxu0 %v4262
    %v4264 = vand.u32 %v4116, 4294901760
    %v4265 = vsub.f32 %v4116, %v4264
    %v4266 = vand.u32 %v4265, 4294901760
    %4267 = vmatpush.msra.mxu0 %v4266
    %v4268 = vand.u32 %v4115, 4294901760
    %v4269 = vsub.f32 %v4115, %v4268
    %v4270 = vand.u32 %v4269, 4294901760
    %4271 = vmatpush.msra.mxu0 %v4270
    %v4272 = vand.u32 %v4114, 4294901760
    %v4273 = vsub.f32 %v4114, %v4272
    %v4274 = vand.u32 %v4273, 4294901760
    %4275 = vmatpush.msra.mxu0 %v4274
    %v4276 = vand.u32 %v4119, 4294901760
    %4277 = vmatmul.f32.gmra.mxu0 %v4276
    %v4278 = vpop.f32.mrf.mxu0
    %v4279 = vadd.f32 %v4246, %v4278
    %4280 = vdwg.mxu0
    %4281 = vmatpush.msra.mxu0 0.0
    %4282 = vmatpush.msra.mxu0 0.0
    %4283 = vmatpush.msra.mxu0 0.0
    %4284 = vmatpush.msra.mxu0 0.0
    %4285 = vmatpush.msra.mxu0 0.0
    %4286 = vmatpush.msra.mxu0 0.0
    %4287 = vmatpush.msra.mxu0 0.0
    %4288 = vmatpush.msra.mxu0 0.0
    %4289 = vmatpush.msra.mxu0 0.0
    %4290 = vmatpush.msra.mxu0 0.0
    %4291 = vmatpush.msra.mxu0 0.0
    %4292 = vmatpush.msra.mxu0 0.0
    %v4293 = vand.u32 %v4117, 4294901760
    %4294 = vmatpush.msra.mxu0 %v4293
    %v4295 = vand.u32 %v4116, 4294901760
    %4296 = vmatpush.msra.mxu0 %v4295
    %v4297 = vand.u32 %v4115, 4294901760
    %4298 = vmatpush.msra.mxu0 %v4297
    %v4299 = vand.u32 %v4114, 4294901760
    %4300 = vmatpush.msra.mxu0 %v4299
    %v4301 = vand.u32 %v4119, 4294901760
    %4302 = vmatmul.f32.gmra.mxu0 %v4301
    %v4303 = vpop.f32.mrf.mxu0
    %v4304 = vadd.f32 %v4279, %v4303
    %4305 = vdwg.mxu0
    %v4307 = vsel %vm371, %v4108, 0
    %4309 = vmatpush.msra.mxu0 0.0
    %4310 = vmatpush.msra.mxu0 0.0
    %4311 = vmatpush.msra.mxu0 0.0
    %4312 = vmatpush.msra.mxu0 0.0
    %4313 = vmatpush.msra.mxu0 0.0
    %4314 = vmatpush.msra.mxu0 0.0
    %4315 = vmatpush.msra.mxu0 0.0
    %4316 = vmatpush.msra.mxu0 0.0
    %4317 = vmatpush.msra.mxu0 0.0
    %4318 = vmatpush.msra.mxu0 0.0
    %4319 = vmatpush.msra.mxu0 0.0
    %4320 = vmatpush.msra.mxu0 0.0
    %v4321 = vand.u32 %v4113, 4294901760
    %4322 = vmatpush.msra.mxu0 %v4321
    %v4323 = vand.u32 %v4112, 4294901760
    %4324 = vmatpush.msra.mxu0 %v4323
    %v4325 = vand.u32 %v4111, 4294901760
    %4326 = vmatpush.msra.mxu0 %v4325
    %v4327 = vand.u32 %v4110, 4294901760
    %4328 = vmatpush.msra.mxu0 %v4327
    %v4329 = vand.u32 %v4307, 4294901760
    %v4330 = vsub.f32 %v4307, %v4329
    %v4331 = vand.u32 %v4330, 4294901760
    %v4332 = vsub.f32 %v4330, %v4331
    %v4333 = vand.u32 %v4332, 4294901760
    %4334 = vmatmul.f32.gmra.mxu0 %v4333
    %v4335 = vpop.f32.mrf.mxu0
    %v4336 = vadd.f32 %v4304, %v4335
    %4337 = vdwg.mxu0
    %4338 = vmatpush.msra.mxu0 0.0
    %4339 = vmatpush.msra.mxu0 0.0
    %4340 = vmatpush.msra.mxu0 0.0
    %4341 = vmatpush.msra.mxu0 0.0
    %4342 = vmatpush.msra.mxu0 0.0
    %4343 = vmatpush.msra.mxu0 0.0
    %4344 = vmatpush.msra.mxu0 0.0
    %4345 = vmatpush.msra.mxu0 0.0
    %4346 = vmatpush.msra.mxu0 0.0
    %4347 = vmatpush.msra.mxu0 0.0
    %4348 = vmatpush.msra.mxu0 0.0
    %4349 = vmatpush.msra.mxu0 0.0
    %v4350 = vand.u32 %v4113, 4294901760
    %v4351 = vsub.f32 %v4113, %v4350
    %v4352 = vand.u32 %v4351, 4294901760
    %v4353 = vsub.f32 %v4351, %v4352
    %v4354 = vand.u32 %v4353, 4294901760
    %4355 = vmatpush.msra.mxu0 %v4354
    %v4356 = vand.u32 %v4112, 4294901760
    %v4357 = vsub.f32 %v4112, %v4356
    %v4358 = vand.u32 %v4357, 4294901760
    %v4359 = vsub.f32 %v4357, %v4358
    %v4360 = vand.u32 %v4359, 4294901760
    %4361 = vmatpush.msra.mxu0 %v4360
    %v4362 = vand.u32 %v4111, 4294901760
    %v4363 = vsub.f32 %v4111, %v4362
    %v4364 = vand.u32 %v4363, 4294901760
    %v4365 = vsub.f32 %v4363, %v4364
    %v4366 = vand.u32 %v4365, 4294901760
    %4367 = vmatpush.msra.mxu0 %v4366
    %v4368 = vand.u32 %v4110, 4294901760
    %v4369 = vsub.f32 %v4110, %v4368
    %v4370 = vand.u32 %v4369, 4294901760
    %v4371 = vsub.f32 %v4369, %v4370
    %v4372 = vand.u32 %v4371, 4294901760
    %4373 = vmatpush.msra.mxu0 %v4372
    %v4374 = vand.u32 %v4307, 4294901760
    %4375 = vmatmul.f32.gmra.mxu0 %v4374
    %v4376 = vpop.f32.mrf.mxu0
    %v4377 = vadd.f32 %v4336, %v4376
    %4378 = vdwg.mxu0
    %4379 = vmatpush.msra.mxu0 0.0
    %4380 = vmatpush.msra.mxu0 0.0
    %4381 = vmatpush.msra.mxu0 0.0
    %4382 = vmatpush.msra.mxu0 0.0
    %4383 = vmatpush.msra.mxu0 0.0
    %4384 = vmatpush.msra.mxu0 0.0
    %4385 = vmatpush.msra.mxu0 0.0
    %4386 = vmatpush.msra.mxu0 0.0
    %4387 = vmatpush.msra.mxu0 0.0
    %4388 = vmatpush.msra.mxu0 0.0
    %4389 = vmatpush.msra.mxu0 0.0
    %4390 = vmatpush.msra.mxu0 0.0
    %v4391 = vand.u32 %v4113, 4294901760
    %v4392 = vsub.f32 %v4113, %v4391
    %4393 = vmatpush.msra.mxu0 %v4392
    %v4394 = vand.u32 %v4112, 4294901760
    %v4395 = vsub.f32 %v4112, %v4394
    %4396 = vmatpush.msra.mxu0 %v4395
    %v4397 = vand.u32 %v4111, 4294901760
    %v4398 = vsub.f32 %v4111, %v4397
    %4399 = vmatpush.msra.mxu0 %v4398
    %v4400 = vand.u32 %v4110, 4294901760
    %v4401 = vsub.f32 %v4110, %v4400
    %4402 = vmatpush.msra.mxu0 %v4401
    %v4403 = vand.u32 %v4307, 4294901760
    %v4404 = vsub.f32 %v4307, %v4403
    %4405 = vmatmul.f32.gmra.mxu0 %v4404
    %v4406 = vpop.f32.mrf.mxu0
    %v4407 = vadd.f32 %v4377, %v4406
    %4408 = vdwg.mxu0
    %4409 = vmatpush.msra.mxu0 0.0
    %4410 = vmatpush.msra.mxu0 0.0
    %4411 = vmatpush.msra.mxu0 0.0
    %4412 = vmatpush.msra.mxu0 0.0
    %4413 = vmatpush.msra.mxu0 0.0
    %4414 = vmatpush.msra.mxu0 0.0
    %4415 = vmatpush.msra.mxu0 0.0
    %4416 = vmatpush.msra.mxu0 0.0
    %4417 = vmatpush.msra.mxu0 0.0
    %4418 = vmatpush.msra.mxu0 0.0
    %4419 = vmatpush.msra.mxu0 0.0
    %4420 = vmatpush.msra.mxu0 0.0
    %v4421 = vand.u32 %v4113, 4294901760
    %4422 = vmatpush.msra.mxu0 %v4421
    %v4423 = vand.u32 %v4112, 4294901760
    %4424 = vmatpush.msra.mxu0 %v4423
    %v4425 = vand.u32 %v4111, 4294901760
    %4426 = vmatpush.msra.mxu0 %v4425
    %v4427 = vand.u32 %v4110, 4294901760
    %4428 = vmatpush.msra.mxu0 %v4427
    %v4429 = vand.u32 %v4307, 4294901760
    %v4430 = vsub.f32 %v4307, %v4429
    %v4431 = vand.u32 %v4430, 4294901760
    %4432 = vmatmul.f32.gmra.mxu0 %v4431
    %v4433 = vpop.f32.mrf.mxu0
    %v4434 = vadd.f32 %v4407, %v4433
    %4435 = vdwg.mxu0
    %4436 = vmatpush.msra.mxu0 0.0
    %4437 = vmatpush.msra.mxu0 0.0
    %4438 = vmatpush.msra.mxu0 0.0
    %4439 = vmatpush.msra.mxu0 0.0
    %4440 = vmatpush.msra.mxu0 0.0
    %4441 = vmatpush.msra.mxu0 0.0
    %4442 = vmatpush.msra.mxu0 0.0
    %4443 = vmatpush.msra.mxu0 0.0
    %4444 = vmatpush.msra.mxu0 0.0
    %4445 = vmatpush.msra.mxu0 0.0
    %4446 = vmatpush.msra.mxu0 0.0
    %4447 = vmatpush.msra.mxu0 0.0
    %v4448 = vand.u32 %v4113, 4294901760
    %v4449 = vsub.f32 %v4113, %v4448
    %v4450 = vand.u32 %v4449, 4294901760
    %4451 = vmatpush.msra.mxu0 %v4450
    %v4452 = vand.u32 %v4112, 4294901760
    %v4453 = vsub.f32 %v4112, %v4452
    %v4454 = vand.u32 %v4453, 4294901760
    %4455 = vmatpush.msra.mxu0 %v4454
    %v4456 = vand.u32 %v4111, 4294901760
    %v4457 = vsub.f32 %v4111, %v4456
    %v4458 = vand.u32 %v4457, 4294901760
    %4459 = vmatpush.msra.mxu0 %v4458
    %v4460 = vand.u32 %v4110, 4294901760
    %v4461 = vsub.f32 %v4110, %v4460
    %v4462 = vand.u32 %v4461, 4294901760
    %4463 = vmatpush.msra.mxu0 %v4462
    %v4464 = vand.u32 %v4307, 4294901760
    %4465 = vmatmul.f32.gmra.mxu0 %v4464
    %v4466 = vpop.f32.mrf.mxu0
    %v4467 = vadd.f32 %v4434, %v4466
    %4468 = vdwg.mxu0
    %4469 = vmatpush.msra.mxu0 0.0
    %4470 = vmatpush.msra.mxu0 0.0
    %4471 = vmatpush.msra.mxu0 0.0
    %4472 = vmatpush.msra.mxu0 0.0
    %4473 = vmatpush.msra.mxu0 0.0
    %4474 = vmatpush.msra.mxu0 0.0
    %4475 = vmatpush.msra.mxu0 0.0
    %4476 = vmatpush.msra.mxu0 0.0
    %4477 = vmatpush.msra.mxu0 0.0
    %4478 = vmatpush.msra.mxu0 0.0
    %4479 = vmatpush.msra.mxu0 0.0
    %4480 = vmatpush.msra.mxu0 0.0
    %v4481 = vand.u32 %v4113, 4294901760
    %4482 = vmatpush.msra.mxu0 %v4481
    %v4483 = vand.u32 %v4112, 4294901760
    %4484 = vmatpush.msra.mxu0 %v4483
    %v4485 = vand.u32 %v4111, 4294901760
    %4486 = vmatpush.msra.mxu0 %v4485
    %v4487 = vand.u32 %v4110, 4294901760
    %4488 = vmatpush.msra.mxu0 %v4487
    %v4489 = vand.u32 %v4307, 4294901760
    %4490 = vmatmul.f32.gmra.mxu0 %v4489
    %v4491 = vpop.f32.mrf.mxu0
    %v4492 = vadd.f32 %v4467, %v4491
    %4493 = vdwg.mxu0
    %v4494 = vld [vmem:[%s7] sm:$0x1]
    %v4496 = vperm.slane %v4494, 0
    %v4498 = vadd.f32 %v4492, %v4496
    %vm4499 = vcmask 26624
    %v4500 = vsel %vm4499, %v4498, -inf
    %4501 = vmax.xlane.f32.xlu0 %v4500
    %v4502 = vpop.xlane.xlu0 %4501
    %v4503 = vsub.f32 %v4498, %v4502
    %v4504 = vmul.f32 %v4503, 1.442695
    %v4505 = vpow.pop %v4504
    %v4506 = vsel %vm4499, %v4505, 0.0
    %4507 = vadd.xlane.f32.xlu0 %v4506
    %v4508 = vpop.xlane.xlu0 %4507
    %v4509 = vlog2.pop %v4508
    %v4510 = vmul.f32 %v4509, 0.6931472
    %v4511 = vsub.f32 %v4503, %v4510
    %4512 = vst.msk [vmem:[#allocation12] sm:$0x7] %vm4499, %v4511
    // Predicated region
    $region46: #{tpu_custom_call.1} parent=1 // pred_check
      _
    $region47: #{tpu_custom_call.1} parent=1 // pred_check_branch
      %4514 = sbr.rel (0) target = $region49
    $region48: #{tpu_custom_call.1} parent=1 // pred_region
      %4516 = vsyncadd [#allocation7], 0
      %s4518 = sshll.u32 [#allocation12], 4
      %s4519 = int_to_ptr.vmem [resolvable:$true] %s4518
      %s4520 = sshll.u32 %s8, 4
      %s4521 = int_to_ptr.hbm [resolvable:$true] %s4520
      %4523 = dma.vmem_to_hbm [thread:$0]  %s4519, 64, %s4521, [#allocation7]
    $region49: #{tpu_custom_call.1} parent=1 // pred_fallthru
      _
    // Predicated region
    $region50: #{tpu_custom_call.1} parent=1 // pred_check
      _
    $region51: #{tpu_custom_call.1} parent=1 // pred_check_branch
      %4525 = sbr.rel (0) target = $region53
    $region52: #{tpu_custom_call.1} parent=1 // pred_region
      %4527 = dma.done [#allocation7], 64
    $region53: #{tpu_custom_call.1} parent=1 // pred_fallthru
      _
    %4528 = vsyncpa [#allocation6], 1
    %4529 = vsyncpa [#allocation11], 1
    %4530 = vsyncpa [#allocation7], 1
    %4531 = vsyncpa [#allocation8], 1

</llo_original>
